<compile_context>
chip_gen: v5e
topology: v5e:2x2
jax: 0.10.0
libtpu: 0.0.40
codegen_flags: <defaults>
</compile_context>

<pallas_src>
import functools

import jax
import jax.numpy as jnp
from jax.experimental import pallas as pl
from jax.experimental.pallas import tpu as pltpu


def _compnet_kernel(Q, TB, x_ref, at_ref, pt_ref, w1_ref, w2_ref, b2_ref,
                    w3_ref, b3_ref, m1_ref, m3_ref, out_ref, zflat_ref, p1_ref):
    """One batch tile (TB images) per grid step.

    x_ref  : (1, TB, QQ)  flattened input images
    at_ref : (QQ, M)      acquisition matrix A, transposed
    pt_ref : (M, QQ)      pseudo-inverse pinvA, transposed
    w1_ref : (64, 82)     conv1 weights as im2col matrix; column 81 = bias b1
    w2_ref : (32, 64)     conv2 1x1 weights
    b2_ref : (32, 1)
    w3_ref : (25, 32)     conv3 weights, row t = tap ky*5+kx, col = channel
    b3_ref : (1, 1)
    m1_ref : (81, L)      conv1 halo validity masks (0/1)
    m3_ref : (25, L)      conv3 halo validity masks (0/1)
    out_ref: (1, 1, L)    flattened output images (lane-dense store)
    zflat_ref : VMEM (1, L)   lane-dense mapped image slab, L = TB*QQ
    p1_ref    : VMEM (82, L)  im2col patch matrix (+ ones row for bias fold)
    """
    QQ = Q * Q
    L = TB * QQ

    # ---- acquisition + pseudo-inverse map-to-image: batched MXU matmuls -----
    x = x_ref[0]                                                   # (TB, QQ)
    y = jnp.dot(x, at_ref[...], preferred_element_type=jnp.float32)   # (TB, M)
    z = jnp.dot(y, pt_ref[...], preferred_element_type=jnp.float32)   # (TB, QQ)

    # ---- lay z out as ONE lane-dense (1, L) row (TB aligned row stores) -----
    for b in range(TB):
        zflat_ref[:, pl.ds(b * QQ, QQ)] = z[b:b + 1, :]
    zf = zflat_ref[...]                                            # (1, L)

    # ---- conv1: 9x9, pad 4, 1 -> 64, as a single im2col matmul --------------
    # p1[k, b*QQ + p] = img_b[p + s_k] * valid_k[b*QQ + p],  s_k = (ky-4)*Q + (kx-4)
    # Rolling the concatenated slab is exact because the halo mask zeroes every
    # position whose shifted read would leave its own image (incl. wraparound).
    # TODO(synk): group the 9 kx shifts per ky with one strided pltpu.roll to
    # turn the 81 single-sublane stores into 9 dense (9, L) slab stores.
    for k in range(81):
        ky, kx = divmod(k, 9)
        s = (ky - 4) * Q + (kx - 4)
        row = zf if s == 0 else pltpu.roll(zf, (-s) % L, axis=1)   # row[i]=zf[i+s]
        p1_ref[pl.ds(k, 1), :] = row * m1_ref[pl.ds(k, 1), :]
    p1_ref[pl.ds(81, 1), :] = jnp.ones((1, L), jnp.float32)        # bias fold row

    f1 = jnp.dot(w1_ref[...], p1_ref[...],
                 preferred_element_type=jnp.float32)               # (64, L), b1 folded
    f1 = jnp.maximum(f1, 0.0)

    # ---- conv2: 1x1, 64 -> 32 (pure channel matmul), ReLU -------------------
    f2 = jnp.dot(w2_ref[...], f1,
                 preferred_element_type=jnp.float32) + b2_ref[...]  # (32, L)
    f2 = jnp.maximum(f2, 0.0)

    # ---- conv3: 5x5, pad 2, 32 -> 1: channel contraction first (one matmul),
    #      then 25 rolled + masked full-L rows, balanced tree sum -------------
    g = jnp.dot(w3_ref[...], f2, preferred_element_type=jnp.float32)   # (25, L)
    rows = []
    for t in range(25):
        ky, kx = divmod(t, 5)
        s = (ky - 2) * Q + (kx - 2)
        gt = g[t:t + 1, :]
        if s != 0:
            gt = pltpu.roll(gt, (-s) % L, axis=1)
        rows.append(gt * m3_ref[pl.ds(t, 1), :])
    while len(rows) > 1:                       # balanced reduction (no 25-deep chain)
        nxt = [rows[i] + rows[i + 1] for i in range(0, len(rows) - 1, 2)]
        if len(rows) % 2:
            nxt.append(rows[-1])
        rows = nxt
    out = rows[0] + b3_ref[...]                                    # (1, L)
    out_ref[...] = out.reshape(1, 1, L)


def compnet_forward(x, params, Q):
    """x: (B, 1, Q, Q) NCHW  ->  (B, 1, Q, Q)."""
    B = x.shape[0]
    QQ = Q * Q
    M = params["A"].shape[0]
    C1 = params["w1"].shape[0]          # 64
    C2 = params["w2"].shape[0]          # 32
    if Q < 5:
        raise ValueError("shift+mask conv trick requires Q >= 5 (|shift| < Q*Q)")

    # Batch tile: >= 2 grid steps when B >= 2 so the "parallel" axis can shard
    # across v7x's two TensorCores; TB grows (up to 32) for large B to amortize
    # per-step overhead and enlarge the MXU N dimension (v5e/v6e advice).
    TB = max(1, min(32, (B + 1) // 2))
    Gc = -(-B // TB)
    Bp = Gc * TB
    L = TB * QQ

    xf = x.reshape(B, QQ).astype(jnp.float32)
    if Bp != B:
        xf = jnp.concatenate([xf, jnp.zeros((Bp - B, QQ), jnp.float32)], axis=0)
    xr = xf.reshape(Gc, TB, QQ)

    At = params["A"].T.astype(jnp.float32)                          # (QQ, M)
    Pt = params["pinvA"].T.astype(jnp.float32)                      # (M, QQ)
    w1 = jnp.concatenate(                                           # (64, 82)
        [params["w1"].reshape(C1, 81), params["b1"].reshape(C1, 1)],
        axis=1).astype(jnp.float32)
    w2 = params["w2"].reshape(C2, C1).astype(jnp.float32)           # (32, 64)
    b2 = params["b2"].reshape(C2, 1).astype(jnp.float32)
    w3 = params["w3"].reshape(C2, 25).T.astype(jnp.float32)         # (25, 32)
    b3 = params["b3"].reshape(1, 1).astype(jnp.float32)

    # Host-precomputed conv halo masks (0/1): QQ-periodic, tiled over TB images.
    rr = jnp.tile(jnp.repeat(jnp.arange(Q), Q), TB)                 # pixel row idx
    cc = jnp.tile(jnp.tile(jnp.arange(Q), Q), TB)                   # pixel col idx

    def halo_masks(ksize, pad):
        rows = []
        for ky in range(ksize):
            for kx in range(ksize):
                dy, dx = ky - pad, kx - pad
                ok = ((rr + dy >= 0) & (rr + dy < Q) &
                      (cc + dx >= 0) & (cc + dx < Q))
                rows.append(ok.astype(jnp.float32))
        return jnp.stack(rows, axis=0)

    m1 = halo_masks(9, 4)                                           # (81, L)
    m3 = halo_masks(5, 2)                                           # (25, L)

    kernel = functools.partial(_compnet_kernel, Q, TB)

    # VMEM budget: double-buffered blocks + scratch, capped at 48 MiB so we
    # keep headroom under v7x's 64 MiB per-TC VMEM.
    block_elems = (TB * QQ + 2 * QQ * M + C1 * 82 + C2 * C1 + C2
                   + 25 * C2 + 1 + (81 + 25) * L + L)
    scratch_elems = L + 82 * L
    vmem_est = 4 * (2 * block_elems + scratch_elems)
    vmem_limit = int(min(48 << 20, max(16 << 20, 2 * vmem_est)))

    out = pl.pallas_call(
        kernel,
        out_shape=jax.ShapeDtypeStruct((Gc, 1, L), jnp.float32),
        grid_spec=pltpu.PrefetchScalarGridSpec(
            num_scalar_prefetch=0,
            grid=(Gc,),
            in_specs=[
                pl.BlockSpec((1, TB, QQ), lambda g: (g, 0, 0)),   # x batch tile
                pl.BlockSpec((QQ, M), lambda g: (0, 0)),          # A^T
                pl.BlockSpec((M, QQ), lambda g: (0, 0)),          # pinvA^T
                pl.BlockSpec((C1, 82), lambda g: (0, 0)),         # conv1 W | b1
                pl.BlockSpec((C2, C1), lambda g: (0, 0)),         # conv2 W
                pl.BlockSpec((C2, 1), lambda g: (0, 0)),          # conv2 b
                pl.BlockSpec((25, C2), lambda g: (0, 0)),         # conv3 W^T
                pl.BlockSpec((1, 1), lambda g: (0, 0)),           # conv3 b
                pl.BlockSpec((81, L), lambda g: (0, 0)),          # conv1 halo masks
                pl.BlockSpec((25, L), lambda g: (0, 0)),          # conv3 halo masks
            ],
            out_specs=pl.BlockSpec((1, 1, L), lambda g: (g, 0, 0)),
            scratch_shapes=[
                pltpu.VMEM((1, L), jnp.float32),      # z lane-dense slab
                pltpu.VMEM((82, L), jnp.float32),     # conv1 im2col patches
            ],
        ),
        compiler_params=pltpu.CompilerParams(
            dimension_semantics=("parallel",),
            vmem_limit_bytes=vmem_limit),
    )(xr, At, Pt, w1, w2, b2, w3, b3, m1, m3)

    return out.reshape(Bp, QQ)[:B].reshape(B, 1, Q, Q)


def reference_forward(x, params, Q):
    """Pure-JAX reference matching the PyTorch module (variant=2)."""
    B = x.shape[0]
    QQ = Q * Q
    hp = jax.lax.Precision.HIGHEST
    xf = x.reshape(B, QQ)
    y = jnp.dot(xf, params["A"].T, precision=hp)             # (B, M)
    z = jnp.dot(y, params["pinvA"].T, precision=hp)          # (B, QQ)
    img = z.reshape(B, 1, Q, Q)

    def conv(inp, w, b, pad):
        o = jax.lax.conv_general_dilated(
            inp, w, window_strides=(1, 1), padding=((pad, pad), (pad, pad)),
            dimension_numbers=("NCHW", "OIHW", "NCHW"), precision=hp)
        return o + b.reshape(1, -1, 1, 1)

    f1 = jax.nn.relu(conv(img, params["w1"], params["b1"], 4))
    f2 = jax.nn.relu(conv(f1, params["w2"], params["b2"], 0))
    return conv(f2, params["w3"], params["b3"], 2)


if __name__ == "__main__":
    # Small shapes consistent with the module: Q x Q image, M = D * nbAngles.
    Q, D, nbAngles, B = 16, 2, 4, 2
    QQ, M = Q * Q, D * nbAngles

    key = jax.random.PRNGKey(0)
    ks = jax.random.split(key, 9)
    params = {
        "A":     jax.random.normal(ks[0], (M, QQ), jnp.float32) / (QQ ** 0.5),
        "pinvA": jax.random.normal(ks[1], (QQ, M), jnp.float32) / (M ** 0.5),
        "w1":    jax.random.normal(ks[2], (64, 1, 9, 9), jnp.float32) / 9.0,
        "b1":    jax.random.normal(ks[3], (64,), jnp.float32) * 0.01,
        "w2":    jax.random.normal(ks[4], (32, 64, 1, 1), jnp.float32) / (64 ** 0.5),
        "b2":    jax.random.normal(ks[5], (32,), jnp.float32) * 0.01,
        "w3":    jax.random.normal(ks[6], (1, 32, 5, 5), jnp.float32) / ((32 * 25) ** 0.5),
        "b3":    jax.random.normal(ks[7], (1,), jnp.float32) * 0.01,
    }
    x = jax.random.normal(ks[8], (B, 1, Q, Q), jnp.float32)

    out = jax.block_until_ready(compnet_forward(x, params, Q))
    ref = jax.block_until_ready(reference_forward(x, params, Q))

    assert out.shape == (B, 1, Q, Q), out.shape
    err = float(jnp.max(jnp.abs(out - ref)))
    # Kernel matmuls run at Mosaic's default MXU precision while the reference
    # uses Precision.HIGHEST, hence the slightly relaxed tolerance.
    assert jnp.allclose(out, ref, atol=2e-2, rtol=2e-2), err
    print("KERNEL_OK")
</pallas_src>

<mosaic_0001>
module attributes {stable_mosaic.version = 11 : i64} {
  func.func @_compnet_kernel(%arg0: i32, %arg1: memref<1x1x256xf32, #tpu.memory_space<vmem>>, %arg2: memref<256x8xf32, #tpu.memory_space<vmem>>, %arg3: memref<8x256xf32, #tpu.memory_space<vmem>>, %arg4: memref<64x82xf32, #tpu.memory_space<vmem>>, %arg5: memref<32x64xf32, #tpu.memory_space<vmem>>, %arg6: memref<32x1xf32, #tpu.memory_space<vmem>>, %arg7: memref<25x32xf32, #tpu.memory_space<vmem>>, %arg8: memref<1x1xf32, #tpu.memory_space<vmem>>, %arg9: memref<81x256xf32, #tpu.memory_space<vmem>>, %arg10: memref<25x256xf32, #tpu.memory_space<vmem>>, %arg11: memref<1x1x256xf32, #tpu.memory_space<vmem>>, %arg12: memref<1x256xf32, #tpu.memory_space<vmem>>, %arg13: memref<82x256xf32, #tpu.memory_space<vmem>>) attributes {dimension_semantics = [#tpu.dimension_semantics<parallel>], iteration_bounds = array<i64: 2>, scalar_prefetch = 0 : i64, scratch_operands = 2 : i64, tpu.core_type = #tpu.core_type<tc>, window_params = [{transform_indices = @transform_0, window_bounds = array<i64: 1, 1, 256>}, {pipeline_mode = #tpu.pipeline_mode<synchronous>, transform_indices = @transform_1, window_bounds = array<i64: 256, 8>}, {pipeline_mode = #tpu.pipeline_mode<synchronous>, transform_indices = @transform_2, window_bounds = array<i64: 8, 256>}, {pipeline_mode = #tpu.pipeline_mode<synchronous>, transform_indices = @transform_3, window_bounds = array<i64: 64, 82>}, {pipeline_mode = #tpu.pipeline_mode<synchronous>, transform_indices = @transform_4, window_bounds = array<i64: 32, 64>}, {pipeline_mode = #tpu.pipeline_mode<synchronous>, transform_indices = @transform_5, window_bounds = array<i64: 32, 1>}, {pipeline_mode = #tpu.pipeline_mode<synchronous>, transform_indices = @transform_6, window_bounds = array<i64: 25, 32>}, {pipeline_mode = #tpu.pipeline_mode<synchronous>, transform_indices = @transform_7, window_bounds = array<i64: 1, 1>}, {pipeline_mode = #tpu.pipeline_mode<synchronous>, transform_indices = @transform_8, window_bounds = array<i64: 81, 256>}, {pipeline_mode = #tpu.pipeline_mode<synchronous>, transform_indices = @transform_9, window_bounds = array<i64: 25, 256>}, {transform_indices = @transform_10, window_bounds = array<i64: 1, 1, 256>}]} {
    %c0 = arith.constant 0 : index
    %c0_0 = arith.constant 0 : index
    %c0_1 = arith.constant 0 : index
    %0 = vector.load %arg1[%c0, %c0_0, %c0_1] : memref<1x1x256xf32, #tpu.memory_space<vmem>>, vector<1x1x256xf32>
    %1 = vector.shape_cast %0 : vector<1x1x256xf32> to vector<1x256xf32>
    %c0_2 = arith.constant 0 : index
    %c0_3 = arith.constant 0 : index
    %2 = vector.load %arg2[%c0_2, %c0_3] : memref<256x8xf32, #tpu.memory_space<vmem>>, vector<256x8xf32>
    %cst = arith.constant dense<0.000000e+00> : vector<1x8xf32>
    %3 = tpu.matmul %1, %2, %cst {dimension_numbers = #tpu.dot_dimension_numbers<[1], [0], [0], [1], [0, 0, 1, 1], [], []>} : vector<1x256xf32>, vector<256x8xf32>, vector<1x8xf32> -> vector<1x8xf32>
    %c0_4 = arith.constant 0 : index
    %c0_5 = arith.constant 0 : index
    %4 = vector.load %arg3[%c0_4, %c0_5] : memref<8x256xf32, #tpu.memory_space<vmem>>, vector<8x256xf32>
    %cst_6 = arith.constant dense<0.000000e+00> : vector<1x256xf32>
    %5 = tpu.matmul %3, %4, %cst_6 {dimension_numbers = #tpu.dot_dimension_numbers<[1], [0], [0], [1], [0, 0, 1, 1], [], []>} : vector<1x8xf32>, vector<8x256xf32>, vector<1x256xf32> -> vector<1x256xf32>
    %c0_7 = arith.constant 0 : index
    %c0_8 = arith.constant 0 : index
    %6 = vector.load %arg12[%c0_7, %c0_8] : memref<1x256xf32, #tpu.memory_space<vmem>>, vector<1x256xf32>
    tpu.vector_store %arg12[%c0_7, %c0_8], %5 {strides = array<i32>} : memref<1x256xf32, #tpu.memory_space<vmem>>, vector<1x256xf32>,
    %c0_9 = arith.constant 0 : index
    %c0_10 = arith.constant 0 : index
    %7 = vector.load %arg12[%c0_9, %c0_10] : memref<1x256xf32, #tpu.memory_space<vmem>>, vector<1x256xf32>
    %c68_i32 = arith.constant 68 : i32
    %8 = tpu.dynamic_rotate %7 by %c68_i32 dim 1 : vector<1x256xf32>, i32 -> vector<1x256xf32>
    %c0_11 = arith.constant 0 : index
    %c0_12 = arith.constant 0 : index
    %9 = vector.load %arg9[%c0_11, %c0_12] : memref<81x256xf32, #tpu.memory_space<vmem>>, vector<1x256xf32>
    %10 = arith.mulf %8, %9 : vector<1x256xf32>
    %c0_13 = arith.constant 0 : index
    %c0_14 = arith.constant 0 : index
    %11 = vector.load %arg13[%c0_13, %c0_14] : memref<82x256xf32, #tpu.memory_space<vmem>>, vector<1x256xf32>
    tpu.vector_store %arg13[%c0_13, %c0_14], %10 {strides = array<i32>} : memref<82x256xf32, #tpu.memory_space<vmem>>, vector<1x256xf32>,
    %c67_i32 = arith.constant 67 : i32
    %12 = tpu.dynamic_rotate %7 by %c67_i32 dim 1 : vector<1x256xf32>, i32 -> vector<1x256xf32>
    %c1 = arith.constant 1 : index
    %c0_15 = arith.constant 0 : index
    %13 = vector.load %arg9[%c1, %c0_15] : memref<81x256xf32, #tpu.memory_space<vmem>>, vector<1x256xf32>
    %14 = arith.mulf %12, %13 : vector<1x256xf32>
    %c1_16 = arith.constant 1 : index
    %c0_17 = arith.constant 0 : index
    %15 = vector.load %arg13[%c1_16, %c0_17] : memref<82x256xf32, #tpu.memory_space<vmem>>, vector<1x256xf32>
    tpu.vector_store %arg13[%c1_16, %c0_17], %14 {strides = array<i32>} : memref<82x256xf32, #tpu.memory_space<vmem>>, vector<1x256xf32>,
    %c66_i32 = arith.constant 66 : i32
    %16 = tpu.dynamic_rotate %7 by %c66_i32 dim 1 : vector<1x256xf32>, i32 -> vector<1x256xf32>
    %c2 = arith.constant 2 : index
    %c0_18 = arith.constant 0 : index
    %17 = vector.load %arg9[%c2, %c0_18] : memref<81x256xf32, #tpu.memory_space<vmem>>, vector<1x256xf32>
    %18 = arith.mulf %16, %17 : vector<1x256xf32>
    %c2_19 = arith.constant 2 : index
    %c0_20 = arith.constant 0 : index
    %19 = vector.load %arg13[%c2_19, %c0_20] : memref<82x256xf32, #tpu.memory_space<vmem>>, vector<1x256xf32>
    tpu.vector_store %arg13[%c2_19, %c0_20], %18 {strides = array<i32>} : memref<82x256xf32, #tpu.memory_space<vmem>>, vector<1x256xf32>,
    %c65_i32 = arith.constant 65 : i32
    %20 = tpu.dynamic_rotate %7 by %c65_i32 dim 1 : vector<1x256xf32>, i32 -> vector<1x256xf32>
    %c3 = arith.constant 3 : index
    %c0_21 = arith.constant 0 : index
    %21 = vector.load %arg9[%c3, %c0_21] : memref<81x256xf32, #tpu.memory_space<vmem>>, vector<1x256xf32>
    %22 = arith.mulf %20, %21 : vector<1x256xf32>
    %c3_22 = arith.constant 3 : index
    %c0_23 = arith.constant 0 : index
    %23 = vector.load %arg13[%c3_22, %c0_23] : memref<82x256xf32, #tpu.memory_space<vmem>>, vector<1x256xf32>
    tpu.vector_store %arg13[%c3_22, %c0_23], %22 {strides = array<i32>} : memref<82x256xf32, #tpu.memory_space<vmem>>, vector<1x256xf32>,
    %c64_i32 = arith.constant 64 : i32
    %24 = tpu.dynamic_rotate %7 by %c64_i32 dim 1 : vector<1x256xf32>, i32 -> vector<1x256xf32>
    %c4 = arith.constant 4 : index
    %c0_24 = arith.constant 0 : index
    %25 = vector.load %arg9[%c4, %c0_24] : memref<81x256xf32, #tpu.memory_space<vmem>>, vector<1x256xf32>
    %26 = arith.mulf %24, %25 : vector<1x256xf32>
    %c4_25 = arith.constant 4 : index
    %c0_26 = arith.constant 0 : index
    %27 = vector.load %arg13[%c4_25, %c0_26] : memref<82x256xf32, #tpu.memory_space<vmem>>, vector<1x256xf32>
    tpu.vector_store %arg13[%c4_25, %c0_26], %26 {strides = array<i32>} : memref<82x256xf32, #tpu.memory_space<vmem>>, vector<1x256xf32>,
    %c63_i32 = arith.constant 63 : i32
    %28 = tpu.dynamic_rotate %7 by %c63_i32 dim 1 : vector<1x256xf32>, i32 -> vector<1x256xf32>
    %c5 = arith.constant 5 : index
    %c0_27 = arith.constant 0 : index
    %29 = vector.load %arg9[%c5, %c0_27] : memref<81x256xf32, #tpu.memory_space<vmem>>, vector<1x256xf32>
    %30 = arith.mulf %28, %29 : vector<1x256xf32>
    %c5_28 = arith.constant 5 : index
    %c0_29 = arith.constant 0 : index
    %31 = vector.load %arg13[%c5_28, %c0_29] : memref<82x256xf32, #tpu.memory_space<vmem>>, vector<1x256xf32>
    tpu.vector_store %arg13[%c5_28, %c0_29], %30 {strides = array<i32>} : memref<82x256xf32, #tpu.memory_space<vmem>>, vector<1x256xf32>,
    %c62_i32 = arith.constant 62 : i32
    %32 = tpu.dynamic_rotate %7 by %c62_i32 dim 1 : vector<1x256xf32>, i32 -> vector<1x256xf32>
    %c6 = arith.constant 6 : index
    %c0_30 = arith.constant 0 : index
    %33 = vector.load %arg9[%c6, %c0_30] : memref<81x256xf32, #tpu.memory_space<vmem>>, vector<1x256xf32>
    %34 = arith.mulf %32, %33 : vector<1x256xf32>
    %c6_31 = arith.constant 6 : index
    %c0_32 = arith.constant 0 : index
    %35 = vector.load %arg13[%c6_31, %c0_32] : memref<82x256xf32, #tpu.memory_space<vmem>>, vector<1x256xf32>
    tpu.vector_store %arg13[%c6_31, %c0_32], %34 {strides = array<i32>} : memref<82x256xf32, #tpu.memory_space<vmem>>, vector<1x256xf32>,
    %c61_i32 = arith.constant 61 : i32
    %36 = tpu.dynamic_rotate %7 by %c61_i32 dim 1 : vector<1x256xf32>, i32 -> vector<1x256xf32>
    %c7 = arith.constant 7 : index
    %c0_33 = arith.constant 0 : index
    %37 = vector.load %arg9[%c7, %c0_33] : memref<81x256xf32, #tpu.memory_space<vmem>>, vector<1x256xf32>
    %38 = arith.mulf %36, %37 : vector<1x256xf32>
    %c7_34 = arith.constant 7 : index
    %c0_35 = arith.constant 0 : index
    %39 = vector.load %arg13[%c7_34, %c0_35] : memref<82x256xf32, #tpu.memory_space<vmem>>, vector<1x256xf32>
    tpu.vector_store %arg13[%c7_34, %c0_35], %38 {strides = array<i32>} : memref<82x256xf32, #tpu.memory_space<vmem>>, vector<1x256xf32>,
    %c60_i32 = arith.constant 60 : i32
    %40 = tpu.dynamic_rotate %7 by %c60_i32 dim 1 : vector<1x256xf32>, i32 -> vector<1x256xf32>
    %c8 = arith.constant 8 : index
    %c0_36 = arith.constant 0 : index
    %41 = vector.load %arg9[%c8, %c0_36] : memref<81x256xf32, #tpu.memory_space<vmem>>, vector<1x256xf32>
    %42 = arith.mulf %40, %41 : vector<1x256xf32>
    %c8_37 = arith.constant 8 : index
    %c0_38 = arith.constant 0 : index
    %43 = vector.load %arg13[%c8_37, %c0_38] : memref<82x256xf32, #tpu.memory_space<vmem>>, vector<1x256xf32>
    tpu.vector_store %arg13[%c8_37, %c0_38], %42 {strides = array<i32>} : memref<82x256xf32, #tpu.memory_space<vmem>>, vector<1x256xf32>,
    %c52_i32 = arith.constant 52 : i32
    %44 = tpu.dynamic_rotate %7 by %c52_i32 dim 1 : vector<1x256xf32>, i32 -> vector<1x256xf32>
    %c9 = arith.constant 9 : index
    %c0_39 = arith.constant 0 : index
    %45 = vector.load %arg9[%c9, %c0_39] : memref<81x256xf32, #tpu.memory_space<vmem>>, vector<1x256xf32>
    %46 = arith.mulf %44, %45 : vector<1x256xf32>
    %c9_40 = arith.constant 9 : index
    %c0_41 = arith.constant 0 : index
    %47 = vector.load %arg13[%c9_40, %c0_41] : memref<82x256xf32, #tpu.memory_space<vmem>>, vector<1x256xf32>
    tpu.vector_store %arg13[%c9_40, %c0_41], %46 {strides = array<i32>} : memref<82x256xf32, #tpu.memory_space<vmem>>, vector<1x256xf32>,
    %c51_i32 = arith.constant 51 : i32
    %48 = tpu.dynamic_rotate %7 by %c51_i32 dim 1 : vector<1x256xf32>, i32 -> vector<1x256xf32>
    %c10 = arith.constant 10 : index
    %c0_42 = arith.constant 0 : index
    %49 = vector.load %arg9[%c10, %c0_42] : memref<81x256xf32, #tpu.memory_space<vmem>>, vector<1x256xf32>
    %50 = arith.mulf %48, %49 : vector<1x256xf32>
    %c10_43 = arith.constant 10 : index
    %c0_44 = arith.constant 0 : index
    %51 = vector.load %arg13[%c10_43, %c0_44] : memref<82x256xf32, #tpu.memory_space<vmem>>, vector<1x256xf32>
    tpu.vector_store %arg13[%c10_43, %c0_44], %50 {strides = array<i32>} : memref<82x256xf32, #tpu.memory_space<vmem>>, vector<1x256xf32>,
    %c50_i32 = arith.constant 50 : i32
    %52 = tpu.dynamic_rotate %7 by %c50_i32 dim 1 : vector<1x256xf32>, i32 -> vector<1x256xf32>
    %c11 = arith.constant 11 : index
    %c0_45 = arith.constant 0 : index
    %53 = vector.load %arg9[%c11, %c0_45] : memref<81x256xf32, #tpu.memory_space<vmem>>, vector<1x256xf32>
    %54 = arith.mulf %52, %53 : vector<1x256xf32>
    %c11_46 = arith.constant 11 : index
    %c0_47 = arith.constant 0 : index
    %55 = vector.load %arg13[%c11_46, %c0_47] : memref<82x256xf32, #tpu.memory_space<vmem>>, vector<1x256xf32>
    tpu.vector_store %arg13[%c11_46, %c0_47], %54 {strides = array<i32>} : memref<82x256xf32, #tpu.memory_space<vmem>>, vector<1x256xf32>,
    %c49_i32 = arith.constant 49 : i32
    %56 = tpu.dynamic_rotate %7 by %c49_i32 dim 1 : vector<1x256xf32>, i32 -> vector<1x256xf32>
    %c12 = arith.constant 12 : index
    %c0_48 = arith.constant 0 : index
    %57 = vector.load %arg9[%c12, %c0_48] : memref<81x256xf32, #tpu.memory_space<vmem>>, vector<1x256xf32>
    %58 = arith.mulf %56, %57 : vector<1x256xf32>
    %c12_49 = arith.constant 12 : index
    %c0_50 = arith.constant 0 : index
    %59 = vector.load %arg13[%c12_49, %c0_50] : memref<82x256xf32, #tpu.memory_space<vmem>>, vector<1x256xf32>
    tpu.vector_store %arg13[%c12_49, %c0_50], %58 {strides = array<i32>} : memref<82x256xf32, #tpu.memory_space<vmem>>, vector<1x256xf32>,
    %c48_i32 = arith.constant 48 : i32
    %60 = tpu.dynamic_rotate %7 by %c48_i32 dim 1 : vector<1x256xf32>, i32 -> vector<1x256xf32>
    %c13 = arith.constant 13 : index
    %c0_51 = arith.constant 0 : index
    %61 = vector.load %arg9[%c13, %c0_51] : memref<81x256xf32, #tpu.memory_space<vmem>>, vector<1x256xf32>
    %62 = arith.mulf %60, %61 : vector<1x256xf32>
    %c13_52 = arith.constant 13 : index
    %c0_53 = arith.constant 0 : index
    %63 = vector.load %arg13[%c13_52, %c0_53] : memref<82x256xf32, #tpu.memory_space<vmem>>, vector<1x256xf32>
    tpu.vector_store %arg13[%c13_52, %c0_53], %62 {strides = array<i32>} : memref<82x256xf32, #tpu.memory_space<vmem>>, vector<1x256xf32>,
    %c47_i32 = arith.constant 47 : i32
    %64 = tpu.dynamic_rotate %7 by %c47_i32 dim 1 : vector<1x256xf32>, i32 -> vector<1x256xf32>
    %c14 = arith.constant 14 : index
    %c0_54 = arith.constant 0 : index
    %65 = vector.load %arg9[%c14, %c0_54] : memref<81x256xf32, #tpu.memory_space<vmem>>, vector<1x256xf32>
    %66 = arith.mulf %64, %65 : vector<1x256xf32>
    %c14_55 = arith.constant 14 : index
    %c0_56 = arith.constant 0 : index
    %67 = vector.load %arg13[%c14_55, %c0_56] : memref<82x256xf32, #tpu.memory_space<vmem>>, vector<1x256xf32>
    tpu.vector_store %arg13[%c14_55, %c0_56], %66 {strides = array<i32>} : memref<82x256xf32, #tpu.memory_space<vmem>>, vector<1x256xf32>,
    %c46_i32 = arith.constant 46 : i32
    %68 = tpu.dynamic_rotate %7 by %c46_i32 dim 1 : vector<1x256xf32>, i32 -> vector<1x256xf32>
    %c15 = arith.constant 15 : index
    %c0_57 = arith.constant 0 : index
    %69 = vector.load %arg9[%c15, %c0_57] : memref<81x256xf32, #tpu.memory_space<vmem>>, vector<1x256xf32>
    %70 = arith.mulf %68, %69 : vector<1x256xf32>
    %c15_58 = arith.constant 15 : index
    %c0_59 = arith.constant 0 : index
    %71 = vector.load %arg13[%c15_58, %c0_59] : memref<82x256xf32, #tpu.memory_space<vmem>>, vector<1x256xf32>
    tpu.vector_store %arg13[%c15_58, %c0_59], %70 {strides = array<i32>} : memref<82x256xf32, #tpu.memory_space<vmem>>, vector<1x256xf32>,
    %c45_i32 = arith.constant 45 : i32
    %72 = tpu.dynamic_rotate %7 by %c45_i32 dim 1 : vector<1x256xf32>, i32 -> vector<1x256xf32>
    %c16 = arith.constant 16 : index
    %c0_60 = arith.constant 0 : index
    %73 = vector.load %arg9[%c16, %c0_60] : memref<81x256xf32, #tpu.memory_space<vmem>>, vector<1x256xf32>
    %74 = arith.mulf %72, %73 : vector<1x256xf32>
    %c16_61 = arith.constant 16 : index
    %c0_62 = arith.constant 0 : index
    %75 = vector.load %arg13[%c16_61, %c0_62] : memref<82x256xf32, #tpu.memory_space<vmem>>, vector<1x256xf32>
    tpu.vector_store %arg13[%c16_61, %c0_62], %74 {strides = array<i32>} : memref<82x256xf32, #tpu.memory_space<vmem>>, vector<1x256xf32>,
    %c44_i32 = arith.constant 44 : i32
    %76 = tpu.dynamic_rotate %7 by %c44_i32 dim 1 : vector<1x256xf32>, i32 -> vector<1x256xf32>
    %c17 = arith.constant 17 : index
    %c0_63 = arith.constant 0 : index
    %77 = vector.load %arg9[%c17, %c0_63] : memref<81x256xf32, #tpu.memory_space<vmem>>, vector<1x256xf32>
    %78 = arith.mulf %76, %77 : vector<1x256xf32>
    %c17_64 = arith.constant 17 : index
    %c0_65 = arith.constant 0 : index
    %79 = vector.load %arg13[%c17_64, %c0_65] : memref<82x256xf32, #tpu.memory_space<vmem>>, vector<1x256xf32>
    tpu.vector_store %arg13[%c17_64, %c0_65], %78 {strides = array<i32>} : memref<82x256xf32, #tpu.memory_space<vmem>>, vector<1x256xf32>,
    %c36_i32 = arith.constant 36 : i32
    %80 = tpu.dynamic_rotate %7 by %c36_i32 dim 1 : vector<1x256xf32>, i32 -> vector<1x256xf32>
    %c18 = arith.constant 18 : index
    %c0_66 = arith.constant 0 : index
    %81 = vector.load %arg9[%c18, %c0_66] : memref<81x256xf32, #tpu.memory_space<vmem>>, vector<1x256xf32>
    %82 = arith.mulf %80, %81 : vector<1x256xf32>
    %c18_67 = arith.constant 18 : index
    %c0_68 = arith.constant 0 : index
    %83 = vector.load %arg13[%c18_67, %c0_68] : memref<82x256xf32, #tpu.memory_space<vmem>>, vector<1x256xf32>
    tpu.vector_store %arg13[%c18_67, %c0_68], %82 {strides = array<i32>} : memref<82x256xf32, #tpu.memory_space<vmem>>, vector<1x256xf32>,
    %c35_i32 = arith.constant 35 : i32
    %84 = tpu.dynamic_rotate %7 by %c35_i32 dim 1 : vector<1x256xf32>, i32 -> vector<1x256xf32>
    %c19 = arith.constant 19 : index
    %c0_69 = arith.constant 0 : index
    %85 = vector.load %arg9[%c19, %c0_69] : memref<81x256xf32, #tpu.memory_space<vmem>>, vector<1x256xf32>
    %86 = arith.mulf %84, %85 : vector<1x256xf32>
    %c19_70 = arith.constant 19 : index
    %c0_71 = arith.constant 0 : index
    %87 = vector.load %arg13[%c19_70, %c0_71] : memref<82x256xf32, #tpu.memory_space<vmem>>, vector<1x256xf32>
    tpu.vector_store %arg13[%c19_70, %c0_71], %86 {strides = array<i32>} : memref<82x256xf32, #tpu.memory_space<vmem>>, vector<1x256xf32>,
    %c34_i32 = arith.constant 34 : i32
    %88 = tpu.dynamic_rotate %7 by %c34_i32 dim 1 : vector<1x256xf32>, i32 -> vector<1x256xf32>
    %c20 = arith.constant 20 : index
    %c0_72 = arith.constant 0 : index
    %89 = vector.load %arg9[%c20, %c0_72] : memref<81x256xf32, #tpu.memory_space<vmem>>, vector<1x256xf32>
    %90 = arith.mulf %88, %89 : vector<1x256xf32>
    %c20_73 = arith.constant 20 : index
    %c0_74 = arith.constant 0 : index
    %91 = vector.load %arg13[%c20_73, %c0_74] : memref<82x256xf32, #tpu.memory_space<vmem>>, vector<1x256xf32>
    tpu.vector_store %arg13[%c20_73, %c0_74], %90 {strides = array<i32>} : memref<82x256xf32, #tpu.memory_space<vmem>>, vector<1x256xf32>,
    %c33_i32 = arith.constant 33 : i32
    %92 = tpu.dynamic_rotate %7 by %c33_i32 dim 1 : vector<1x256xf32>, i32 -> vector<1x256xf32>
    %c21 = arith.constant 21 : index
    %c0_75 = arith.constant 0 : index
    %93 = vector.load %arg9[%c21, %c0_75] : memref<81x256xf32, #tpu.memory_space<vmem>>, vector<1x256xf32>
    %94 = arith.mulf %92, %93 : vector<1x256xf32>
    %c21_76 = arith.constant 21 : index
    %c0_77 = arith.constant 0 : index
    %95 = vector.load %arg13[%c21_76, %c0_77] : memref<82x256xf32, #tpu.memory_space<vmem>>, vector<1x256xf32>
    tpu.vector_store %arg13[%c21_76, %c0_77], %94 {strides = array<i32>} : memref<82x256xf32, #tpu.memory_space<vmem>>, vector<1x256xf32>,
    %c32_i32 = arith.constant 32 : i32
    %96 = tpu.dynamic_rotate %7 by %c32_i32 dim 1 : vector<1x256xf32>, i32 -> vector<1x256xf32>
    %c22 = arith.constant 22 : index
    %c0_78 = arith.constant 0 : index
    %97 = vector.load %arg9[%c22, %c0_78] : memref<81x256xf32, #tpu.memory_space<vmem>>, vector<1x256xf32>
    %98 = arith.mulf %96, %97 : vector<1x256xf32>
    %c22_79 = arith.constant 22 : index
    %c0_80 = arith.constant 0 : index
    %99 = vector.load %arg13[%c22_79, %c0_80] : memref<82x256xf32, #tpu.memory_space<vmem>>, vector<1x256xf32>
    tpu.vector_store %arg13[%c22_79, %c0_80], %98 {strides = array<i32>} : memref<82x256xf32, #tpu.memory_space<vmem>>, vector<1x256xf32>,
    %c31_i32 = arith.constant 31 : i32
    %100 = tpu.dynamic_rotate %7 by %c31_i32 dim 1 : vector<1x256xf32>, i32 -> vector<1x256xf32>
    %c23 = arith.constant 23 : index
    %c0_81 = arith.constant 0 : index
    %101 = vector.load %arg9[%c23, %c0_81] : memref<81x256xf32, #tpu.memory_space<vmem>>, vector<1x256xf32>
    %102 = arith.mulf %100, %101 : vector<1x256xf32>
    %c23_82 = arith.constant 23 : index
    %c0_83 = arith.constant 0 : index
    %103 = vector.load %arg13[%c23_82, %c0_83] : memref<82x256xf32, #tpu.memory_space<vmem>>, vector<1x256xf32>
    tpu.vector_store %arg13[%c23_82, %c0_83], %102 {strides = array<i32>} : memref<82x256xf32, #tpu.memory_space<vmem>>, vector<1x256xf32>,
    %c30_i32 = arith.constant 30 : i32
    %104 = tpu.dynamic_rotate %7 by %c30_i32 dim 1 : vector<1x256xf32>, i32 -> vector<1x256xf32>
    %c24 = arith.constant 24 : index
    %c0_84 = arith.constant 0 : index
    %105 = vector.load %arg9[%c24, %c0_84] : memref<81x256xf32, #tpu.memory_space<vmem>>, vector<1x256xf32>
    %106 = arith.mulf %104, %105 : vector<1x256xf32>
    %c24_85 = arith.constant 24 : index
    %c0_86 = arith.constant 0 : index
    %107 = vector.load %arg13[%c24_85, %c0_86] : memref<82x256xf32, #tpu.memory_space<vmem>>, vector<1x256xf32>
    tpu.vector_store %arg13[%c24_85, %c0_86], %106 {strides = array<i32>} : memref<82x256xf32, #tpu.memory_space<vmem>>, vector<1x256xf32>,
    %c29_i32 = arith.constant 29 : i32
    %108 = tpu.dynamic_rotate %7 by %c29_i32 dim 1 : vector<1x256xf32>, i32 -> vector<1x256xf32>
    %c25 = arith.constant 25 : index
    %c0_87 = arith.constant 0 : index
    %109 = vector.load %arg9[%c25, %c0_87] : memref<81x256xf32, #tpu.memory_space<vmem>>, vector<1x256xf32>
    %110 = arith.mulf %108, %109 : vector<1x256xf32>
    %c25_88 = arith.constant 25 : index
    %c0_89 = arith.constant 0 : index
    %111 = vector.load %arg13[%c25_88, %c0_89] : memref<82x256xf32, #tpu.memory_space<vmem>>, vector<1x256xf32>
    tpu.vector_store %arg13[%c25_88, %c0_89], %110 {strides = array<i32>} : memref<82x256xf32, #tpu.memory_space<vmem>>, vector<1x256xf32>,
    %c28_i32 = arith.constant 28 : i32
    %112 = tpu.dynamic_rotate %7 by %c28_i32 dim 1 : vector<1x256xf32>, i32 -> vector<1x256xf32>
    %c26 = arith.constant 26 : index
    %c0_90 = arith.constant 0 : index
    %113 = vector.load %arg9[%c26, %c0_90] : memref<81x256xf32, #tpu.memory_space<vmem>>, vector<1x256xf32>
    %114 = arith.mulf %112, %113 : vector<1x256xf32>
    %c26_91 = arith.constant 26 : index
    %c0_92 = arith.constant 0 : index
    %115 = vector.load %arg13[%c26_91, %c0_92] : memref<82x256xf32, #tpu.memory_space<vmem>>, vector<1x256xf32>
    tpu.vector_store %arg13[%c26_91, %c0_92], %114 {strides = array<i32>} : memref<82x256xf32, #tpu.memory_space<vmem>>, vector<1x256xf32>,
    %c20_i32 = arith.constant 20 : i32
    %116 = tpu.dynamic_rotate %7 by %c20_i32 dim 1 : vector<1x256xf32>, i32 -> vector<1x256xf32>
    %c27 = arith.constant 27 : index
    %c0_93 = arith.constant 0 : index
    %117 = vector.load %arg9[%c27, %c0_93] : memref<81x256xf32, #tpu.memory_space<vmem>>, vector<1x256xf32>
    %118 = arith.mulf %116, %117 : vector<1x256xf32>
    %c27_94 = arith.constant 27 : index
    %c0_95 = arith.constant 0 : index
    %119 = vector.load %arg13[%c27_94, %c0_95] : memref<82x256xf32, #tpu.memory_space<vmem>>, vector<1x256xf32>
    tpu.vector_store %arg13[%c27_94, %c0_95], %118 {strides = array<i32>} : memref<82x256xf32, #tpu.memory_space<vmem>>, vector<1x256xf32>,
    %c19_i32 = arith.constant 19 : i32
    %120 = tpu.dynamic_rotate %7 by %c19_i32 dim 1 : vector<1x256xf32>, i32 -> vector<1x256xf32>
    %c28 = arith.constant 28 : index
    %c0_96 = arith.constant 0 : index
    %121 = vector.load %arg9[%c28, %c0_96] : memref<81x256xf32, #tpu.memory_space<vmem>>, vector<1x256xf32>
    %122 = arith.mulf %120, %121 : vector<1x256xf32>
    %c28_97 = arith.constant 28 : index
    %c0_98 = arith.constant 0 : index
    %123 = vector.load %arg13[%c28_97, %c0_98] : memref<82x256xf32, #tpu.memory_space<vmem>>, vector<1x256xf32>
    tpu.vector_store %arg13[%c28_97, %c0_98], %122 {strides = array<i32>} : memref<82x256xf32, #tpu.memory_space<vmem>>, vector<1x256xf32>,
    %c18_i32 = arith.constant 18 : i32
    %124 = tpu.dynamic_rotate %7 by %c18_i32 dim 1 : vector<1x256xf32>, i32 -> vector<1x256xf32>
    %c29 = arith.constant 29 : index
    %c0_99 = arith.constant 0 : index
    %125 = vector.load %arg9[%c29, %c0_99] : memref<81x256xf32, #tpu.memory_space<vmem>>, vector<1x256xf32>
    %126 = arith.mulf %124, %125 : vector<1x256xf32>
    %c29_100 = arith.constant 29 : index
    %c0_101 = arith.constant 0 : index
    %127 = vector.load %arg13[%c29_100, %c0_101] : memref<82x256xf32, #tpu.memory_space<vmem>>, vector<1x256xf32>
    tpu.vector_store %arg13[%c29_100, %c0_101], %126 {strides = array<i32>} : memref<82x256xf32, #tpu.memory_space<vmem>>, vector<1x256xf32>,
    %c17_i32 = arith.constant 17 : i32
    %128 = tpu.dynamic_rotate %7 by %c17_i32 dim 1 : vector<1x256xf32>, i32 -> vector<1x256xf32>
    %c30 = arith.constant 30 : index
    %c0_102 = arith.constant 0 : index
    %129 = vector.load %arg9[%c30, %c0_102] : memref<81x256xf32, #tpu.memory_space<vmem>>, vector<1x256xf32>
    %130 = arith.mulf %128, %129 : vector<1x256xf32>
    %c30_103 = arith.constant 30 : index
    %c0_104 = arith.constant 0 : index
    %131 = vector.load %arg13[%c30_103, %c0_104] : memref<82x256xf32, #tpu.memory_space<vmem>>, vector<1x256xf32>
    tpu.vector_store %arg13[%c30_103, %c0_104], %130 {strides = array<i32>} : memref<82x256xf32, #tpu.memory_space<vmem>>, vector<1x256xf32>,
    %c16_i32 = arith.constant 16 : i32
    %132 = tpu.dynamic_rotate %7 by %c16_i32 dim 1 : vector<1x256xf32>, i32 -> vector<1x256xf32>
    %c31 = arith.constant 31 : index
    %c0_105 = arith.constant 0 : index
    %133 = vector.load %arg9[%c31, %c0_105] : memref<81x256xf32, #tpu.memory_space<vmem>>, vector<1x256xf32>
    %134 = arith.mulf %132, %133 : vector<1x256xf32>
    %c31_106 = arith.constant 31 : index
    %c0_107 = arith.constant 0 : index
    %135 = vector.load %arg13[%c31_106, %c0_107] : memref<82x256xf32, #tpu.memory_space<vmem>>, vector<1x256xf32>
    tpu.vector_store %arg13[%c31_106, %c0_107], %134 {strides = array<i32>} : memref<82x256xf32, #tpu.memory_space<vmem>>, vector<1x256xf32>,
    %c15_i32 = arith.constant 15 : i32
    %136 = tpu.dynamic_rotate %7 by %c15_i32 dim 1 : vector<1x256xf32>, i32 -> vector<1x256xf32>
    %c32 = arith.constant 32 : index
    %c0_108 = arith.constant 0 : index
    %137 = vector.load %arg9[%c32, %c0_108] : memref<81x256xf32, #tpu.memory_space<vmem>>, vector<1x256xf32>
    %138 = arith.mulf %136, %137 : vector<1x256xf32>
    %c32_109 = arith.constant 32 : index
    %c0_110 = arith.constant 0 : index
    %139 = vector.load %arg13[%c32_109, %c0_110] : memref<82x256xf32, #tpu.memory_space<vmem>>, vector<1x256xf32>
    tpu.vector_store %arg13[%c32_109, %c0_110], %138 {strides = array<i32>} : memref<82x256xf32, #tpu.memory_space<vmem>>, vector<1x256xf32>,
    %c14_i32 = arith.constant 14 : i32
    %140 = tpu.dynamic_rotate %7 by %c14_i32 dim 1 : vector<1x256xf32>, i32 -> vector<1x256xf32>
    %c33 = arith.constant 33 : index
    %c0_111 = arith.constant 0 : index
    %141 = vector.load %arg9[%c33, %c0_111] : memref<81x256xf32, #tpu.memory_space<vmem>>, vector<1x256xf32>
    %142 = arith.mulf %140, %141 : vector<1x256xf32>
    %c33_112 = arith.constant 33 : index
    %c0_113 = arith.constant 0 : index
    %143 = vector.load %arg13[%c33_112, %c0_113] : memref<82x256xf32, #tpu.memory_space<vmem>>, vector<1x256xf32>
    tpu.vector_store %arg13[%c33_112, %c0_113], %142 {strides = array<i32>} : memref<82x256xf32, #tpu.memory_space<vmem>>, vector<1x256xf32>,
    %c13_i32 = arith.constant 13 : i32
    %144 = tpu.dynamic_rotate %7 by %c13_i32 dim 1 : vector<1x256xf32>, i32 -> vector<1x256xf32>
    %c34 = arith.constant 34 : index
    %c0_114 = arith.constant 0 : index
    %145 = vector.load %arg9[%c34, %c0_114] : memref<81x256xf32, #tpu.memory_space<vmem>>, vector<1x256xf32>
    %146 = arith.mulf %144, %145 : vector<1x256xf32>
    %c34_115 = arith.constant 34 : index
    %c0_116 = arith.constant 0 : index
    %147 = vector.load %arg13[%c34_115, %c0_116] : memref<82x256xf32, #tpu.memory_space<vmem>>, vector<1x256xf32>
    tpu.vector_store %arg13[%c34_115, %c0_116], %146 {strides = array<i32>} : memref<82x256xf32, #tpu.memory_space<vmem>>, vector<1x256xf32>,
    %c12_i32 = arith.constant 12 : i32
    %148 = tpu.dynamic_rotate %7 by %c12_i32 dim 1 : vector<1x256xf32>, i32 -> vector<1x256xf32>
    %c35 = arith.constant 35 : index
    %c0_117 = arith.constant 0 : index
    %149 = vector.load %arg9[%c35, %c0_117] : memref<81x256xf32, #tpu.memory_space<vmem>>, vector<1x256xf32>
    %150 = arith.mulf %148, %149 : vector<1x256xf32>
    %c35_118 = arith.constant 35 : index
    %c0_119 = arith.constant 0 : index
    %151 = vector.load %arg13[%c35_118, %c0_119] : memref<82x256xf32, #tpu.memory_space<vmem>>, vector<1x256xf32>
    tpu.vector_store %arg13[%c35_118, %c0_119], %150 {strides = array<i32>} : memref<82x256xf32, #tpu.memory_space<vmem>>, vector<1x256xf32>,
    %c4_i32 = arith.constant 4 : i32
    %152 = tpu.dynamic_rotate %7 by %c4_i32 dim 1 : vector<1x256xf32>, i32 -> vector<1x256xf32>
    %c36 = arith.constant 36 : index
    %c0_120 = arith.constant 0 : index
    %153 = vector.load %arg9[%c36, %c0_120] : memref<81x256xf32, #tpu.memory_space<vmem>>, vector<1x256xf32>
    %154 = arith.mulf %152, %153 : vector<1x256xf32>
    %c36_121 = arith.constant 36 : index
    %c0_122 = arith.constant 0 : index
    %155 = vector.load %arg13[%c36_121, %c0_122] : memref<82x256xf32, #tpu.memory_space<vmem>>, vector<1x256xf32>
    tpu.vector_store %arg13[%c36_121, %c0_122], %154 {strides = array<i32>} : memref<82x256xf32, #tpu.memory_space<vmem>>, vector<1x256xf32>,
    %c3_i32 = arith.constant 3 : i32
    %156 = tpu.dynamic_rotate %7 by %c3_i32 dim 1 : vector<1x256xf32>, i32 -> vector<1x256xf32>
    %c37 = arith.constant 37 : index
    %c0_123 = arith.constant 0 : index
    %157 = vector.load %arg9[%c37, %c0_123] : memref<81x256xf32, #tpu.memory_space<vmem>>, vector<1x256xf32>
    %158 = arith.mulf %156, %157 : vector<1x256xf32>
    %c37_124 = arith.constant 37 : index
    %c0_125 = arith.constant 0 : index
    %159 = vector.load %arg13[%c37_124, %c0_125] : memref<82x256xf32, #tpu.memory_space<vmem>>, vector<1x256xf32>
    tpu.vector_store %arg13[%c37_124, %c0_125], %158 {strides = array<i32>} : memref<82x256xf32, #tpu.memory_space<vmem>>, vector<1x256xf32>,
    %c2_i32 = arith.constant 2 : i32
    %160 = tpu.dynamic_rotate %7 by %c2_i32 dim 1 : vector<1x256xf32>, i32 -> vector<1x256xf32>
    %c38 = arith.constant 38 : index
    %c0_126 = arith.constant 0 : index
    %161 = vector.load %arg9[%c38, %c0_126] : memref<81x256xf32, #tpu.memory_space<vmem>>, vector<1x256xf32>
    %162 = arith.mulf %160, %161 : vector<1x256xf32>
    %c38_127 = arith.constant 38 : index
    %c0_128 = arith.constant 0 : index
    %163 = vector.load %arg13[%c38_127, %c0_128] : memref<82x256xf32, #tpu.memory_space<vmem>>, vector<1x256xf32>
    tpu.vector_store %arg13[%c38_127, %c0_128], %162 {strides = array<i32>} : memref<82x256xf32, #tpu.memory_space<vmem>>, vector<1x256xf32>,
    %c1_i32 = arith.constant 1 : i32
    %164 = tpu.dynamic_rotate %7 by %c1_i32 dim 1 : vector<1x256xf32>, i32 -> vector<1x256xf32>
    %c39 = arith.constant 39 : index
    %c0_129 = arith.constant 0 : index
    %165 = vector.load %arg9[%c39, %c0_129] : memref<81x256xf32, #tpu.memory_space<vmem>>, vector<1x256xf32>
    %166 = arith.mulf %164, %165 : vector<1x256xf32>
    %c39_130 = arith.constant 39 : index
    %c0_131 = arith.constant 0 : index
    %167 = vector.load %arg13[%c39_130, %c0_131] : memref<82x256xf32, #tpu.memory_space<vmem>>, vector<1x256xf32>
    tpu.vector_store %arg13[%c39_130, %c0_131], %166 {strides = array<i32>} : memref<82x256xf32, #tpu.memory_space<vmem>>, vector<1x256xf32>,
    %c40 = arith.constant 40 : index
    %c0_132 = arith.constant 0 : index
    %168 = vector.load %arg9[%c40, %c0_132] : memref<81x256xf32, #tpu.memory_space<vmem>>, vector<1x256xf32>
    %169 = arith.mulf %7, %168 : vector<1x256xf32>
    %c40_133 = arith.constant 40 : index
    %c0_134 = arith.constant 0 : index
    %170 = vector.load %arg13[%c40_133, %c0_134] : memref<82x256xf32, #tpu.memory_space<vmem>>, vector<1x256xf32>
    tpu.vector_store %arg13[%c40_133, %c0_134], %169 {strides = array<i32>} : memref<82x256xf32, #tpu.memory_space<vmem>>, vector<1x256xf32>,
    %c255_i32 = arith.constant 255 : i32
    %171 = tpu.dynamic_rotate %7 by %c255_i32 dim 1 : vector<1x256xf32>, i32 -> vector<1x256xf32>
    %c41 = arith.constant 41 : index
    %c0_135 = arith.constant 0 : index
    %172 = vector.load %arg9[%c41, %c0_135] : memref<81x256xf32, #tpu.memory_space<vmem>>, vector<1x256xf32>
    %173 = arith.mulf %171, %172 : vector<1x256xf32>
    %c41_136 = arith.constant 41 : index
    %c0_137 = arith.constant 0 : index
    %174 = vector.load %arg13[%c41_136, %c0_137] : memref<82x256xf32, #tpu.memory_space<vmem>>, vector<1x256xf32>
    tpu.vector_store %arg13[%c41_136, %c0_137], %173 {strides = array<i32>} : memref<82x256xf32, #tpu.memory_space<vmem>>, vector<1x256xf32>,
    %c254_i32 = arith.constant 254 : i32
    %175 = tpu.dynamic_rotate %7 by %c254_i32 dim 1 : vector<1x256xf32>, i32 -> vector<1x256xf32>
    %c42 = arith.constant 42 : index
    %c0_138 = arith.constant 0 : index
    %176 = vector.load %arg9[%c42, %c0_138] : memref<81x256xf32, #tpu.memory_space<vmem>>, vector<1x256xf32>
    %177 = arith.mulf %175, %176 : vector<1x256xf32>
    %c42_139 = arith.constant 42 : index
    %c0_140 = arith.constant 0 : index
    %178 = vector.load %arg13[%c42_139, %c0_140] : memref<82x256xf32, #tpu.memory_space<vmem>>, vector<1x256xf32>
    tpu.vector_store %arg13[%c42_139, %c0_140], %177 {strides = array<i32>} : memref<82x256xf32, #tpu.memory_space<vmem>>, vector<1x256xf32>,
    %c253_i32 = arith.constant 253 : i32
    %179 = tpu.dynamic_rotate %7 by %c253_i32 dim 1 : vector<1x256xf32>, i32 -> vector<1x256xf32>
    %c43 = arith.constant 43 : index
    %c0_141 = arith.constant 0 : index
    %180 = vector.load %arg9[%c43, %c0_141] : memref<81x256xf32, #tpu.memory_space<vmem>>, vector<1x256xf32>
    %181 = arith.mulf %179, %180 : vector<1x256xf32>
    %c43_142 = arith.constant 43 : index
    %c0_143 = arith.constant 0 : index
    %182 = vector.load %arg13[%c43_142, %c0_143] : memref<82x256xf32, #tpu.memory_space<vmem>>, vector<1x256xf32>
    tpu.vector_store %arg13[%c43_142, %c0_143], %181 {strides = array<i32>} : memref<82x256xf32, #tpu.memory_space<vmem>>, vector<1x256xf32>,
    %c252_i32 = arith.constant 252 : i32
    %183 = tpu.dynamic_rotate %7 by %c252_i32 dim 1 : vector<1x256xf32>, i32 -> vector<1x256xf32>
    %c44 = arith.constant 44 : index
    %c0_144 = arith.constant 0 : index
    %184 = vector.load %arg9[%c44, %c0_144] : memref<81x256xf32, #tpu.memory_space<vmem>>, vector<1x256xf32>
    %185 = arith.mulf %183, %184 : vector<1x256xf32>
    %c44_145 = arith.constant 44 : index
    %c0_146 = arith.constant 0 : index
    %186 = vector.load %arg13[%c44_145, %c0_146] : memref<82x256xf32, #tpu.memory_space<vmem>>, vector<1x256xf32>
    tpu.vector_store %arg13[%c44_145, %c0_146], %185 {strides = array<i32>} : memref<82x256xf32, #tpu.memory_space<vmem>>, vector<1x256xf32>,
    %c244_i32 = arith.constant 244 : i32
    %187 = tpu.dynamic_rotate %7 by %c244_i32 dim 1 : vector<1x256xf32>, i32 -> vector<1x256xf32>
    %c45 = arith.constant 45 : index
    %c0_147 = arith.constant 0 : index
    %188 = vector.load %arg9[%c45, %c0_147] : memref<81x256xf32, #tpu.memory_space<vmem>>, vector<1x256xf32>
    %189 = arith.mulf %187, %188 : vector<1x256xf32>
    %c45_148 = arith.constant 45 : index
    %c0_149 = arith.constant 0 : index
    %190 = vector.load %arg13[%c45_148, %c0_149] : memref<82x256xf32, #tpu.memory_space<vmem>>, vector<1x256xf32>
    tpu.vector_store %arg13[%c45_148, %c0_149], %189 {strides = array<i32>} : memref<82x256xf32, #tpu.memory_space<vmem>>, vector<1x256xf32>,
    %c243_i32 = arith.constant 243 : i32
    %191 = tpu.dynamic_rotate %7 by %c243_i32 dim 1 : vector<1x256xf32>, i32 -> vector<1x256xf32>
    %c46 = arith.constant 46 : index
    %c0_150 = arith.constant 0 : index
    %192 = vector.load %arg9[%c46, %c0_150] : memref<81x256xf32, #tpu.memory_space<vmem>>, vector<1x256xf32>
    %193 = arith.mulf %191, %192 : vector<1x256xf32>
    %c46_151 = arith.constant 46 : index
    %c0_152 = arith.constant 0 : index
    %194 = vector.load %arg13[%c46_151, %c0_152] : memref<82x256xf32, #tpu.memory_space<vmem>>, vector<1x256xf32>
    tpu.vector_store %arg13[%c46_151, %c0_152], %193 {strides = array<i32>} : memref<82x256xf32, #tpu.memory_space<vmem>>, vector<1x256xf32>,
    %c242_i32 = arith.constant 242 : i32
    %195 = tpu.dynamic_rotate %7 by %c242_i32 dim 1 : vector<1x256xf32>, i32 -> vector<1x256xf32>
    %c47 = arith.constant 47 : index
    %c0_153 = arith.constant 0 : index
    %196 = vector.load %arg9[%c47, %c0_153] : memref<81x256xf32, #tpu.memory_space<vmem>>, vector<1x256xf32>
    %197 = arith.mulf %195, %196 : vector<1x256xf32>
    %c47_154 = arith.constant 47 : index
    %c0_155 = arith.constant 0 : index
    %198 = vector.load %arg13[%c47_154, %c0_155] : memref<82x256xf32, #tpu.memory_space<vmem>>, vector<1x256xf32>
    tpu.vector_store %arg13[%c47_154, %c0_155], %197 {strides = array<i32>} : memref<82x256xf32, #tpu.memory_space<vmem>>, vector<1x256xf32>,
    %c241_i32 = arith.constant 241 : i32
    %199 = tpu.dynamic_rotate %7 by %c241_i32 dim 1 : vector<1x256xf32>, i32 -> vector<1x256xf32>
    %c48 = arith.constant 48 : index
    %c0_156 = arith.constant 0 : index
    %200 = vector.load %arg9[%c48, %c0_156] : memref<81x256xf32, #tpu.memory_space<vmem>>, vector<1x256xf32>
    %201 = arith.mulf %199, %200 : vector<1x256xf32>
    %c48_157 = arith.constant 48 : index
    %c0_158 = arith.constant 0 : index
    %202 = vector.load %arg13[%c48_157, %c0_158] : memref<82x256xf32, #tpu.memory_space<vmem>>, vector<1x256xf32>
    tpu.vector_store %arg13[%c48_157, %c0_158], %201 {strides = array<i32>} : memref<82x256xf32, #tpu.memory_space<vmem>>, vector<1x256xf32>,
    %c240_i32 = arith.constant 240 : i32
    %203 = tpu.dynamic_rotate %7 by %c240_i32 dim 1 : vector<1x256xf32>, i32 -> vector<1x256xf32>
    %c49 = arith.constant 49 : index
    %c0_159 = arith.constant 0 : index
    %204 = vector.load %arg9[%c49, %c0_159] : memref<81x256xf32, #tpu.memory_space<vmem>>, vector<1x256xf32>
    %205 = arith.mulf %203, %204 : vector<1x256xf32>
    %c49_160 = arith.constant 49 : index
    %c0_161 = arith.constant 0 : index
    %206 = vector.load %arg13[%c49_160, %c0_161] : memref<82x256xf32, #tpu.memory_space<vmem>>, vector<1x256xf32>
    tpu.vector_store %arg13[%c49_160, %c0_161], %205 {strides = array<i32>} : memref<82x256xf32, #tpu.memory_space<vmem>>, vector<1x256xf32>,
    %c239_i32 = arith.constant 239 : i32
    %207 = tpu.dynamic_rotate %7 by %c239_i32 dim 1 : vector<1x256xf32>, i32 -> vector<1x256xf32>
    %c50 = arith.constant 50 : index
    %c0_162 = arith.constant 0 : index
    %208 = vector.load %arg9[%c50, %c0_162] : memref<81x256xf32, #tpu.memory_space<vmem>>, vector<1x256xf32>
    %209 = arith.mulf %207, %208 : vector<1x256xf32>
    %c50_163 = arith.constant 50 : index
    %c0_164 = arith.constant 0 : index
    %210 = vector.load %arg13[%c50_163, %c0_164] : memref<82x256xf32, #tpu.memory_space<vmem>>, vector<1x256xf32>
    tpu.vector_store %arg13[%c50_163, %c0_164], %209 {strides = array<i32>} : memref<82x256xf32, #tpu.memory_space<vmem>>, vector<1x256xf32>,
    %c238_i32 = arith.constant 238 : i32
    %211 = tpu.dynamic_rotate %7 by %c238_i32 dim 1 : vector<1x256xf32>, i32 -> vector<1x256xf32>
    %c51 = arith.constant 51 : index
    %c0_165 = arith.constant 0 : index
    %212 = vector.load %arg9[%c51, %c0_165] : memref<81x256xf32, #tpu.memory_space<vmem>>, vector<1x256xf32>
    %213 = arith.mulf %211, %212 : vector<1x256xf32>
    %c51_166 = arith.constant 51 : index
    %c0_167 = arith.constant 0 : index
    %214 = vector.load %arg13[%c51_166, %c0_167] : memref<82x256xf32, #tpu.memory_space<vmem>>, vector<1x256xf32>
    tpu.vector_store %arg13[%c51_166, %c0_167], %213 {strides = array<i32>} : memref<82x256xf32, #tpu.memory_space<vmem>>, vector<1x256xf32>,
    %c237_i32 = arith.constant 237 : i32
    %215 = tpu.dynamic_rotate %7 by %c237_i32 dim 1 : vector<1x256xf32>, i32 -> vector<1x256xf32>
    %c52 = arith.constant 52 : index
    %c0_168 = arith.constant 0 : index
    %216 = vector.load %arg9[%c52, %c0_168] : memref<81x256xf32, #tpu.memory_space<vmem>>, vector<1x256xf32>
    %217 = arith.mulf %215, %216 : vector<1x256xf32>
    %c52_169 = arith.constant 52 : index
    %c0_170 = arith.constant 0 : index
    %218 = vector.load %arg13[%c52_169, %c0_170] : memref<82x256xf32, #tpu.memory_space<vmem>>, vector<1x256xf32>
    tpu.vector_store %arg13[%c52_169, %c0_170], %217 {strides = array<i32>} : memref<82x256xf32, #tpu.memory_space<vmem>>, vector<1x256xf32>,
    %c236_i32 = arith.constant 236 : i32
    %219 = tpu.dynamic_rotate %7 by %c236_i32 dim 1 : vector<1x256xf32>, i32 -> vector<1x256xf32>
    %c53 = arith.constant 53 : index
    %c0_171 = arith.constant 0 : index
    %220 = vector.load %arg9[%c53, %c0_171] : memref<81x256xf32, #tpu.memory_space<vmem>>, vector<1x256xf32>
    %221 = arith.mulf %219, %220 : vector<1x256xf32>
    %c53_172 = arith.constant 53 : index
    %c0_173 = arith.constant 0 : index
    %222 = vector.load %arg13[%c53_172, %c0_173] : memref<82x256xf32, #tpu.memory_space<vmem>>, vector<1x256xf32>
    tpu.vector_store %arg13[%c53_172, %c0_173], %221 {strides = array<i32>} : memref<82x256xf32, #tpu.memory_space<vmem>>, vector<1x256xf32>,
    %c228_i32 = arith.constant 228 : i32
    %223 = tpu.dynamic_rotate %7 by %c228_i32 dim 1 : vector<1x256xf32>, i32 -> vector<1x256xf32>
    %c54 = arith.constant 54 : index
    %c0_174 = arith.constant 0 : index
    %224 = vector.load %arg9[%c54, %c0_174] : memref<81x256xf32, #tpu.memory_space<vmem>>, vector<1x256xf32>
    %225 = arith.mulf %223, %224 : vector<1x256xf32>
    %c54_175 = arith.constant 54 : index
    %c0_176 = arith.constant 0 : index
    %226 = vector.load %arg13[%c54_175, %c0_176] : memref<82x256xf32, #tpu.memory_space<vmem>>, vector<1x256xf32>
    tpu.vector_store %arg13[%c54_175, %c0_176], %225 {strides = array<i32>} : memref<82x256xf32, #tpu.memory_space<vmem>>, vector<1x256xf32>,
    %c227_i32 = arith.constant 227 : i32
    %227 = tpu.dynamic_rotate %7 by %c227_i32 dim 1 : vector<1x256xf32>, i32 -> vector<1x256xf32>
    %c55 = arith.constant 55 : index
    %c0_177 = arith.constant 0 : index
    %228 = vector.load %arg9[%c55, %c0_177] : memref<81x256xf32, #tpu.memory_space<vmem>>, vector<1x256xf32>
    %229 = arith.mulf %227, %228 : vector<1x256xf32>
    %c55_178 = arith.constant 55 : index
    %c0_179 = arith.constant 0 : index
    %230 = vector.load %arg13[%c55_178, %c0_179] : memref<82x256xf32, #tpu.memory_space<vmem>>, vector<1x256xf32>
    tpu.vector_store %arg13[%c55_178, %c0_179], %229 {strides = array<i32>} : memref<82x256xf32, #tpu.memory_space<vmem>>, vector<1x256xf32>,
    %c226_i32 = arith.constant 226 : i32
    %231 = tpu.dynamic_rotate %7 by %c226_i32 dim 1 : vector<1x256xf32>, i32 -> vector<1x256xf32>
    %c56 = arith.constant 56 : index
    %c0_180 = arith.constant 0 : index
    %232 = vector.load %arg9[%c56, %c0_180] : memref<81x256xf32, #tpu.memory_space<vmem>>, vector<1x256xf32>
    %233 = arith.mulf %231, %232 : vector<1x256xf32>
    %c56_181 = arith.constant 56 : index
    %c0_182 = arith.constant 0 : index
    %234 = vector.load %arg13[%c56_181, %c0_182] : memref<82x256xf32, #tpu.memory_space<vmem>>, vector<1x256xf32>
    tpu.vector_store %arg13[%c56_181, %c0_182], %233 {strides = array<i32>} : memref<82x256xf32, #tpu.memory_space<vmem>>, vector<1x256xf32>,
    %c225_i32 = arith.constant 225 : i32
    %235 = tpu.dynamic_rotate %7 by %c225_i32 dim 1 : vector<1x256xf32>, i32 -> vector<1x256xf32>
    %c57 = arith.constant 57 : index
    %c0_183 = arith.constant 0 : index
    %236 = vector.load %arg9[%c57, %c0_183] : memref<81x256xf32, #tpu.memory_space<vmem>>, vector<1x256xf32>
    %237 = arith.mulf %235, %236 : vector<1x256xf32>
    %c57_184 = arith.constant 57 : index
    %c0_185 = arith.constant 0 : index
    %238 = vector.load %arg13[%c57_184, %c0_185] : memref<82x256xf32, #tpu.memory_space<vmem>>, vector<1x256xf32>
    tpu.vector_store %arg13[%c57_184, %c0_185], %237 {strides = array<i32>} : memref<82x256xf32, #tpu.memory_space<vmem>>, vector<1x256xf32>,
    %c224_i32 = arith.constant 224 : i32
    %239 = tpu.dynamic_rotate %7 by %c224_i32 dim 1 : vector<1x256xf32>, i32 -> vector<1x256xf32>
    %c58 = arith.constant 58 : index
    %c0_186 = arith.constant 0 : index
    %240 = vector.load %arg9[%c58, %c0_186] : memref<81x256xf32, #tpu.memory_space<vmem>>, vector<1x256xf32>
    %241 = arith.mulf %239, %240 : vector<1x256xf32>
    %c58_187 = arith.constant 58 : index
    %c0_188 = arith.constant 0 : index
    %242 = vector.load %arg13[%c58_187, %c0_188] : memref<82x256xf32, #tpu.memory_space<vmem>>, vector<1x256xf32>
    tpu.vector_store %arg13[%c58_187, %c0_188], %241 {strides = array<i32>} : memref<82x256xf32, #tpu.memory_space<vmem>>, vector<1x256xf32>,
    %c223_i32 = arith.constant 223 : i32
    %243 = tpu.dynamic_rotate %7 by %c223_i32 dim 1 : vector<1x256xf32>, i32 -> vector<1x256xf32>
    %c59 = arith.constant 59 : index
    %c0_189 = arith.constant 0 : index
    %244 = vector.load %arg9[%c59, %c0_189] : memref<81x256xf32, #tpu.memory_space<vmem>>, vector<1x256xf32>
    %245 = arith.mulf %243, %244 : vector<1x256xf32>
    %c59_190 = arith.constant 59 : index
    %c0_191 = arith.constant 0 : index
    %246 = vector.load %arg13[%c59_190, %c0_191] : memref<82x256xf32, #tpu.memory_space<vmem>>, vector<1x256xf32>
    tpu.vector_store %arg13[%c59_190, %c0_191], %245 {strides = array<i32>} : memref<82x256xf32, #tpu.memory_space<vmem>>, vector<1x256xf32>,
    %c222_i32 = arith.constant 222 : i32
    %247 = tpu.dynamic_rotate %7 by %c222_i32 dim 1 : vector<1x256xf32>, i32 -> vector<1x256xf32>
    %c60 = arith.constant 60 : index
    %c0_192 = arith.constant 0 : index
    %248 = vector.load %arg9[%c60, %c0_192] : memref<81x256xf32, #tpu.memory_space<vmem>>, vector<1x256xf32>
    %249 = arith.mulf %247, %248 : vector<1x256xf32>
    %c60_193 = arith.constant 60 : index
    %c0_194 = arith.constant 0 : index
    %250 = vector.load %arg13[%c60_193, %c0_194] : memref<82x256xf32, #tpu.memory_space<vmem>>, vector<1x256xf32>
    tpu.vector_store %arg13[%c60_193, %c0_194], %249 {strides = array<i32>} : memref<82x256xf32, #tpu.memory_space<vmem>>, vector<1x256xf32>,
    %c221_i32 = arith.constant 221 : i32
    %251 = tpu.dynamic_rotate %7 by %c221_i32 dim 1 : vector<1x256xf32>, i32 -> vector<1x256xf32>
    %c61 = arith.constant 61 : index
    %c0_195 = arith.constant 0 : index
    %252 = vector.load %arg9[%c61, %c0_195] : memref<81x256xf32, #tpu.memory_space<vmem>>, vector<1x256xf32>
    %253 = arith.mulf %251, %252 : vector<1x256xf32>
    %c61_196 = arith.constant 61 : index
    %c0_197 = arith.constant 0 : index
    %254 = vector.load %arg13[%c61_196, %c0_197] : memref<82x256xf32, #tpu.memory_space<vmem>>, vector<1x256xf32>
    tpu.vector_store %arg13[%c61_196, %c0_197], %253 {strides = array<i32>} : memref<82x256xf32, #tpu.memory_space<vmem>>, vector<1x256xf32>,
    %c220_i32 = arith.constant 220 : i32
    %255 = tpu.dynamic_rotate %7 by %c220_i32 dim 1 : vector<1x256xf32>, i32 -> vector<1x256xf32>
    %c62 = arith.constant 62 : index
    %c0_198 = arith.constant 0 : index
    %256 = vector.load %arg9[%c62, %c0_198] : memref<81x256xf32, #tpu.memory_space<vmem>>, vector<1x256xf32>
    %257 = arith.mulf %255, %256 : vector<1x256xf32>
    %c62_199 = arith.constant 62 : index
    %c0_200 = arith.constant 0 : index
    %258 = vector.load %arg13[%c62_199, %c0_200] : memref<82x256xf32, #tpu.memory_space<vmem>>, vector<1x256xf32>
    tpu.vector_store %arg13[%c62_199, %c0_200], %257 {strides = array<i32>} : memref<82x256xf32, #tpu.memory_space<vmem>>, vector<1x256xf32>,
    %c212_i32 = arith.constant 212 : i32
    %259 = tpu.dynamic_rotate %7 by %c212_i32 dim 1 : vector<1x256xf32>, i32 -> vector<1x256xf32>
    %c63 = arith.constant 63 : index
    %c0_201 = arith.constant 0 : index
    %260 = vector.load %arg9[%c63, %c0_201] : memref<81x256xf32, #tpu.memory_space<vmem>>, vector<1x256xf32>
    %261 = arith.mulf %259, %260 : vector<1x256xf32>
    %c63_202 = arith.constant 63 : index
    %c0_203 = arith.constant 0 : index
    %262 = vector.load %arg13[%c63_202, %c0_203] : memref<82x256xf32, #tpu.memory_space<vmem>>, vector<1x256xf32>
    tpu.vector_store %arg13[%c63_202, %c0_203], %261 {strides = array<i32>} : memref<82x256xf32, #tpu.memory_space<vmem>>, vector<1x256xf32>,
    %c211_i32 = arith.constant 211 : i32
    %263 = tpu.dynamic_rotate %7 by %c211_i32 dim 1 : vector<1x256xf32>, i32 -> vector<1x256xf32>
    %c64 = arith.constant 64 : index
    %c0_204 = arith.constant 0 : index
    %264 = vector.load %arg9[%c64, %c0_204] : memref<81x256xf32, #tpu.memory_space<vmem>>, vector<1x256xf32>
    %265 = arith.mulf %263, %264 : vector<1x256xf32>
    %c64_205 = arith.constant 64 : index
    %c0_206 = arith.constant 0 : index
    %266 = vector.load %arg13[%c64_205, %c0_206] : memref<82x256xf32, #tpu.memory_space<vmem>>, vector<1x256xf32>
    tpu.vector_store %arg13[%c64_205, %c0_206], %265 {strides = array<i32>} : memref<82x256xf32, #tpu.memory_space<vmem>>, vector<1x256xf32>,
    %c210_i32 = arith.constant 210 : i32
    %267 = tpu.dynamic_rotate %7 by %c210_i32 dim 1 : vector<1x256xf32>, i32 -> vector<1x256xf32>
    %c65 = arith.constant 65 : index
    %c0_207 = arith.constant 0 : index
    %268 = vector.load %arg9[%c65, %c0_207] : memref<81x256xf32, #tpu.memory_space<vmem>>, vector<1x256xf32>
    %269 = arith.mulf %267, %268 : vector<1x256xf32>
    %c65_208 = arith.constant 65 : index
    %c0_209 = arith.constant 0 : index
    %270 = vector.load %arg13[%c65_208, %c0_209] : memref<82x256xf32, #tpu.memory_space<vmem>>, vector<1x256xf32>
    tpu.vector_store %arg13[%c65_208, %c0_209], %269 {strides = array<i32>} : memref<82x256xf32, #tpu.memory_space<vmem>>, vector<1x256xf32>,
    %c209_i32 = arith.constant 209 : i32
    %271 = tpu.dynamic_rotate %7 by %c209_i32 dim 1 : vector<1x256xf32>, i32 -> vector<1x256xf32>
    %c66 = arith.constant 66 : index
    %c0_210 = arith.constant 0 : index
    %272 = vector.load %arg9[%c66, %c0_210] : memref<81x256xf32, #tpu.memory_space<vmem>>, vector<1x256xf32>
    %273 = arith.mulf %271, %272 : vector<1x256xf32>
    %c66_211 = arith.constant 66 : index
    %c0_212 = arith.constant 0 : index
    %274 = vector.load %arg13[%c66_211, %c0_212] : memref<82x256xf32, #tpu.memory_space<vmem>>, vector<1x256xf32>
    tpu.vector_store %arg13[%c66_211, %c0_212], %273 {strides = array<i32>} : memref<82x256xf32, #tpu.memory_space<vmem>>, vector<1x256xf32>,
    %c208_i32 = arith.constant 208 : i32
    %275 = tpu.dynamic_rotate %7 by %c208_i32 dim 1 : vector<1x256xf32>, i32 -> vector<1x256xf32>
    %c67 = arith.constant 67 : index
    %c0_213 = arith.constant 0 : index
    %276 = vector.load %arg9[%c67, %c0_213] : memref<81x256xf32, #tpu.memory_space<vmem>>, vector<1x256xf32>
    %277 = arith.mulf %275, %276 : vector<1x256xf32>
    %c67_214 = arith.constant 67 : index
    %c0_215 = arith.constant 0 : index
    %278 = vector.load %arg13[%c67_214, %c0_215] : memref<82x256xf32, #tpu.memory_space<vmem>>, vector<1x256xf32>
    tpu.vector_store %arg13[%c67_214, %c0_215], %277 {strides = array<i32>} : memref<82x256xf32, #tpu.memory_space<vmem>>, vector<1x256xf32>,
    %c207_i32 = arith.constant 207 : i32
    %279 = tpu.dynamic_rotate %7 by %c207_i32 dim 1 : vector<1x256xf32>, i32 -> vector<1x256xf32>
    %c68 = arith.constant 68 : index
    %c0_216 = arith.constant 0 : index
    %280 = vector.load %arg9[%c68, %c0_216] : memref<81x256xf32, #tpu.memory_space<vmem>>, vector<1x256xf32>
    %281 = arith.mulf %279, %280 : vector<1x256xf32>
    %c68_217 = arith.constant 68 : index
    %c0_218 = arith.constant 0 : index
    %282 = vector.load %arg13[%c68_217, %c0_218] : memref<82x256xf32, #tpu.memory_space<vmem>>, vector<1x256xf32>
    tpu.vector_store %arg13[%c68_217, %c0_218], %281 {strides = array<i32>} : memref<82x256xf32, #tpu.memory_space<vmem>>, vector<1x256xf32>,
    %c206_i32 = arith.constant 206 : i32
    %283 = tpu.dynamic_rotate %7 by %c206_i32 dim 1 : vector<1x256xf32>, i32 -> vector<1x256xf32>
    %c69 = arith.constant 69 : index
    %c0_219 = arith.constant 0 : index
    %284 = vector.load %arg9[%c69, %c0_219] : memref<81x256xf32, #tpu.memory_space<vmem>>, vector<1x256xf32>
    %285 = arith.mulf %283, %284 : vector<1x256xf32>
    %c69_220 = arith.constant 69 : index
    %c0_221 = arith.constant 0 : index
    %286 = vector.load %arg13[%c69_220, %c0_221] : memref<82x256xf32, #tpu.memory_space<vmem>>, vector<1x256xf32>
    tpu.vector_store %arg13[%c69_220, %c0_221], %285 {strides = array<i32>} : memref<82x256xf32, #tpu.memory_space<vmem>>, vector<1x256xf32>,
    %c205_i32 = arith.constant 205 : i32
    %287 = tpu.dynamic_rotate %7 by %c205_i32 dim 1 : vector<1x256xf32>, i32 -> vector<1x256xf32>
    %c70 = arith.constant 70 : index
    %c0_222 = arith.constant 0 : index
    %288 = vector.load %arg9[%c70, %c0_222] : memref<81x256xf32, #tpu.memory_space<vmem>>, vector<1x256xf32>
    %289 = arith.mulf %287, %288 : vector<1x256xf32>
    %c70_223 = arith.constant 70 : index
    %c0_224 = arith.constant 0 : index
    %290 = vector.load %arg13[%c70_223, %c0_224] : memref<82x256xf32, #tpu.memory_space<vmem>>, vector<1x256xf32>
    tpu.vector_store %arg13[%c70_223, %c0_224], %289 {strides = array<i32>} : memref<82x256xf32, #tpu.memory_space<vmem>>, vector<1x256xf32>,
    %c204_i32 = arith.constant 204 : i32
    %291 = tpu.dynamic_rotate %7 by %c204_i32 dim 1 : vector<1x256xf32>, i32 -> vector<1x256xf32>
    %c71 = arith.constant 71 : index
    %c0_225 = arith.constant 0 : index
    %292 = vector.load %arg9[%c71, %c0_225] : memref<81x256xf32, #tpu.memory_space<vmem>>, vector<1x256xf32>
    %293 = arith.mulf %291, %292 : vector<1x256xf32>
    %c71_226 = arith.constant 71 : index
    %c0_227 = arith.constant 0 : index
    %294 = vector.load %arg13[%c71_226, %c0_227] : memref<82x256xf32, #tpu.memory_space<vmem>>, vector<1x256xf32>
    tpu.vector_store %arg13[%c71_226, %c0_227], %293 {strides = array<i32>} : memref<82x256xf32, #tpu.memory_space<vmem>>, vector<1x256xf32>,
    %c196_i32 = arith.constant 196 : i32
    %295 = tpu.dynamic_rotate %7 by %c196_i32 dim 1 : vector<1x256xf32>, i32 -> vector<1x256xf32>
    %c72 = arith.constant 72 : index
    %c0_228 = arith.constant 0 : index
    %296 = vector.load %arg9[%c72, %c0_228] : memref<81x256xf32, #tpu.memory_space<vmem>>, vector<1x256xf32>
    %297 = arith.mulf %295, %296 : vector<1x256xf32>
    %c72_229 = arith.constant 72 : index
    %c0_230 = arith.constant 0 : index
    %298 = vector.load %arg13[%c72_229, %c0_230] : memref<82x256xf32, #tpu.memory_space<vmem>>, vector<1x256xf32>
    tpu.vector_store %arg13[%c72_229, %c0_230], %297 {strides = array<i32>} : memref<82x256xf32, #tpu.memory_space<vmem>>, vector<1x256xf32>,
    %c195_i32 = arith.constant 195 : i32
    %299 = tpu.dynamic_rotate %7 by %c195_i32 dim 1 : vector<1x256xf32>, i32 -> vector<1x256xf32>
    %c73 = arith.constant 73 : index
    %c0_231 = arith.constant 0 : index
    %300 = vector.load %arg9[%c73, %c0_231] : memref<81x256xf32, #tpu.memory_space<vmem>>, vector<1x256xf32>
    %301 = arith.mulf %299, %300 : vector<1x256xf32>
    %c73_232 = arith.constant 73 : index
    %c0_233 = arith.constant 0 : index
    %302 = vector.load %arg13[%c73_232, %c0_233] : memref<82x256xf32, #tpu.memory_space<vmem>>, vector<1x256xf32>
    tpu.vector_store %arg13[%c73_232, %c0_233], %301 {strides = array<i32>} : memref<82x256xf32, #tpu.memory_space<vmem>>, vector<1x256xf32>,
    %c194_i32 = arith.constant 194 : i32
    %303 = tpu.dynamic_rotate %7 by %c194_i32 dim 1 : vector<1x256xf32>, i32 -> vector<1x256xf32>
    %c74 = arith.constant 74 : index
    %c0_234 = arith.constant 0 : index
    %304 = vector.load %arg9[%c74, %c0_234] : memref<81x256xf32, #tpu.memory_space<vmem>>, vector<1x256xf32>
    %305 = arith.mulf %303, %304 : vector<1x256xf32>
    %c74_235 = arith.constant 74 : index
    %c0_236 = arith.constant 0 : index
    %306 = vector.load %arg13[%c74_235, %c0_236] : memref<82x256xf32, #tpu.memory_space<vmem>>, vector<1x256xf32>
    tpu.vector_store %arg13[%c74_235, %c0_236], %305 {strides = array<i32>} : memref<82x256xf32, #tpu.memory_space<vmem>>, vector<1x256xf32>,
    %c193_i32 = arith.constant 193 : i32
    %307 = tpu.dynamic_rotate %7 by %c193_i32 dim 1 : vector<1x256xf32>, i32 -> vector<1x256xf32>
    %c75 = arith.constant 75 : index
    %c0_237 = arith.constant 0 : index
    %308 = vector.load %arg9[%c75, %c0_237] : memref<81x256xf32, #tpu.memory_space<vmem>>, vector<1x256xf32>
    %309 = arith.mulf %307, %308 : vector<1x256xf32>
    %c75_238 = arith.constant 75 : index
    %c0_239 = arith.constant 0 : index
    %310 = vector.load %arg13[%c75_238, %c0_239] : memref<82x256xf32, #tpu.memory_space<vmem>>, vector<1x256xf32>
    tpu.vector_store %arg13[%c75_238, %c0_239], %309 {strides = array<i32>} : memref<82x256xf32, #tpu.memory_space<vmem>>, vector<1x256xf32>,
    %c192_i32 = arith.constant 192 : i32
    %311 = tpu.dynamic_rotate %7 by %c192_i32 dim 1 : vector<1x256xf32>, i32 -> vector<1x256xf32>
    %c76 = arith.constant 76 : index
    %c0_240 = arith.constant 0 : index
    %312 = vector.load %arg9[%c76, %c0_240] : memref<81x256xf32, #tpu.memory_space<vmem>>, vector<1x256xf32>
    %313 = arith.mulf %311, %312 : vector<1x256xf32>
    %c76_241 = arith.constant 76 : index
    %c0_242 = arith.constant 0 : index
    %314 = vector.load %arg13[%c76_241, %c0_242] : memref<82x256xf32, #tpu.memory_space<vmem>>, vector<1x256xf32>
    tpu.vector_store %arg13[%c76_241, %c0_242], %313 {strides = array<i32>} : memref<82x256xf32, #tpu.memory_space<vmem>>, vector<1x256xf32>,
    %c191_i32 = arith.constant 191 : i32
    %315 = tpu.dynamic_rotate %7 by %c191_i32 dim 1 : vector<1x256xf32>, i32 -> vector<1x256xf32>
    %c77 = arith.constant 77 : index
    %c0_243 = arith.constant 0 : index
    %316 = vector.load %arg9[%c77, %c0_243] : memref<81x256xf32, #tpu.memory_space<vmem>>, vector<1x256xf32>
    %317 = arith.mulf %315, %316 : vector<1x256xf32>
    %c77_244 = arith.constant 77 : index
    %c0_245 = arith.constant 0 : index
    %318 = vector.load %arg13[%c77_244, %c0_245] : memref<82x256xf32, #tpu.memory_space<vmem>>, vector<1x256xf32>
    tpu.vector_store %arg13[%c77_244, %c0_245], %317 {strides = array<i32>} : memref<82x256xf32, #tpu.memory_space<vmem>>, vector<1x256xf32>,
    %c190_i32 = arith.constant 190 : i32
    %319 = tpu.dynamic_rotate %7 by %c190_i32 dim 1 : vector<1x256xf32>, i32 -> vector<1x256xf32>
    %c78 = arith.constant 78 : index
    %c0_246 = arith.constant 0 : index
    %320 = vector.load %arg9[%c78, %c0_246] : memref<81x256xf32, #tpu.memory_space<vmem>>, vector<1x256xf32>
    %321 = arith.mulf %319, %320 : vector<1x256xf32>
    %c78_247 = arith.constant 78 : index
    %c0_248 = arith.constant 0 : index
    %322 = vector.load %arg13[%c78_247, %c0_248] : memref<82x256xf32, #tpu.memory_space<vmem>>, vector<1x256xf32>
    tpu.vector_store %arg13[%c78_247, %c0_248], %321 {strides = array<i32>} : memref<82x256xf32, #tpu.memory_space<vmem>>, vector<1x256xf32>,
    %c189_i32 = arith.constant 189 : i32
    %323 = tpu.dynamic_rotate %7 by %c189_i32 dim 1 : vector<1x256xf32>, i32 -> vector<1x256xf32>
    %c79 = arith.constant 79 : index
    %c0_249 = arith.constant 0 : index
    %324 = vector.load %arg9[%c79, %c0_249] : memref<81x256xf32, #tpu.memory_space<vmem>>, vector<1x256xf32>
    %325 = arith.mulf %323, %324 : vector<1x256xf32>
    %c79_250 = arith.constant 79 : index
    %c0_251 = arith.constant 0 : index
    %326 = vector.load %arg13[%c79_250, %c0_251] : memref<82x256xf32, #tpu.memory_space<vmem>>, vector<1x256xf32>
    tpu.vector_store %arg13[%c79_250, %c0_251], %325 {strides = array<i32>} : memref<82x256xf32, #tpu.memory_space<vmem>>, vector<1x256xf32>,
    %c188_i32 = arith.constant 188 : i32
    %327 = tpu.dynamic_rotate %7 by %c188_i32 dim 1 : vector<1x256xf32>, i32 -> vector<1x256xf32>
    %c80 = arith.constant 80 : index
    %c0_252 = arith.constant 0 : index
    %328 = vector.load %arg9[%c80, %c0_252] : memref<81x256xf32, #tpu.memory_space<vmem>>, vector<1x256xf32>
    %329 = arith.mulf %327, %328 : vector<1x256xf32>
    %c80_253 = arith.constant 80 : index
    %c0_254 = arith.constant 0 : index
    %330 = vector.load %arg13[%c80_253, %c0_254] : memref<82x256xf32, #tpu.memory_space<vmem>>, vector<1x256xf32>
    tpu.vector_store %arg13[%c80_253, %c0_254], %329 {strides = array<i32>} : memref<82x256xf32, #tpu.memory_space<vmem>>, vector<1x256xf32>,
    %cst_255 = arith.constant 1.000000e+00 : f32
    %331 = vector.broadcast %cst_255 : f32 to vector<1x256xf32>
    %c81 = arith.constant 81 : index
    %c0_256 = arith.constant 0 : index
    %332 = vector.load %arg13[%c81, %c0_256] : memref<82x256xf32, #tpu.memory_space<vmem>>, vector<1x256xf32>
    tpu.vector_store %arg13[%c81, %c0_256], %331 {strides = array<i32>} : memref<82x256xf32, #tpu.memory_space<vmem>>, vector<1x256xf32>,
    %c0_257 = arith.constant 0 : index
    %c0_258 = arith.constant 0 : index
    %333 = vector.load %arg4[%c0_257, %c0_258] : memref<64x82xf32, #tpu.memory_space<vmem>>, vector<64x82xf32>
    %c0_259 = arith.constant 0 : index
    %c0_260 = arith.constant 0 : index
    %334 = vector.load %arg13[%c0_259, %c0_260] : memref<82x256xf32, #tpu.memory_space<vmem>>, vector<82x256xf32>
    %cst_261 = arith.constant dense<0.000000e+00> : vector<64x256xf32>
    %335 = tpu.matmul %333, %334, %cst_261 {dimension_numbers = #tpu.dot_dimension_numbers<[1], [0], [0], [1], [0, 0, 1, 1], [], []>} : vector<64x82xf32>, vector<82x256xf32>, vector<64x256xf32> -> vector<64x256xf32>
    %cst_262 = arith.constant 0.000000e+00 : f32
    %336 = vector.broadcast %cst_262 : f32 to vector<64x256xf32>
    %337 = arith.maximumf %335, %336 : vector<64x256xf32>
    %c0_263 = arith.constant 0 : index
    %c0_264 = arith.constant 0 : index
    %338 = vector.load %arg5[%c0_263, %c0_264] : memref<32x64xf32, #tpu.memory_space<vmem>>, vector<32x64xf32>
    %cst_265 = arith.constant dense<0.000000e+00> : vector<32x256xf32>
    %339 = tpu.matmul %338, %337, %cst_265 {dimension_numbers = #tpu.dot_dimension_numbers<[1], [0], [0], [1], [0, 0, 1, 1], [], []>} : vector<32x64xf32>, vector<64x256xf32>, vector<32x256xf32> -> vector<32x256xf32>
    %c0_266 = arith.constant 0 : index
    %c0_267 = arith.constant 0 : index
    %340 = vector.load %arg6[%c0_266, %c0_267] : memref<32x1xf32, #tpu.memory_space<vmem>>, vector<32x1xf32>
    %341 = vector.broadcast %340 : vector<32x1xf32> to vector<32x256xf32>
    %342 = arith.addf %339, %341 : vector<32x256xf32>
    %cst_268 = arith.constant 0.000000e+00 : f32
    %343 = vector.broadcast %cst_268 : f32 to vector<32x256xf32>
    %344 = arith.maximumf %342, %343 : vector<32x256xf32>
    %c0_269 = arith.constant 0 : index
    %c0_270 = arith.constant 0 : index
    %345 = vector.load %arg7[%c0_269, %c0_270] : memref<25x32xf32, #tpu.memory_space<vmem>>, vector<25x32xf32>
    %cst_271 = arith.constant dense<0.000000e+00> : vector<25x256xf32>
    %346 = tpu.matmul %345, %344, %cst_271 {dimension_numbers = #tpu.dot_dimension_numbers<[1], [0], [0], [1], [0, 0, 1, 1], [], []>} : vector<25x32xf32>, vector<32x256xf32>, vector<25x256xf32> -> vector<25x256xf32>
    %347 = vector.extract_strided_slice %346 {offsets = [0, 0], sizes = [1, 256], strides = [1, 1]} : vector<25x256xf32> to vector<1x256xf32>
    %c34_i32_272 = arith.constant 34 : i32
    %348 = tpu.dynamic_rotate %347 by %c34_i32_272 dim 1 : vector<1x256xf32>, i32 -> vector<1x256xf32>
    %c0_273 = arith.constant 0 : index
    %c0_274 = arith.constant 0 : index
    %349 = vector.load %arg10[%c0_273, %c0_274] : memref<25x256xf32, #tpu.memory_space<vmem>>, vector<1x256xf32>
    %350 = arith.mulf %348, %349 : vector<1x256xf32>
    %351 = vector.extract_strided_slice %346 {offsets = [1, 0], sizes = [1, 256], strides = [1, 1]} : vector<25x256xf32> to vector<1x256xf32>
    %c33_i32_275 = arith.constant 33 : i32
    %352 = tpu.dynamic_rotate %351 by %c33_i32_275 dim 1 : vector<1x256xf32>, i32 -> vector<1x256xf32>
    %c1_276 = arith.constant 1 : index
    %c0_277 = arith.constant 0 : index
    %353 = vector.load %arg10[%c1_276, %c0_277] : memref<25x256xf32, #tpu.memory_space<vmem>>, vector<1x256xf32>
    %354 = arith.mulf %352, %353 : vector<1x256xf32>
    %355 = vector.extract_strided_slice %346 {offsets = [2, 0], sizes = [1, 256], strides = [1, 1]} : vector<25x256xf32> to vector<1x256xf32>
    %c32_i32_278 = arith.constant 32 : i32
    %356 = tpu.dynamic_rotate %355 by %c32_i32_278 dim 1 : vector<1x256xf32>, i32 -> vector<1x256xf32>
    %c2_279 = arith.constant 2 : index
    %c0_280 = arith.constant 0 : index
    %357 = vector.load %arg10[%c2_279, %c0_280] : memref<25x256xf32, #tpu.memory_space<vmem>>, vector<1x256xf32>
    %358 = arith.mulf %356, %357 : vector<1x256xf32>
    %359 = vector.extract_strided_slice %346 {offsets = [3, 0], sizes = [1, 256], strides = [1, 1]} : vector<25x256xf32> to vector<1x256xf32>
    %c31_i32_281 = arith.constant 31 : i32
    %360 = tpu.dynamic_rotate %359 by %c31_i32_281 dim 1 : vector<1x256xf32>, i32 -> vector<1x256xf32>
    %c3_282 = arith.constant 3 : index
    %c0_283 = arith.constant 0 : index
    %361 = vector.load %arg10[%c3_282, %c0_283] : memref<25x256xf32, #tpu.memory_space<vmem>>, vector<1x256xf32>
    %362 = arith.mulf %360, %361 : vector<1x256xf32>
    %363 = vector.extract_strided_slice %346 {offsets = [4, 0], sizes = [1, 256], strides = [1, 1]} : vector<25x256xf32> to vector<1x256xf32>
    %c30_i32_284 = arith.constant 30 : i32
    %364 = tpu.dynamic_rotate %363 by %c30_i32_284 dim 1 : vector<1x256xf32>, i32 -> vector<1x256xf32>
    %c4_285 = arith.constant 4 : index
    %c0_286 = arith.constant 0 : index
    %365 = vector.load %arg10[%c4_285, %c0_286] : memref<25x256xf32, #tpu.memory_space<vmem>>, vector<1x256xf32>
    %366 = arith.mulf %364, %365 : vector<1x256xf32>
    %367 = vector.extract_strided_slice %346 {offsets = [5, 0], sizes = [1, 256], strides = [1, 1]} : vector<25x256xf32> to vector<1x256xf32>
    %c18_i32_287 = arith.constant 18 : i32
    %368 = tpu.dynamic_rotate %367 by %c18_i32_287 dim 1 : vector<1x256xf32>, i32 -> vector<1x256xf32>
    %c5_288 = arith.constant 5 : index
    %c0_289 = arith.constant 0 : index
    %369 = vector.load %arg10[%c5_288, %c0_289] : memref<25x256xf32, #tpu.memory_space<vmem>>, vector<1x256xf32>
    %370 = arith.mulf %368, %369 : vector<1x256xf32>
    %371 = vector.extract_strided_slice %346 {offsets = [6, 0], sizes = [1, 256], strides = [1, 1]} : vector<25x256xf32> to vector<1x256xf32>
    %c17_i32_290 = arith.constant 17 : i32
    %372 = tpu.dynamic_rotate %371 by %c17_i32_290 dim 1 : vector<1x256xf32>, i32 -> vector<1x256xf32>
    %c6_291 = arith.constant 6 : index
    %c0_292 = arith.constant 0 : index
    %373 = vector.load %arg10[%c6_291, %c0_292] : memref<25x256xf32, #tpu.memory_space<vmem>>, vector<1x256xf32>
    %374 = arith.mulf %372, %373 : vector<1x256xf32>
    %375 = vector.extract_strided_slice %346 {offsets = [7, 0], sizes = [1, 256], strides = [1, 1]} : vector<25x256xf32> to vector<1x256xf32>
    %c16_i32_293 = arith.constant 16 : i32
    %376 = tpu.dynamic_rotate %375 by %c16_i32_293 dim 1 : vector<1x256xf32>, i32 -> vector<1x256xf32>
    %c7_294 = arith.constant 7 : index
    %c0_295 = arith.constant 0 : index
    %377 = vector.load %arg10[%c7_294, %c0_295] : memref<25x256xf32, #tpu.memory_space<vmem>>, vector<1x256xf32>
    %378 = arith.mulf %376, %377 : vector<1x256xf32>
    %379 = vector.extract_strided_slice %346 {offsets = [8, 0], sizes = [1, 256], strides = [1, 1]} : vector<25x256xf32> to vector<1x256xf32>
    %c15_i32_296 = arith.constant 15 : i32
    %380 = tpu.dynamic_rotate %379 by %c15_i32_296 dim 1 : vector<1x256xf32>, i32 -> vector<1x256xf32>
    %c8_297 = arith.constant 8 : index
    %c0_298 = arith.constant 0 : index
    %381 = vector.load %arg10[%c8_297, %c0_298] : memref<25x256xf32, #tpu.memory_space<vmem>>, vector<1x256xf32>
    %382 = arith.mulf %380, %381 : vector<1x256xf32>
    %383 = vector.extract_strided_slice %346 {offsets = [9, 0], sizes = [1, 256], strides = [1, 1]} : vector<25x256xf32> to vector<1x256xf32>
    %c14_i32_299 = arith.constant 14 : i32
    %384 = tpu.dynamic_rotate %383 by %c14_i32_299 dim 1 : vector<1x256xf32>, i32 -> vector<1x256xf32>
    %c9_300 = arith.constant 9 : index
    %c0_301 = arith.constant 0 : index
    %385 = vector.load %arg10[%c9_300, %c0_301] : memref<25x256xf32, #tpu.memory_space<vmem>>, vector<1x256xf32>
    %386 = arith.mulf %384, %385 : vector<1x256xf32>
    %387 = vector.extract_strided_slice %346 {offsets = [10, 0], sizes = [1, 256], strides = [1, 1]} : vector<25x256xf32> to vector<1x256xf32>
    %c2_i32_302 = arith.constant 2 : i32
    %388 = tpu.dynamic_rotate %387 by %c2_i32_302 dim 1 : vector<1x256xf32>, i32 -> vector<1x256xf32>
    %c10_303 = arith.constant 10 : index
    %c0_304 = arith.constant 0 : index
    %389 = vector.load %arg10[%c10_303, %c0_304] : memref<25x256xf32, #tpu.memory_space<vmem>>, vector<1x256xf32>
    %390 = arith.mulf %388, %389 : vector<1x256xf32>
    %391 = vector.extract_strided_slice %346 {offsets = [11, 0], sizes = [1, 256], strides = [1, 1]} : vector<25x256xf32> to vector<1x256xf32>
    %c1_i32_305 = arith.constant 1 : i32
    %392 = tpu.dynamic_rotate %391 by %c1_i32_305 dim 1 : vector<1x256xf32>, i32 -> vector<1x256xf32>
    %c11_306 = arith.constant 11 : index
    %c0_307 = arith.constant 0 : index
    %393 = vector.load %arg10[%c11_306, %c0_307] : memref<25x256xf32, #tpu.memory_space<vmem>>, vector<1x256xf32>
    %394 = arith.mulf %392, %393 : vector<1x256xf32>
    %395 = vector.extract_strided_slice %346 {offsets = [12, 0], sizes = [1, 256], strides = [1, 1]} : vector<25x256xf32> to vector<1x256xf32>
    %c12_308 = arith.constant 12 : index
    %c0_309 = arith.constant 0 : index
    %396 = vector.load %arg10[%c12_308, %c0_309] : memref<25x256xf32, #tpu.memory_space<vmem>>, vector<1x256xf32>
    %397 = arith.mulf %395, %396 : vector<1x256xf32>
    %398 = vector.extract_strided_slice %346 {offsets = [13, 0], sizes = [1, 256], strides = [1, 1]} : vector<25x256xf32> to vector<1x256xf32>
    %c255_i32_310 = arith.constant 255 : i32
    %399 = tpu.dynamic_rotate %398 by %c255_i32_310 dim 1 : vector<1x256xf32>, i32 -> vector<1x256xf32>
    %c13_311 = arith.constant 13 : index
    %c0_312 = arith.constant 0 : index
    %400 = vector.load %arg10[%c13_311, %c0_312] : memref<25x256xf32, #tpu.memory_space<vmem>>, vector<1x256xf32>
    %401 = arith.mulf %399, %400 : vector<1x256xf32>
    %402 = vector.extract_strided_slice %346 {offsets = [14, 0], sizes = [1, 256], strides = [1, 1]} : vector<25x256xf32> to vector<1x256xf32>
    %c254_i32_313 = arith.constant 254 : i32
    %403 = tpu.dynamic_rotate %402 by %c254_i32_313 dim 1 : vector<1x256xf32>, i32 -> vector<1x256xf32>
    %c14_314 = arith.constant 14 : index
    %c0_315 = arith.constant 0 : index
    %404 = vector.load %arg10[%c14_314, %c0_315] : memref<25x256xf32, #tpu.memory_space<vmem>>, vector<1x256xf32>
    %405 = arith.mulf %403, %404 : vector<1x256xf32>
    %406 = vector.extract_strided_slice %346 {offsets = [15, 0], sizes = [1, 256], strides = [1, 1]} : vector<25x256xf32> to vector<1x256xf32>
    %c242_i32_316 = arith.constant 242 : i32
    %407 = tpu.dynamic_rotate %406 by %c242_i32_316 dim 1 : vector<1x256xf32>, i32 -> vector<1x256xf32>
    %c15_317 = arith.constant 15 : index
    %c0_318 = arith.constant 0 : index
    %408 = vector.load %arg10[%c15_317, %c0_318] : memref<25x256xf32, #tpu.memory_space<vmem>>, vector<1x256xf32>
    %409 = arith.mulf %407, %408 : vector<1x256xf32>
    %410 = vector.extract_strided_slice %346 {offsets = [16, 0], sizes = [1, 256], strides = [1, 1]} : vector<25x256xf32> to vector<1x256xf32>
    %c241_i32_319 = arith.constant 241 : i32
    %411 = tpu.dynamic_rotate %410 by %c241_i32_319 dim 1 : vector<1x256xf32>, i32 -> vector<1x256xf32>
    %c16_320 = arith.constant 16 : index
    %c0_321 = arith.constant 0 : index
    %412 = vector.load %arg10[%c16_320, %c0_321] : memref<25x256xf32, #tpu.memory_space<vmem>>, vector<1x256xf32>
    %413 = arith.mulf %411, %412 : vector<1x256xf32>
    %414 = vector.extract_strided_slice %346 {offsets = [17, 0], sizes = [1, 256], strides = [1, 1]} : vector<25x256xf32> to vector<1x256xf32>
    %c240_i32_322 = arith.constant 240 : i32
    %415 = tpu.dynamic_rotate %414 by %c240_i32_322 dim 1 : vector<1x256xf32>, i32 -> vector<1x256xf32>
    %c17_323 = arith.constant 17 : index
    %c0_324 = arith.constant 0 : index
    %416 = vector.load %arg10[%c17_323, %c0_324] : memref<25x256xf32, #tpu.memory_space<vmem>>, vector<1x256xf32>
    %417 = arith.mulf %415, %416 : vector<1x256xf32>
    %418 = vector.extract_strided_slice %346 {offsets = [18, 0], sizes = [1, 256], strides = [1, 1]} : vector<25x256xf32> to vector<1x256xf32>
    %c239_i32_325 = arith.constant 239 : i32
    %419 = tpu.dynamic_rotate %418 by %c239_i32_325 dim 1 : vector<1x256xf32>, i32 -> vector<1x256xf32>
    %c18_326 = arith.constant 18 : index
    %c0_327 = arith.constant 0 : index
    %420 = vector.load %arg10[%c18_326, %c0_327] : memref<25x256xf32, #tpu.memory_space<vmem>>, vector<1x256xf32>
    %421 = arith.mulf %419, %420 : vector<1x256xf32>
    %422 = vector.extract_strided_slice %346 {offsets = [19, 0], sizes = [1, 256], strides = [1, 1]} : vector<25x256xf32> to vector<1x256xf32>
    %c238_i32_328 = arith.constant 238 : i32
    %423 = tpu.dynamic_rotate %422 by %c238_i32_328 dim 1 : vector<1x256xf32>, i32 -> vector<1x256xf32>
    %c19_329 = arith.constant 19 : index
    %c0_330 = arith.constant 0 : index
    %424 = vector.load %arg10[%c19_329, %c0_330] : memref<25x256xf32, #tpu.memory_space<vmem>>, vector<1x256xf32>
    %425 = arith.mulf %423, %424 : vector<1x256xf32>
    %426 = vector.extract_strided_slice %346 {offsets = [20, 0], sizes = [1, 256], strides = [1, 1]} : vector<25x256xf32> to vector<1x256xf32>
    %c226_i32_331 = arith.constant 226 : i32
    %427 = tpu.dynamic_rotate %426 by %c226_i32_331 dim 1 : vector<1x256xf32>, i32 -> vector<1x256xf32>
    %c20_332 = arith.constant 20 : index
    %c0_333 = arith.constant 0 : index
    %428 = vector.load %arg10[%c20_332, %c0_333] : memref<25x256xf32, #tpu.memory_space<vmem>>, vector<1x256xf32>
    %429 = arith.mulf %427, %428 : vector<1x256xf32>
    %430 = vector.extract_strided_slice %346 {offsets = [21, 0], sizes = [1, 256], strides = [1, 1]} : vector<25x256xf32> to vector<1x256xf32>
    %c225_i32_334 = arith.constant 225 : i32
    %431 = tpu.dynamic_rotate %430 by %c225_i32_334 dim 1 : vector<1x256xf32>, i32 -> vector<1x256xf32>
    %c21_335 = arith.constant 21 : index
    %c0_336 = arith.constant 0 : index
    %432 = vector.load %arg10[%c21_335, %c0_336] : memref<25x256xf32, #tpu.memory_space<vmem>>, vector<1x256xf32>
    %433 = arith.mulf %431, %432 : vector<1x256xf32>
    %434 = vector.extract_strided_slice %346 {offsets = [22, 0], sizes = [1, 256], strides = [1, 1]} : vector<25x256xf32> to vector<1x256xf32>
    %c224_i32_337 = arith.constant 224 : i32
    %435 = tpu.dynamic_rotate %434 by %c224_i32_337 dim 1 : vector<1x256xf32>, i32 -> vector<1x256xf32>
    %c22_338 = arith.constant 22 : index
    %c0_339 = arith.constant 0 : index
    %436 = vector.load %arg10[%c22_338, %c0_339] : memref<25x256xf32, #tpu.memory_space<vmem>>, vector<1x256xf32>
    %437 = arith.mulf %435, %436 : vector<1x256xf32>
    %438 = vector.extract_strided_slice %346 {offsets = [23, 0], sizes = [1, 256], strides = [1, 1]} : vector<25x256xf32> to vector<1x256xf32>
    %c223_i32_340 = arith.constant 223 : i32
    %439 = tpu.dynamic_rotate %438 by %c223_i32_340 dim 1 : vector<1x256xf32>, i32 -> vector<1x256xf32>
    %c23_341 = arith.constant 23 : index
    %c0_342 = arith.constant 0 : index
    %440 = vector.load %arg10[%c23_341, %c0_342] : memref<25x256xf32, #tpu.memory_space<vmem>>, vector<1x256xf32>
    %441 = arith.mulf %439, %440 : vector<1x256xf32>
    %442 = vector.extract_strided_slice %346 {offsets = [24, 0], sizes = [1, 256], strides = [1, 1]} : vector<25x256xf32> to vector<1x256xf32>
    %c222_i32_343 = arith.constant 222 : i32
    %443 = tpu.dynamic_rotate %442 by %c222_i32_343 dim 1 : vector<1x256xf32>, i32 -> vector<1x256xf32>
    %c24_344 = arith.constant 24 : index
    %c0_345 = arith.constant 0 : index
    %444 = vector.load %arg10[%c24_344, %c0_345] : memref<25x256xf32, #tpu.memory_space<vmem>>, vector<1x256xf32>
    %445 = arith.mulf %443, %444 : vector<1x256xf32>
    %446 = arith.addf %350, %354 : vector<1x256xf32>
    %447 = arith.addf %358, %362 : vector<1x256xf32>
    %448 = arith.addf %366, %370 : vector<1x256xf32>
    %449 = arith.addf %374, %378 : vector<1x256xf32>
    %450 = arith.addf %382, %386 : vector<1x256xf32>
    %451 = arith.addf %390, %394 : vector<1x256xf32>
    %452 = arith.addf %397, %401 : vector<1x256xf32>
    %453 = arith.addf %405, %409 : vector<1x256xf32>
    %454 = arith.addf %413, %417 : vector<1x256xf32>
    %455 = arith.addf %421, %425 : vector<1x256xf32>
    %456 = arith.addf %429, %433 : vector<1x256xf32>
    %457 = arith.addf %437, %441 : vector<1x256xf32>
    %458 = arith.addf %446, %447 : vector<1x256xf32>
    %459 = arith.addf %448, %449 : vector<1x256xf32>
    %460 = arith.addf %450, %451 : vector<1x256xf32>
    %461 = arith.addf %452, %453 : vector<1x256xf32>
    %462 = arith.addf %454, %455 : vector<1x256xf32>
    %463 = arith.addf %456, %457 : vector<1x256xf32>
    %464 = arith.addf %458, %459 : vector<1x256xf32>
    %465 = arith.addf %460, %461 : vector<1x256xf32>
    %466 = arith.addf %462, %463 : vector<1x256xf32>
    %467 = arith.addf %464, %465 : vector<1x256xf32>
    %468 = arith.addf %466, %445 : vector<1x256xf32>
    %469 = arith.addf %467, %468 : vector<1x256xf32>
    %c0_346 = arith.constant 0 : index
    %c0_347 = arith.constant 0 : index
    %470 = vector.load %arg8[%c0_346, %c0_347] : memref<1x1xf32, #tpu.memory_space<vmem>>, vector<1x1xf32>
    %471 = vector.broadcast %470 : vector<1x1xf32> to vector<1x256xf32>
    %472 = arith.addf %469, %471 : vector<1x256xf32>
    %473 = vector.shape_cast %472 : vector<1x256xf32> to vector<1x1x256xf32>
    %c0_348 = arith.constant 0 : index
    %c0_349 = arith.constant 0 : index
    %c0_350 = arith.constant 0 : index
    %474 = vector.load %arg11[%c0_348, %c0_349, %c0_350] : memref<1x1x256xf32, #tpu.memory_space<vmem>>, vector<1x1x256xf32>
    tpu.vector_store %arg11[%c0_348, %c0_349, %c0_350], %473 {strides = array<i32>} : memref<1x1x256xf32, #tpu.memory_space<vmem>>, vector<1x1x256xf32>,
    return
  }
  func.func @transform_0(%arg0: i32) -> (i32, i32, i32) {
    %c0_i32 = arith.constant 0 : i32
    %c0_i32_0 = arith.constant 0 : i32
    %c0_i32_1 = arith.constant 0 : i32
    return %arg0, %c0_i32, %c0_i32_0 : i32, i32, i32
  }
  func.func @transform_1(%arg0: i32) -> (i32, i32) {
    %c0_i32 = arith.constant 0 : i32
    %c0_i32_0 = arith.constant 0 : i32
    %c0_i32_1 = arith.constant 0 : i32
    return %c0_i32, %c0_i32_0 : i32, i32
  }
  func.func @transform_2(%arg0: i32) -> (i32, i32) {
    %c0_i32 = arith.constant 0 : i32
    %c0_i32_0 = arith.constant 0 : i32
    %c0_i32_1 = arith.constant 0 : i32
    return %c0_i32, %c0_i32_0 : i32, i32
  }
  func.func @transform_3(%arg0: i32) -> (i32, i32) {
    %c0_i32 = arith.constant 0 : i32
    %c0_i32_0 = arith.constant 0 : i32
    %c0_i32_1 = arith.constant 0 : i32
    return %c0_i32, %c0_i32_0 : i32, i32
  }
  func.func @transform_4(%arg0: i32) -> (i32, i32) {
    %c0_i32 = arith.constant 0 : i32
    %c0_i32_0 = arith.constant 0 : i32
    %c0_i32_1 = arith.constant 0 : i32
    return %c0_i32, %c0_i32_0 : i32, i32
  }
  func.func @transform_5(%arg0: i32) -> (i32, i32) {
    %c0_i32 = arith.constant 0 : i32
    %c0_i32_0 = arith.constant 0 : i32
    %c0_i32_1 = arith.constant 0 : i32
    return %c0_i32, %c0_i32_0 : i32, i32
  }
  func.func @transform_6(%arg0: i32) -> (i32, i32) {
    %c0_i32 = arith.constant 0 : i32
    %c0_i32_0 = arith.constant 0 : i32
    %c0_i32_1 = arith.constant 0 : i32
    return %c0_i32, %c0_i32_0 : i32, i32
  }
  func.func @transform_7(%arg0: i32) -> (i32, i32) {
    %c0_i32 = arith.constant 0 : i32
    %c0_i32_0 = arith.constant 0 : i32
    %c0_i32_1 = arith.constant 0 : i32
    return %c0_i32, %c0_i32_0 : i32, i32
  }
  func.func @transform_8(%arg0: i32) -> (i32, i32) {
    %c0_i32 = arith.constant 0 : i32
    %c0_i32_0 = arith.constant 0 : i32
    %c0_i32_1 = arith.constant 0 : i32
    return %c0_i32, %c0_i32_0 : i32, i32
  }
  func.func @transform_9(%arg0: i32) -> (i32, i32) {
    %c0_i32 = arith.constant 0 : i32
    %c0_i32_0 = arith.constant 0 : i32
    %c0_i32_1 = arith.constant 0 : i32
    return %c0_i32, %c0_i32_0 : i32, i32
  }
  func.func @transform_10(%arg0: i32) -> (i32, i32, i32) {
    %c0_i32 = arith.constant 0 : i32
    %c0_i32_0 = arith.constant 0 : i32
    %c0_i32_1 = arith.constant 0 : i32
    return %arg0, %c0_i32, %c0_i32_0 : i32, i32, i32
  }
}

</mosaic_0001>

<llo_original>
// kernel: tpu_custom_call.1
$region0: #{tpu_custom_call.1}
  #allocation0 [shape = 'u32[]', space=smem, size = 0x4, offset = 0x4, fixed_abs, tag = 'smem constant byte address 0x4 - core index']
  #allocation1 [shape = 'u32[72,128]{1,0:T(1,128)}', space=vmem, size = 0x9000, scoped, tag = 'internal scratch']
  #allocation2 [shape = 'f32[1,256]{1,0:T(1,128)}', space=vmem, size = 0x400, scoped, tag = 'scratch operand']
  #allocation3 [shape = 'f32[82,256]{1,0:T(8,128)}', space=vmem, size = 0x16000, scoped, tag = 'scratch operand']
  #allocation4 [shape = 'f32[1,1]{1,0:T(1,128)S(1)}', space=vmem, size = 0x200, scoped, tag = 'scoped memory for tpu_custom_call.1']
  %s0 = inlined_call_operand.hbm [shape: f32[2,1,256], index: 0, kind: input, shape index: {}]
  %s1 = inlined_call_operand.vmem [shape: f32[256,8], index: 1, kind: input, shape index: {}]
  %s2 = inlined_call_operand.vmem [shape: f32[8,256], index: 2, kind: input, shape index: {}]
  %s3 = inlined_call_operand.vmem [shape: f32[64,82], index: 3, kind: input, shape index: {}]
  %s4 = inlined_call_operand.vmem [shape: f32[32,64], index: 4, kind: input, shape index: {}]
  %s5 = inlined_call_operand.vmem [shape: f32[32,1], index: 5, kind: input, shape index: {}]
  %s6 = inlined_call_operand.hbm [shape: f32[25,32], index: 6, kind: input, shape index: {}]
  %s7 = inlined_call_operand.<no memory space> [shape: f32[1,1], index: 7, kind: input, shape index: {}]
  %s8 = inlined_call_operand.vmem [shape: f32[81,256], index: 8, kind: input, shape index: {}]
  %s9 = inlined_call_operand.hbm [shape: f32[25,256], index: 9, kind: input, shape index: {}]
  %s10 = inlined_call_operand.hbm [shape: f32[2,1,256], index: 10, kind: output, shape index: {}]
  %s11 = sld [smem:[#allocation0]]
  $region85: #{tpu_custom_call.1} parent=0
    _
  %s13 = ssub.s32 1, %s11
  %s14 = scalar_select 0, %s13, %s11
  %v15 = vstv %s7
  %16 = vst [vmem:[#allocation4] sm:$0x1] %v15
  $region1: #{tpu_custom_call.1} parent=0
    #allocation5 [shape = 'u8[2048]{0}', space=vmem, size = 0x800, scoped, tag = 'input window, operand 0']
    #allocation6 [shape = 's32[2]{0}', space=sflag, size = 0x8, scoped, tag = 'scoped memory for tpu_custom_call.1']
    #allocation7 [shape = 's32[2]{0}', space=sflag, size = 0x8, scoped, tag = 'scoped memory for tpu_custom_call.1']
    #allocation8 [shape = 'u8[16384]{0}', space=vmem, size = 0x4000, scoped, tag = 'input window, operand 6, single buffered']
    #allocation9 [shape = 's32[1]{0}', space=sflag, size = 0x4, scoped, tag = 'scoped memory for tpu_custom_call.1']
    #allocation10 [shape = 'u8[32768]{0}', space=vmem, size = 0x8000, scoped, tag = 'input window, operand 9, single buffered']
    #allocation11 [shape = 'u8[2048]{0}', space=vmem, size = 0x800, scoped, tag = 'output window, operand 0']
    %17 = vsyncpa [#allocation6], 0
    %s18 = scalar_lea.sflag [#allocation6], 1
    %19 = vsyncpa %s18, 0
    %20 = vsyncpa [#allocation9], 0
    %21 = vsyncpa [#allocation7], 0
    %s22 = scalar_lea.sflag [#allocation7], 1
    %23 = vsyncpa %s22, 0
    loop: start=0, step=1, limit=4
    $region2: #{tpu_custom_call.1} parent=1 // loop_pre_header
      _
    $region3: #{tpu_custom_call.1} parent=1 // loop_header
      %s25 = sphi 0, %s29
      %p26 = scmp.ge.s32.totalorder %s25, 4
      %s35 = sphi 0, %s37
      %s38 = sphi 0, %s35
      %s39 = sphi 0, %s38
      %s55 = sphi 0, %s39
      %s59 = sphi 0, %s59
      %s61 = sphi 0, %s59
      %s62 = sphi 0, %s61
      %s76 = sphi 0, %s62
      %s80 = sphi 0, %s80
      %s82 = sphi 0, %s80
      %s83 = sphi 0, %s82
      %s97 = sphi 0, %s83
      %s101 = sphi 0, %s101
      %s103 = sphi 0, %s101
      %s104 = sphi 0, %s103
      %s118 = sphi 0, %s104
      %s122 = sphi 0, %s122
      %s124 = sphi 0, %s122
      %s125 = sphi 0, %s124
      %s139 = sphi 0, %s125
      %s143 = sphi 0, %s143
      %s145 = sphi 0, %s143
      %s146 = sphi 0, %s145
      %s160 = sphi 0, %s146
      %s164 = sphi 0, %s164
      %s166 = sphi 0, %s164
      %s167 = sphi 0, %s166
      %s181 = sphi 0, %s167
      %s185 = sphi 0, %s185
      %s187 = sphi 0, %s185
      %s188 = sphi 0, %s187
      %s202 = sphi 0, %s188
      %s206 = sphi 0, %s206
      %s208 = sphi 0, %s206
      %s209 = sphi 0, %s208
      %s223 = sphi 0, %s209
      %s227 = sphi 0, %s227
      %s229 = sphi 0, %s227
      %s230 = sphi 0, %s229
      %s244 = sphi 0, %s230
      %s250 = sphi 0, %s252
      %s253 = sphi 0, %s250
      %s254 = sphi 0, %s253
      %s270 = sphi 0, %s254
    $region4: #{tpu_custom_call.1} parent=1 // loop_header_branch
      %28 = sbr.rel (%p26) target = $region8
    $region5: #{tpu_custom_call.1} parent=1 // loop_body
      %s30 = ssub.s32 %s25, 1
      %s31 = ssub.s32 %s25, 2
      %s32 = sadd.s32 %s25, 1
      %s33 = ssub.s32 %s25, %s32
      %p34 = scmp.eq.s32.totalorder %s33, 0
      %s36 = sadd.s32 %s35, 1
      %s37 = scalar_select %p34, %s35, %s36
      %p40 = pneg %p34
      %p41 = scmp.eq.s32.totalorder %s25, 1
      %p42 = por %p40, %p41
      %p43 = scmp.ne.s32.totalorder %s35, %s38
      %p44 = scmp.eq.s32.totalorder %s25, 0
      %p45 = por %p43, %p44
      %p46 = scmp.ne.s32.totalorder %s35, %s38
      %p47 = scmp.eq.s32.totalorder %s30, 1
      %p48 = por %p46, %p47
      %p49 = scmp.ne.s32.totalorder %s38, %s39
      %p50 = scmp.eq.s32.totalorder %s30, 0
      %p51 = por %p49, %p50
      %p52 = scmp.ne.s32.totalorder %s38, %s39
      %p53 = scmp.eq.s32.totalorder %s31, 1
      %p54 = por %p52, %p53
      %p56 = scmp.ne.s32.totalorder %s39, %s55
      %p57 = scmp.eq.s32.totalorder %s31, 0
      %p58 = por %p56, %p57
      %s60 = sadd.s32 %s59, 1
      %p63 = scmp.eq.s32.totalorder %s25, 1
      %p64 = scmp.ne.s32.totalorder %s59, %s61
      %p65 = scmp.eq.s32.totalorder %s25, 0
      %p66 = por %p64, %p65
      %p67 = scmp.ne.s32.totalorder %s59, %s61
      %p68 = scmp.eq.s32.totalorder %s30, 1
      %p69 = por %p67, %p68
      %p70 = scmp.ne.s32.totalorder %s61, %s62
      %p71 = scmp.eq.s32.totalorder %s30, 0
      %p72 = por %p70, %p71
      %p73 = scmp.ne.s32.totalorder %s61, %s62
      %p74 = scmp.eq.s32.totalorder %s31, 1
      %p75 = por %p73, %p74
      %p77 = scmp.ne.s32.totalorder %s62, %s76
      %p78 = scmp.eq.s32.totalorder %s31, 0
      %p79 = por %p77, %p78
      %s81 = sadd.s32 %s80, 1
      %p84 = scmp.eq.s32.totalorder %s25, 1
      %p85 = scmp.ne.s32.totalorder %s80, %s82
      %p86 = scmp.eq.s32.totalorder %s25, 0
      %p87 = por %p85, %p86
      %p88 = scmp.ne.s32.totalorder %s80, %s82
      %p89 = scmp.eq.s32.totalorder %s30, 1
      %p90 = por %p88, %p89
      %p91 = scmp.ne.s32.totalorder %s82, %s83
      %p92 = scmp.eq.s32.totalorder %s30, 0
      %p93 = por %p91, %p92
      %p94 = scmp.ne.s32.totalorder %s82, %s83
      %p95 = scmp.eq.s32.totalorder %s31, 1
      %p96 = por %p94, %p95
      %p98 = scmp.ne.s32.totalorder %s83, %s97
      %p99 = scmp.eq.s32.totalorder %s31, 0
      %p100 = por %p98, %p99
      %s102 = sadd.s32 %s101, 1
      %p105 = scmp.eq.s32.totalorder %s25, 1
      %p106 = scmp.ne.s32.totalorder %s101, %s103
      %p107 = scmp.eq.s32.totalorder %s25, 0
      %p108 = por %p106, %p107
      %p109 = scmp.ne.s32.totalorder %s101, %s103
      %p110 = scmp.eq.s32.totalorder %s30, 1
      %p111 = por %p109, %p110
      %p112 = scmp.ne.s32.totalorder %s103, %s104
      %p113 = scmp.eq.s32.totalorder %s30, 0
      %p114 = por %p112, %p113
      %p115 = scmp.ne.s32.totalorder %s103, %s104
      %p116 = scmp.eq.s32.totalorder %s31, 1
      %p117 = por %p115, %p116
      %p119 = scmp.ne.s32.totalorder %s104, %s118
      %p120 = scmp.eq.s32.totalorder %s31, 0
      %p121 = por %p119, %p120
      %s123 = sadd.s32 %s122, 1
      %p126 = scmp.eq.s32.totalorder %s25, 1
      %p127 = scmp.ne.s32.totalorder %s122, %s124
      %p128 = scmp.eq.s32.totalorder %s25, 0
      %p129 = por %p127, %p128
      %p130 = scmp.ne.s32.totalorder %s122, %s124
      %p131 = scmp.eq.s32.totalorder %s30, 1
      %p132 = por %p130, %p131
      %p133 = scmp.ne.s32.totalorder %s124, %s125
      %p134 = scmp.eq.s32.totalorder %s30, 0
      %p135 = por %p133, %p134
      %p136 = scmp.ne.s32.totalorder %s124, %s125
      %p137 = scmp.eq.s32.totalorder %s31, 1
      %p138 = por %p136, %p137
      %p140 = scmp.ne.s32.totalorder %s125, %s139
      %p141 = scmp.eq.s32.totalorder %s31, 0
      %p142 = por %p140, %p141
      %s144 = sadd.s32 %s143, 1
      %p147 = scmp.eq.s32.totalorder %s25, 1
      %p148 = scmp.ne.s32.totalorder %s143, %s145
      %p149 = scmp.eq.s32.totalorder %s25, 0
      %p150 = por %p148, %p149
      %p151 = scmp.ne.s32.totalorder %s143, %s145
      %p152 = scmp.eq.s32.totalorder %s30, 1
      %p153 = por %p151, %p152
      %p154 = scmp.ne.s32.totalorder %s145, %s146
      %p155 = scmp.eq.s32.totalorder %s30, 0
      %p156 = por %p154, %p155
      %p157 = scmp.ne.s32.totalorder %s145, %s146
      %p158 = scmp.eq.s32.totalorder %s31, 1
      %p159 = por %p157, %p158
      %p161 = scmp.ne.s32.totalorder %s146, %s160
      %p162 = scmp.eq.s32.totalorder %s31, 0
      %p163 = por %p161, %p162
      %s165 = sadd.s32 %s164, 1
      %p168 = scmp.eq.s32.totalorder %s25, 1
      %p169 = scmp.ne.s32.totalorder %s164, %s166
      %p170 = scmp.eq.s32.totalorder %s25, 0
      %p171 = por %p169, %p170
      %p172 = scmp.ne.s32.totalorder %s164, %s166
      %p173 = scmp.eq.s32.totalorder %s30, 1
      %p174 = por %p172, %p173
      %p175 = scmp.ne.s32.totalorder %s166, %s167
      %p176 = scmp.eq.s32.totalorder %s30, 0
      %p177 = por %p175, %p176
      %p178 = scmp.ne.s32.totalorder %s166, %s167
      %p179 = scmp.eq.s32.totalorder %s31, 1
      %p180 = por %p178, %p179
      %p182 = scmp.ne.s32.totalorder %s167, %s181
      %p183 = scmp.eq.s32.totalorder %s31, 0
      %p184 = por %p182, %p183
      %s186 = sadd.s32 %s185, 1
      %p189 = scmp.eq.s32.totalorder %s25, 1
      %p190 = scmp.ne.s32.totalorder %s185, %s187
      %p191 = scmp.eq.s32.totalorder %s25, 0
      %p192 = por %p190, %p191
      %p193 = scmp.ne.s32.totalorder %s185, %s187
      %p194 = scmp.eq.s32.totalorder %s30, 1
      %p195 = por %p193, %p194
      %p196 = scmp.ne.s32.totalorder %s187, %s188
      %p197 = scmp.eq.s32.totalorder %s30, 0
      %p198 = por %p196, %p197
      %p199 = scmp.ne.s32.totalorder %s187, %s188
      %p200 = scmp.eq.s32.totalorder %s31, 1
      %p201 = por %p199, %p200
      %p203 = scmp.ne.s32.totalorder %s188, %s202
      %p204 = scmp.eq.s32.totalorder %s31, 0
      %p205 = por %p203, %p204
      %s207 = sadd.s32 %s206, 1
      %p210 = scmp.eq.s32.totalorder %s25, 1
      %p211 = scmp.ne.s32.totalorder %s206, %s208
      %p212 = scmp.eq.s32.totalorder %s25, 0
      %p213 = por %p211, %p212
      %p214 = scmp.ne.s32.totalorder %s206, %s208
      %p215 = scmp.eq.s32.totalorder %s30, 1
      %p216 = por %p214, %p215
      %p217 = scmp.ne.s32.totalorder %s208, %s209
      %p218 = scmp.eq.s32.totalorder %s30, 0
      %p219 = por %p217, %p218
      %p220 = scmp.ne.s32.totalorder %s208, %s209
      %p221 = scmp.eq.s32.totalorder %s31, 1
      %p222 = por %p220, %p221
      %p224 = scmp.ne.s32.totalorder %s209, %s223
      %p225 = scmp.eq.s32.totalorder %s31, 0
      %p226 = por %p224, %p225
      %s228 = sadd.s32 %s227, 1
      %p231 = scmp.eq.s32.totalorder %s25, 1
      %p232 = scmp.ne.s32.totalorder %s227, %s229
      %p233 = scmp.eq.s32.totalorder %s25, 0
      %p234 = por %p232, %p233
      %p235 = scmp.ne.s32.totalorder %s227, %s229
      %p236 = scmp.eq.s32.totalorder %s30, 1
      %p237 = por %p235, %p236
      %p238 = scmp.ne.s32.totalorder %s229, %s230
      %p239 = scmp.eq.s32.totalorder %s30, 0
      %p240 = por %p238, %p239
      %p241 = scmp.ne.s32.totalorder %s229, %s230
      %p242 = scmp.eq.s32.totalorder %s31, 1
      %p243 = por %p241, %p242
      %p245 = scmp.ne.s32.totalorder %s230, %s244
      %p246 = scmp.eq.s32.totalorder %s31, 0
      %p247 = por %p245, %p246
      %s248 = ssub.s32 %s25, %s32
      %p249 = scmp.eq.s32.totalorder %s248, 0
      %s251 = sadd.s32 %s250, 1
      %s252 = scalar_select %p249, %s250, %s251
      %p255 = pneg %p249
      %p256 = scmp.eq.s32.totalorder %s25, 1
      %p257 = por %p255, %p256
      %p258 = scmp.ne.s32.totalorder %s250, %s253
      %p259 = scmp.eq.s32.totalorder %s25, 0
      %p260 = por %p258, %p259
      %p261 = scmp.ne.s32.totalorder %s250, %s253
      %p262 = scmp.eq.s32.totalorder %s30, 1
      %p263 = por %p261, %p262
      %p264 = scmp.ne.s32.totalorder %s253, %s254
      %p265 = scmp.eq.s32.totalorder %s30, 0
      %p266 = por %p264, %p265
      %p267 = scmp.ne.s32.totalorder %s253, %s254
      %p268 = scmp.eq.s32.totalorder %s31, 1
      %p269 = por %p267, %p268
      %p271 = scmp.ne.s32.totalorder %s254, %s270
      %p272 = scmp.eq.s32.totalorder %s31, 0
      %p273 = por %p271, %p272
      %p274 = scmp.le.s32.totalorder 1, %s25
      %p275 = scmp.lt.s32.totalorder %s25, 3
      %p276 = pnand %p274, %p275
      %p277 = pneg %p276
      // Predicated region
      $region9: #{tpu_custom_call.1} parent=5 // pred_check
        _
      $region10: #{tpu_custom_call.1} parent=5 // pred_check_branch
        %279 = sbr.rel (%p276) target = $region12
      $region11: #{tpu_custom_call.1} parent=5 // pred_region
        %s280 = ssub.s32 %s25, 1
        // Predicated region
        $region13: #{tpu_custom_call.1} parent=11 // pred_check
          %p281 = pneg %p72
        $region14: #{tpu_custom_call.1} parent=11 // pred_check_branch
          %283 = sbr.rel (%p281) target = $region16
        $region15: #{tpu_custom_call.1} parent=11 // pred_region
          _
        $region16: #{tpu_custom_call.1} parent=11 // pred_fallthru
          _
        // Predicated region
        $region17: #{tpu_custom_call.1} parent=11 // pred_check
          %p284 = pneg %p93
        $region18: #{tpu_custom_call.1} parent=11 // pred_check_branch
          %286 = sbr.rel (%p284) target = $region20
        $region19: #{tpu_custom_call.1} parent=11 // pred_region
          _
        $region20: #{tpu_custom_call.1} parent=11 // pred_fallthru
          _
        // Predicated region
        $region21: #{tpu_custom_call.1} parent=11 // pred_check
          %p287 = pneg %p114
        $region22: #{tpu_custom_call.1} parent=11 // pred_check_branch
          %289 = sbr.rel (%p287) target = $region24
        $region23: #{tpu_custom_call.1} parent=11 // pred_region
          _
        $region24: #{tpu_custom_call.1} parent=11 // pred_fallthru
          _
        // Predicated region
        $region25: #{tpu_custom_call.1} parent=11 // pred_check
          %p290 = pneg %p135
        $region26: #{tpu_custom_call.1} parent=11 // pred_check_branch
          %292 = sbr.rel (%p290) target = $region28
        $region27: #{tpu_custom_call.1} parent=11 // pred_region
          _
        $region28: #{tpu_custom_call.1} parent=11 // pred_fallthru
          _
        // Predicated region
        $region29: #{tpu_custom_call.1} parent=11 // pred_check
          %p293 = pneg %p156
        $region30: #{tpu_custom_call.1} parent=11 // pred_check_branch
          %295 = sbr.rel (%p293) target = $region32
        $region31: #{tpu_custom_call.1} parent=11 // pred_region
          _
        $region32: #{tpu_custom_call.1} parent=11 // pred_fallthru
          _
        // Predicated region
        $region33: #{tpu_custom_call.1} parent=11 // pred_check
          %p296 = pneg %p177
        $region34: #{tpu_custom_call.1} parent=11 // pred_check_branch
          %298 = sbr.rel (%p296) target = $region36
        $region35: #{tpu_custom_call.1} parent=11 // pred_region
          %300 = vsyncadd [#allocation9], 0
          %s301 = sshll.u32 %s6, 4
          %s302 = int_to_ptr.hbm [resolvable:$true] %s301
          %s303 = sshll.u32 [#allocation8], 4
          %s304 = int_to_ptr.vmem [resolvable:$true] %s303
          %309 = dma.hbm_to_vmem [thread:$0]  %s302, 512, %s304, [#allocation9], 128, 128, 8
        $region36: #{tpu_custom_call.1} parent=11 // pred_fallthru
          _
        // Predicated region
        $region37: #{tpu_custom_call.1} parent=11 // pred_check
          %p310 = pneg %p198
        $region38: #{tpu_custom_call.1} parent=11 // pred_check_branch
          %312 = sbr.rel (%p310) target = $region40
        $region39: #{tpu_custom_call.1} parent=11 // pred_region
          _
        $region40: #{tpu_custom_call.1} parent=11 // pred_fallthru
          _
        // Predicated region
        $region41: #{tpu_custom_call.1} parent=11 // pred_check
          %p313 = pneg %p219
        $region42: #{tpu_custom_call.1} parent=11 // pred_check_branch
          %315 = sbr.rel (%p313) target = $region44
        $region43: #{tpu_custom_call.1} parent=11 // pred_region
          _
        $region44: #{tpu_custom_call.1} parent=11 // pred_fallthru
          _
        // Predicated region
        $region45: #{tpu_custom_call.1} parent=11 // pred_check
          %p316 = pneg %p240
        $region46: #{tpu_custom_call.1} parent=11 // pred_check_branch
          %318 = sbr.rel (%p316) target = $region48
        $region47: #{tpu_custom_call.1} parent=11 // pred_region
          %320 = vsyncadd [#allocation9], 0
          %s321 = sshll.u32 %s9, 4
          %s322 = int_to_ptr.hbm [resolvable:$true] %s321
          %s323 = sshll.u32 [#allocation10], 4
          %s324 = int_to_ptr.vmem [resolvable:$true] %s323
          %329 = dma.hbm_to_vmem [thread:$0]  %s322, 1024, %s324, [#allocation9], 256, 256, 16
        $region48: #{tpu_custom_call.1} parent=11 // pred_fallthru
          _
      $region12: #{tpu_custom_call.1} parent=5 // pred_fallthru
        _
      %p330 = scmp.lt.s32.totalorder %s25, 2
      // Predicated region
      $region49: #{tpu_custom_call.1} parent=5 // pred_check
        %p331 = pneg %p330
      $region50: #{tpu_custom_call.1} parent=5 // pred_check_branch
        %333 = sbr.rel (%p331) target = $region52
      $region51: #{tpu_custom_call.1} parent=5 // pred_region
        // Predicated region
        $region53: #{tpu_custom_call.1} parent=51 // pred_check
          %p334 = pneg %p45
        $region54: #{tpu_custom_call.1} parent=51 // pred_check_branch
          %336 = sbr.rel (%p334) target = $region56
        $region55: #{tpu_custom_call.1} parent=51 // pred_region
          %s337 = sand.u32 %s35, 1
          %s338 = scalar_lea.sflag [#allocation6], %s337
          %s339 = sand.u32 %s35, 1
          %s340 = smul.addr %s339, 2
          %s341 = scalar_lea.vmem [#allocation5], %s340
          %343 = vsyncadd %s338, 0
          %s344 = smul.addr %s25, 2
          %s345 = scalar_lea.hbm %s0, %s344
          %s347 = sshll.u32 %s345, 4
          %s348 = int_to_ptr.hbm [resolvable:$true] %s347
          %s349 = sshll.u32 %s341, 4
          %s350 = int_to_ptr.vmem [resolvable:$true] %s349
          %352 = dma.hbm_to_vmem [thread:$0]  %s348, 32, %s350, %s338
        $region56: #{tpu_custom_call.1} parent=51 // pred_fallthru
          _
      $region52: #{tpu_custom_call.1} parent=5 // pred_fallthru
        _
      %p353 = scmp.le.s32.totalorder 1, %s25
      %p354 = scmp.lt.s32.totalorder %s25, 3
      %p355 = pnand %p353, %p354
      %p356 = pneg %p355
      // Predicated region
      $region57: #{tpu_custom_call.1} parent=5 // pred_check
        _
      $region58: #{tpu_custom_call.1} parent=5 // pred_check_branch
        %358 = sbr.rel (%p355) target = $region60
      $region59: #{tpu_custom_call.1} parent=5 // pred_region
        %s359 = ssub.s32 %s25, 1
        %s360 = sand.u32 %s38, 1
        %s361 = scalar_lea.sflag [#allocation6], %s360
        %s362 = sand.u32 %s38, 1
        %s363 = smul.addr %s362, 2
        %s364 = scalar_lea.vmem [#allocation5], %s363
        // Predicated region
        $region61: #{tpu_custom_call.1} parent=59 // pred_check
          %p365 = pneg %p51
        $region62: #{tpu_custom_call.1} parent=59 // pred_check_branch
          %367 = sbr.rel (%p365) target = $region64
        $region63: #{tpu_custom_call.1} parent=59 // pred_region
          %369 = dma.done %s361, 32
        $region64: #{tpu_custom_call.1} parent=59 // pred_fallthru
          _
        // Predicated region
        $region65: #{tpu_custom_call.1} parent=59 // pred_check
          %p370 = pneg %p177
        $region66: #{tpu_custom_call.1} parent=59 // pred_check_branch
          %372 = sbr.rel (%p370) target = $region68
        $region67: #{tpu_custom_call.1} parent=59 // pred_region
          %374 = dma.done [#allocation9], 512
        $region68: #{tpu_custom_call.1} parent=59 // pred_fallthru
          _
        // Predicated region
        $region69: #{tpu_custom_call.1} parent=59 // pred_check
          %p375 = pneg %p240
        $region70: #{tpu_custom_call.1} parent=59 // pred_check_branch
          %377 = sbr.rel (%p375) target = $region72
        $region71: #{tpu_custom_call.1} parent=59 // pred_region
          %379 = dma.done [#allocation9], 1024
        $region72: #{tpu_custom_call.1} parent=59 // pred_fallthru
          _
        %s380 = sand.u32 %s38, 1
        %s381 = scalar_lea.sflag [#allocation6], %s380
        %s382 = sand.u32 %s38, 1
        %s383 = smul.addr %s382, 2
        %s384 = scalar_lea.vmem [#allocation5], %s383
        %p385 = pneg %p51
        %p386 = pneg %p48
        %p387 = pneg %p72
        %p388 = pneg %p69
        %p389 = pneg %p93
        %p390 = pneg %p90
        %p391 = pneg %p114
        %p392 = pneg %p111
        %p393 = pneg %p135
        %p394 = pneg %p132
        %p395 = pneg %p156
        %p396 = pneg %p153
        %p397 = pneg %p177
        %p398 = pneg %p174
        %p399 = pneg %p198
        %p400 = pneg %p195
        %p401 = pneg %p219
        %p402 = pneg %p216
        %p403 = pneg %p240
        %p404 = pneg %p237
        %p405 = pneg %p266
        %p406 = pneg %p263
        %s407 = sand.u32 %s253, 1
        %s408 = scalar_lea.sflag [#allocation7], %s407
        %s409 = sand.u32 %s253, 1
        %s410 = smul.addr %s409, 2
        %s411 = scalar_lea.vmem [#allocation11], %s410
        %v412 = vld [vmem:[%s364] sm:$0x3]
        %v413 = vld [vmem:[%s1] sm:$0xff]
        %v414 = vld [vmem:[%s1 + $0x8] sm:$0xff]
        %v415 = vld [vmem:[%s1 + $0x10] sm:$0xff]
        %v416 = vld [vmem:[%s1 + $0x18] sm:$0xff]
        %v417 = vld [vmem:[%s1 + $0x20] sm:$0xff]
        %v418 = vld [vmem:[%s1 + $0x28] sm:$0xff]
        %v419 = vld [vmem:[%s1 + $0x30] sm:$0xff]
        %v420 = vld [vmem:[%s1 + $0x38] sm:$0xff]
        %v421 = vld [vmem:[%s1 + $0x40] sm:$0xff]
        %v422 = vld [vmem:[%s1 + $0x48] sm:$0xff]
        %v423 = vld [vmem:[%s1 + $0x50] sm:$0xff]
        %v424 = vld [vmem:[%s1 + $0x58] sm:$0xff]
        %v425 = vld [vmem:[%s1 + $0x60] sm:$0xff]
        %v426 = vld [vmem:[%s1 + $0x68] sm:$0xff]
        %v427 = vld [vmem:[%s1 + $0x70] sm:$0xff]
        %v428 = vld [vmem:[%s1 + $0x78] sm:$0xff]
        %v429 = vld [vmem:[%s1 + $0x80] sm:$0xff]
        %v430 = vld [vmem:[%s1 + $0x88] sm:$0xff]
        %v431 = vld [vmem:[%s1 + $0x90] sm:$0xff]
        %v432 = vld [vmem:[%s1 + $0x98] sm:$0xff]
        %v433 = vld [vmem:[%s1 + $0xa0] sm:$0xff]
        %v434 = vld [vmem:[%s1 + $0xa8] sm:$0xff]
        %v435 = vld [vmem:[%s1 + $0xb0] sm:$0xff]
        %v436 = vld [vmem:[%s1 + $0xb8] sm:$0xff]
        %v437 = vld [vmem:[%s1 + $0xc0] sm:$0xff]
        %v438 = vld [vmem:[%s1 + $0xc8] sm:$0xff]
        %v439 = vld [vmem:[%s1 + $0xd0] sm:$0xff]
        %v440 = vld [vmem:[%s1 + $0xd8] sm:$0xff]
        %v441 = vld [vmem:[%s1 + $0xe0] sm:$0xff]
        %v442 = vld [vmem:[%s1 + $0xe8] sm:$0xff]
        %v443 = vld [vmem:[%s1 + $0xf0] sm:$0xff]
        %v444 = vld [vmem:[%s1 + $0xf8] sm:$0xff]
        %v446 = vperm.slane %v412, 0
        %v447 = vperm.slane %v412, 1
        %450 = vmatpush.msra.mxu0 %v428
        %451 = vmatpush.msra.mxu0 %v427
        %452 = vmatpush.msra.mxu0 %v426
        %453 = vmatpush.msra.mxu0 %v425
        %454 = vmatpush.msra.mxu0 %v424
        %455 = vmatpush.msra.mxu0 %v423
        %456 = vmatpush.msra.mxu0 %v422
        %457 = vmatpush.msra.mxu0 %v421
        %458 = vmatpush.msra.mxu0 %v420
        %459 = vmatpush.msra.mxu0 %v419
        %460 = vmatpush.msra.mxu0 %v418
        %461 = vmatpush.msra.mxu0 %v417
        %462 = vmatpush.msra.mxu0 %v416
        %463 = vmatpush.msra.mxu0 %v415
        %464 = vmatpush.msra.mxu0 %v414
        %465 = vmatpush.msra.mxu0 %v413
        %466 = vmatmul.f32.gmra.mxu0 %v446
        %v467 = vpop.f32.mrf.mxu0
        %v468 = vadd.f32 0.0, %v467
        %469 = vdwg.mxu0
        %470 = vmatpush.msra.mxu0 %v444
        %471 = vmatpush.msra.mxu0 %v443
        %472 = vmatpush.msra.mxu0 %v442
        %473 = vmatpush.msra.mxu0 %v441
        %474 = vmatpush.msra.mxu0 %v440
        %475 = vmatpush.msra.mxu0 %v439
        %476 = vmatpush.msra.mxu0 %v438
        %477 = vmatpush.msra.mxu0 %v437
        %478 = vmatpush.msra.mxu0 %v436
        %479 = vmatpush.msra.mxu0 %v435
        %480 = vmatpush.msra.mxu0 %v434
        %481 = vmatpush.msra.mxu0 %v433
        %482 = vmatpush.msra.mxu0 %v432
        %483 = vmatpush.msra.mxu0 %v431
        %484 = vmatpush.msra.mxu0 %v430
        %485 = vmatpush.msra.mxu0 %v429
        %486 = vmatmul.f32.gmra.mxu0 %v447
        %v487 = vpop.f32.mrf.mxu0
        %v488 = vadd.f32 %v468, %v487
        %489 = vdwg.mxu0
        %v490 = vld [vmem:[%s2] sm:$0xff]
        %v491 = vld [vmem:[%s2 + $0x8] sm:$0xff]
        %vm492 = vcmask 64512
        %v494 = vsel %vm492, %v488, 0
        %496 = vmatpush.msra.mxu0 0.0
        %497 = vmatpush.msra.mxu0 0.0
        %498 = vmatpush.msra.mxu0 0.0
        %499 = vmatpush.msra.mxu0 0.0
        %500 = vmatpush.msra.mxu0 0.0
        %501 = vmatpush.msra.mxu0 0.0
        %502 = vmatpush.msra.mxu0 0.0
        %503 = vmatpush.msra.mxu0 0.0
        %504 = vmatpush.msra.mxu0 0.0
        %505 = vmatpush.msra.mxu0 0.0
        %506 = vmatpush.msra.mxu0 0.0
        %507 = vmatpush.msra.mxu0 0.0
        %508 = vmatpush.msra.mxu0 0.0
        %509 = vmatpush.msra.mxu0 0.0
        %510 = vmatpush.msra.mxu0 0.0
        %511 = vmatpush.msra.mxu0 %v490
        %512 = vmatmul.f32.gmra.mxu0 %v494
        %v513 = vpop.f32.mrf.mxu0
        %v514 = vadd.f32 0.0, %v513
        %515 = vdwg.mxu0
        %516 = vmatpush.msra.mxu0 0.0
        %517 = vmatpush.msra.mxu0 0.0
        %518 = vmatpush.msra.mxu0 0.0
        %519 = vmatpush.msra.mxu0 0.0
        %520 = vmatpush.msra.mxu0 0.0
        %521 = vmatpush.msra.mxu0 0.0
        %522 = vmatpush.msra.mxu0 0.0
        %523 = vmatpush.msra.mxu0 0.0
        %524 = vmatpush.msra.mxu0 0.0
        %525 = vmatpush.msra.mxu0 0.0
        %526 = vmatpush.msra.mxu0 0.0
        %527 = vmatpush.msra.mxu0 0.0
        %528 = vmatpush.msra.mxu0 0.0
        %529 = vmatpush.msra.mxu0 0.0
        %530 = vmatpush.msra.mxu0 0.0
        %531 = vmatpush.msra.mxu0 %v491
        %532 = vmatmul.f32.gmra.mxu0 %v494
        %v533 = vpop.f32.mrf.mxu0
        %v534 = vadd.f32 0.0, %v533
        %535 = vdwg.mxu0
        %v538 = vrot.slane %v534, 7
        %vm539 = vcmask 1040384
        %v540 = vsel %vm539, %v514, %v538
        %v542 = vlaneseq
        %vm543 = vcmp.ge.s32.totalorder %v542, 0
        %vm544 = vcmp.lt.s32.totalorder %v542, 256
        %vm545 = vmand %vm543, %vm544
        %546 = vst.msk [vmem:[#allocation2] sm:$0x3] %vm545, %v540
        %v547 = vld [vmem:[#allocation2] sm:$0x3]
        %v549 = vperm.slane %v547, 0
        %v550 = vperm.slane %v547, 1
        %553 = vrot.lane.b32.xlu0 %v549, 68
        %v554 = vpop.permute.xlu0 %553
        %555 = vrot.lane.b32.xlu0 %v550, 68
        %v556 = vpop.permute.xlu0 %555
        %v557 = vlaneseq
        %v558 = vand.u32 %v557, 127
        %vm559 = vcmp.lt.s32.totalorder %v558, 68
        %v560 = vsel %vm559, %v554, %v556
        %v561 = vsel %vm559, %v556, %v554
        %v562 = vld [vmem:[%s8] ss:$8 sm:$0x3]
        %v564 = vperm.slane %v562, 0
        %v565 = vperm.slane %v562, 1
        %v568 = vmul.f32 %v561, %v564
        %v569 = vmul.f32 %v560, %v565
        %v572 = vrot.slane %v569, 7
        %v573 = vsel %vm539, %v568, %v572
        %575 = vst.msk [vmem:[#allocation3] ss:$8 sm:$0x3] %vm545, %v573
        %576 = vst.msk [vmem:[#allocation3] ss:$8 sm:$0x0] %vm545, %v573
        %577 = vrot.lane.b32.xlu0 %v549, 67
        %v578 = vpop.permute.xlu0 %577
        %579 = vrot.lane.b32.xlu0 %v550, 67
        %v580 = vpop.permute.xlu0 %579
        %vm581 = vcmp.lt.s32.totalorder %v558, 67
        %v582 = vsel %vm581, %v578, %v580
        %v583 = vsel %vm581, %v580, %v578
        %s584 = scalar_lea.vmem %s8, 1
        %v585 = vld [vmem:[%s584] ss:$8 sm:$0x3]
        %v587 = vperm.slane %v585, 0
        %v588 = vperm.slane %v585, 1
        %v591 = vmul.f32 %v583, %v587
        %v592 = vmul.f32 %v582, %v588
        %v595 = vrot.slane %v592, 7
        %v596 = vsel %vm539, %v591, %v595
        %s598 = scalar_lea.vmem [#allocation3], 1
        %599 = vst.msk [vmem:[%s598] ss:$8 sm:$0x3] %vm545, %v596
        %600 = vst.msk [vmem:[%s598] ss:$8 sm:$0x0] %vm545, %v596
        %601 = vrot.lane.b32.xlu0 %v549, 66
        %v602 = vpop.permute.xlu0 %601
        %603 = vrot.lane.b32.xlu0 %v550, 66
        %v604 = vpop.permute.xlu0 %603
        %vm605 = vcmp.lt.s32.totalorder %v558, 66
        %v606 = vsel %vm605, %v602, %v604
        %v607 = vsel %vm605, %v604, %v602
        %s608 = scalar_lea.vmem %s8, 2
        %v609 = vld [vmem:[%s608] ss:$8 sm:$0x3]
        %v611 = vperm.slane %v609, 0
        %v612 = vperm.slane %v609, 1
        %v615 = vmul.f32 %v607, %v611
        %v616 = vmul.f32 %v606, %v612
        %v619 = vrot.slane %v616, 7
        %v620 = vsel %vm539, %v615, %v619
        %s622 = scalar_lea.vmem [#allocation3], 2
        %623 = vst.msk [vmem:[%s622] ss:$8 sm:$0x3] %vm545, %v620
        %624 = vst.msk [vmem:[%s622] ss:$8 sm:$0x0] %vm545, %v620
        %625 = vrot.lane.b32.xlu0 %v549, 65
        %v626 = vpop.permute.xlu0 %625
        %627 = vrot.lane.b32.xlu0 %v550, 65
        %v628 = vpop.permute.xlu0 %627
        %vm629 = vcmp.lt.s32.totalorder %v558, 65
        %v630 = vsel %vm629, %v626, %v628
        %v631 = vsel %vm629, %v628, %v626
        %s632 = scalar_lea.vmem %s8, 3
        %v633 = vld [vmem:[%s632] ss:$8 sm:$0x3]
        %v635 = vperm.slane %v633, 0
        %v636 = vperm.slane %v633, 1
        %v639 = vmul.f32 %v631, %v635
        %v640 = vmul.f32 %v630, %v636
        %v643 = vrot.slane %v640, 7
        %v644 = vsel %vm539, %v639, %v643
        %s646 = scalar_lea.vmem [#allocation3], 3
        %647 = vst.msk [vmem:[%s646] ss:$8 sm:$0x3] %vm545, %v644
        %648 = vst.msk [vmem:[%s646] ss:$8 sm:$0x0] %vm545, %v644
        %649 = vrot.lane.b32.xlu0 %v549, 64
        %v650 = vpop.permute.xlu0 %649
        %651 = vrot.lane.b32.xlu0 %v550, 64
        %v652 = vpop.permute.xlu0 %651
        %vm653 = vcmp.lt.s32.totalorder %v558, 64
        %v654 = vsel %vm653, %v650, %v652
        %v655 = vsel %vm653, %v652, %v650
        %s656 = scalar_lea.vmem %s8, 4
        %v657 = vld [vmem:[%s656] ss:$8 sm:$0x3]
        %v659 = vperm.slane %v657, 0
        %v660 = vperm.slane %v657, 1
        %v663 = vmul.f32 %v655, %v659
        %v664 = vmul.f32 %v654, %v660
        %v667 = vrot.slane %v664, 7
        %v668 = vsel %vm539, %v663, %v667
        %s670 = scalar_lea.vmem [#allocation3], 4
        %671 = vst.msk [vmem:[%s670] ss:$8 sm:$0x3] %vm545, %v668
        %672 = vst.msk [vmem:[%s670] ss:$8 sm:$0x0] %vm545, %v668
        %673 = vrot.lane.b32.xlu0 %v549, 63
        %v674 = vpop.permute.xlu0 %673
        %675 = vrot.lane.b32.xlu0 %v550, 63
        %v676 = vpop.permute.xlu0 %675
        %vm677 = vcmp.lt.s32.totalorder %v558, 63
        %v678 = vsel %vm677, %v674, %v676
        %v679 = vsel %vm677, %v676, %v674
        %s680 = scalar_lea.vmem %s8, 5
        %v681 = vld [vmem:[%s680] ss:$8 sm:$0x3]
        %v683 = vperm.slane %v681, 0
        %v684 = vperm.slane %v681, 1
        %v687 = vmul.f32 %v679, %v683
        %v688 = vmul.f32 %v678, %v684
        %v691 = vrot.slane %v688, 7
        %v692 = vsel %vm539, %v687, %v691
        %s694 = scalar_lea.vmem [#allocation3], 5
        %695 = vst.msk [vmem:[%s694] ss:$8 sm:$0x3] %vm545, %v692
        %696 = vst.msk [vmem:[%s694] ss:$8 sm:$0x0] %vm545, %v692
        %697 = vrot.lane.b32.xlu0 %v549, 62
        %v698 = vpop.permute.xlu0 %697
        %699 = vrot.lane.b32.xlu0 %v550, 62
        %v700 = vpop.permute.xlu0 %699
        %vm701 = vcmp.lt.s32.totalorder %v558, 62
        %v702 = vsel %vm701, %v698, %v700
        %v703 = vsel %vm701, %v700, %v698
        %s704 = scalar_lea.vmem %s8, 6
        %v705 = vld [vmem:[%s704] ss:$8 sm:$0x3]
        %v707 = vperm.slane %v705, 0
        %v708 = vperm.slane %v705, 1
        %v711 = vmul.f32 %v703, %v707
        %v712 = vmul.f32 %v702, %v708
        %v715 = vrot.slane %v712, 7
        %v716 = vsel %vm539, %v711, %v715
        %s718 = scalar_lea.vmem [#allocation3], 6
        %719 = vst.msk [vmem:[%s718] ss:$8 sm:$0x3] %vm545, %v716
        %720 = vst.msk [vmem:[%s718] ss:$8 sm:$0x0] %vm545, %v716
        %721 = vrot.lane.b32.xlu0 %v549, 61
        %v722 = vpop.permute.xlu0 %721
        %723 = vrot.lane.b32.xlu0 %v550, 61
        %v724 = vpop.permute.xlu0 %723
        %vm725 = vcmp.lt.s32.totalorder %v558, 61
        %v726 = vsel %vm725, %v722, %v724
        %v727 = vsel %vm725, %v724, %v722
        %s728 = scalar_lea.vmem %s8, 7
        %v729 = vld [vmem:[%s728] ss:$8 sm:$0x3]
        %v731 = vperm.slane %v729, 0
        %v732 = vperm.slane %v729, 1
        %v735 = vmul.f32 %v727, %v731
        %v736 = vmul.f32 %v726, %v732
        %v739 = vrot.slane %v736, 7
        %v740 = vsel %vm539, %v735, %v739
        %s742 = scalar_lea.vmem [#allocation3], 7
        %743 = vst.msk [vmem:[%s742] ss:$8 sm:$0x3] %vm545, %v740
        %744 = vst.msk [vmem:[%s742] ss:$8 sm:$0x0] %vm545, %v740
        %745 = vrot.lane.b32.xlu0 %v549, 60
        %v746 = vpop.permute.xlu0 %745
        %747 = vrot.lane.b32.xlu0 %v550, 60
        %v748 = vpop.permute.xlu0 %747
        %vm749 = vcmp.lt.s32.totalorder %v558, 60
        %v750 = vsel %vm749, %v746, %v748
        %v751 = vsel %vm749, %v748, %v746
        %s752 = scalar_lea.vmem %s8, 16
        %v753 = vld [vmem:[%s752] ss:$8 sm:$0x3]
        %v755 = vperm.slane %v753, 0
        %v756 = vperm.slane %v753, 1
        %v759 = vmul.f32 %v751, %v755
        %v760 = vmul.f32 %v750, %v756
        %v763 = vrot.slane %v760, 7
        %v764 = vsel %vm539, %v759, %v763
        %s766 = scalar_lea.vmem [#allocation3], 16
        %767 = vst.msk [vmem:[%s766] ss:$8 sm:$0x3] %vm545, %v764
        %768 = vst.msk [vmem:[%s766] ss:$8 sm:$0x0] %vm545, %v764
        %769 = vrot.lane.b32.xlu0 %v549, 52
        %v770 = vpop.permute.xlu0 %769
        %771 = vrot.lane.b32.xlu0 %v550, 52
        %v772 = vpop.permute.xlu0 %771
        %vm773 = vcmp.lt.s32.totalorder %v558, 52
        %v774 = vsel %vm773, %v770, %v772
        %v775 = vsel %vm773, %v772, %v770
        %s776 = scalar_lea.vmem %s8, 17
        %v777 = vld [vmem:[%s776] ss:$8 sm:$0x3]
        %v779 = vperm.slane %v777, 0
        %v780 = vperm.slane %v777, 1
        %v783 = vmul.f32 %v775, %v779
        %v784 = vmul.f32 %v774, %v780
        %v787 = vrot.slane %v784, 7
        %v788 = vsel %vm539, %v783, %v787
        %s790 = scalar_lea.vmem [#allocation3], 17
        %791 = vst.msk [vmem:[%s790] ss:$8 sm:$0x3] %vm545, %v788
        %792 = vst.msk [vmem:[%s790] ss:$8 sm:$0x0] %vm545, %v788
        %793 = vrot.lane.b32.xlu0 %v549, 51
        %v794 = vpop.permute.xlu0 %793
        %795 = vrot.lane.b32.xlu0 %v550, 51
        %v796 = vpop.permute.xlu0 %795
        %vm797 = vcmp.lt.s32.totalorder %v558, 51
        %v798 = vsel %vm797, %v794, %v796
        %v799 = vsel %vm797, %v796, %v794
        %s800 = scalar_lea.vmem %s8, 18
        %v801 = vld [vmem:[%s800] ss:$8 sm:$0x3]
        %v803 = vperm.slane %v801, 0
        %v804 = vperm.slane %v801, 1
        %v807 = vmul.f32 %v799, %v803
        %v808 = vmul.f32 %v798, %v804
        %v811 = vrot.slane %v808, 7
        %v812 = vsel %vm539, %v807, %v811
        %s814 = scalar_lea.vmem [#allocation3], 18
        %815 = vst.msk [vmem:[%s814] ss:$8 sm:$0x3] %vm545, %v812
        %816 = vst.msk [vmem:[%s814] ss:$8 sm:$0x0] %vm545, %v812
        %817 = vrot.lane.b32.xlu0 %v549, 50
        %v818 = vpop.permute.xlu0 %817
        %819 = vrot.lane.b32.xlu0 %v550, 50
        %v820 = vpop.permute.xlu0 %819
        %vm821 = vcmp.lt.s32.totalorder %v558, 50
        %v822 = vsel %vm821, %v818, %v820
        %v823 = vsel %vm821, %v820, %v818
        %s824 = scalar_lea.vmem %s8, 19
        %v825 = vld [vmem:[%s824] ss:$8 sm:$0x3]
        %v827 = vperm.slane %v825, 0
        %v828 = vperm.slane %v825, 1
        %v831 = vmul.f32 %v823, %v827
        %v832 = vmul.f32 %v822, %v828
        %v835 = vrot.slane %v832, 7
        %v836 = vsel %vm539, %v831, %v835
        %s838 = scalar_lea.vmem [#allocation3], 19
        %839 = vst.msk [vmem:[%s838] ss:$8 sm:$0x3] %vm545, %v836
        %840 = vst.msk [vmem:[%s838] ss:$8 sm:$0x0] %vm545, %v836
        %841 = vrot.lane.b32.xlu0 %v549, 49
        %v842 = vpop.permute.xlu0 %841
        %843 = vrot.lane.b32.xlu0 %v550, 49
        %v844 = vpop.permute.xlu0 %843
        %vm845 = vcmp.lt.s32.totalorder %v558, 49
        %v846 = vsel %vm845, %v842, %v844
        %v847 = vsel %vm845, %v844, %v842
        %s848 = scalar_lea.vmem %s8, 20
        %v849 = vld [vmem:[%s848] ss:$8 sm:$0x3]
        %v851 = vperm.slane %v849, 0
        %v852 = vperm.slane %v849, 1
        %v855 = vmul.f32 %v847, %v851
        %v856 = vmul.f32 %v846, %v852
        %v859 = vrot.slane %v856, 7
        %v860 = vsel %vm539, %v855, %v859
        %s862 = scalar_lea.vmem [#allocation3], 20
        %863 = vst.msk [vmem:[%s862] ss:$8 sm:$0x3] %vm545, %v860
        %864 = vst.msk [vmem:[%s862] ss:$8 sm:$0x0] %vm545, %v860
        %865 = vrot.lane.b32.xlu0 %v549, 48
        %v866 = vpop.permute.xlu0 %865
        %867 = vrot.lane.b32.xlu0 %v550, 48
        %v868 = vpop.permute.xlu0 %867
        %vm869 = vcmp.lt.s32.totalorder %v558, 48
        %v870 = vsel %vm869, %v866, %v868
        %v871 = vsel %vm869, %v868, %v866
        %s872 = scalar_lea.vmem %s8, 21
        %v873 = vld [vmem:[%s872] ss:$8 sm:$0x3]
        %v875 = vperm.slane %v873, 0
        %v876 = vperm.slane %v873, 1
        %v879 = vmul.f32 %v871, %v875
        %v880 = vmul.f32 %v870, %v876
        %v883 = vrot.slane %v880, 7
        %v884 = vsel %vm539, %v879, %v883
        %s886 = scalar_lea.vmem [#allocation3], 21
        %887 = vst.msk [vmem:[%s886] ss:$8 sm:$0x3] %vm545, %v884
        %888 = vst.msk [vmem:[%s886] ss:$8 sm:$0x0] %vm545, %v884
        %889 = vrot.lane.b32.xlu0 %v549, 47
        %v890 = vpop.permute.xlu0 %889
        %891 = vrot.lane.b32.xlu0 %v550, 47
        %v892 = vpop.permute.xlu0 %891
        %vm893 = vcmp.lt.s32.totalorder %v558, 47
        %v894 = vsel %vm893, %v890, %v892
        %v895 = vsel %vm893, %v892, %v890
        %s896 = scalar_lea.vmem %s8, 22
        %v897 = vld [vmem:[%s896] ss:$8 sm:$0x3]
        %v899 = vperm.slane %v897, 0
        %v900 = vperm.slane %v897, 1
        %v903 = vmul.f32 %v895, %v899
        %v904 = vmul.f32 %v894, %v900
        %v907 = vrot.slane %v904, 7
        %v908 = vsel %vm539, %v903, %v907
        %s910 = scalar_lea.vmem [#allocation3], 22
        %911 = vst.msk [vmem:[%s910] ss:$8 sm:$0x3] %vm545, %v908
        %912 = vst.msk [vmem:[%s910] ss:$8 sm:$0x0] %vm545, %v908
        %913 = vrot.lane.b32.xlu0 %v549, 46
        %v914 = vpop.permute.xlu0 %913
        %915 = vrot.lane.b32.xlu0 %v550, 46
        %v916 = vpop.permute.xlu0 %915
        %vm917 = vcmp.lt.s32.totalorder %v558, 46
        %v918 = vsel %vm917, %v914, %v916
        %v919 = vsel %vm917, %v916, %v914
        %s920 = scalar_lea.vmem %s8, 23
        %v921 = vld [vmem:[%s920] ss:$8 sm:$0x3]
        %v923 = vperm.slane %v921, 0
        %v924 = vperm.slane %v921, 1
        %v927 = vmul.f32 %v919, %v923
        %v928 = vmul.f32 %v918, %v924
        %v931 = vrot.slane %v928, 7
        %v932 = vsel %vm539, %v927, %v931
        %s934 = scalar_lea.vmem [#allocation3], 23
        %935 = vst.msk [vmem:[%s934] ss:$8 sm:$0x3] %vm545, %v932
        %936 = vst.msk [vmem:[%s934] ss:$8 sm:$0x0] %vm545, %v932
        %937 = vrot.lane.b32.xlu0 %v549, 45
        %v938 = vpop.permute.xlu0 %937
        %939 = vrot.lane.b32.xlu0 %v550, 45
        %v940 = vpop.permute.xlu0 %939
        %vm941 = vcmp.lt.s32.totalorder %v558, 45
        %v942 = vsel %vm941, %v938, %v940
        %v943 = vsel %vm941, %v940, %v938
        %s944 = scalar_lea.vmem %s8, 32
        %v945 = vld [vmem:[%s944] ss:$8 sm:$0x3]
        %v947 = vperm.slane %v945, 0
        %v948 = vperm.slane %v945, 1
        %v951 = vmul.f32 %v943, %v947
        %v952 = vmul.f32 %v942, %v948
        %v955 = vrot.slane %v952, 7
        %v956 = vsel %vm539, %v951, %v955
        %s958 = scalar_lea.vmem [#allocation3], 32
        %959 = vst.msk [vmem:[%s958] ss:$8 sm:$0x3] %vm545, %v956
        %960 = vst.msk [vmem:[%s958] ss:$8 sm:$0x0] %vm545, %v956
        %961 = vrot.lane.b32.xlu0 %v549, 44
        %v962 = vpop.permute.xlu0 %961
        %963 = vrot.lane.b32.xlu0 %v550, 44
        %v964 = vpop.permute.xlu0 %963
        %vm965 = vcmp.lt.s32.totalorder %v558, 44
        %v966 = vsel %vm965, %v962, %v964
        %v967 = vsel %vm965, %v964, %v962
        %s968 = scalar_lea.vmem %s8, 33
        %v969 = vld [vmem:[%s968] ss:$8 sm:$0x3]
        %v971 = vperm.slane %v969, 0
        %v972 = vperm.slane %v969, 1
        %v975 = vmul.f32 %v967, %v971
        %v976 = vmul.f32 %v966, %v972
        %v979 = vrot.slane %v976, 7
        %v980 = vsel %vm539, %v975, %v979
        %s982 = scalar_lea.vmem [#allocation3], 33
        %983 = vst.msk [vmem:[%s982] ss:$8 sm:$0x3] %vm545, %v980
        %984 = vst.msk [vmem:[%s982] ss:$8 sm:$0x0] %vm545, %v980
        %985 = vrot.lane.b32.xlu0 %v549, 36
        %v986 = vpop.permute.xlu0 %985
        %987 = vrot.lane.b32.xlu0 %v550, 36
        %v988 = vpop.permute.xlu0 %987
        %vm989 = vcmp.lt.s32.totalorder %v558, 36
        %v990 = vsel %vm989, %v986, %v988
        %v991 = vsel %vm989, %v988, %v986
        %s992 = scalar_lea.vmem %s8, 34
        %v993 = vld [vmem:[%s992] ss:$8 sm:$0x3]
        %v995 = vperm.slane %v993, 0
        %v996 = vperm.slane %v993, 1
        %v999 = vmul.f32 %v991, %v995
        %v1000 = vmul.f32 %v990, %v996
        %v1003 = vrot.slane %v1000, 7
        %v1004 = vsel %vm539, %v999, %v1003
        %s1006 = scalar_lea.vmem [#allocation3], 34
        %1007 = vst.msk [vmem:[%s1006] ss:$8 sm:$0x3] %vm545, %v1004
        %1008 = vst.msk [vmem:[%s1006] ss:$8 sm:$0x0] %vm545, %v1004
        %1009 = vrot.lane.b32.xlu0 %v549, 35
        %v1010 = vpop.permute.xlu0 %1009
        %1011 = vrot.lane.b32.xlu0 %v550, 35
        %v1012 = vpop.permute.xlu0 %1011
        %vm1013 = vcmp.lt.s32.totalorder %v558, 35
        %v1014 = vsel %vm1013, %v1010, %v1012
        %v1015 = vsel %vm1013, %v1012, %v1010
        %s1016 = scalar_lea.vmem %s8, 35
        %v1017 = vld [vmem:[%s1016] ss:$8 sm:$0x3]
        %v1019 = vperm.slane %v1017, 0
        %v1020 = vperm.slane %v1017, 1
        %v1023 = vmul.f32 %v1015, %v1019
        %v1024 = vmul.f32 %v1014, %v1020
        %v1027 = vrot.slane %v1024, 7
        %v1028 = vsel %vm539, %v1023, %v1027
        %s1030 = scalar_lea.vmem [#allocation3], 35
        %1031 = vst.msk [vmem:[%s1030] ss:$8 sm:$0x3] %vm545, %v1028
        %1032 = vst.msk [vmem:[%s1030] ss:$8 sm:$0x0] %vm545, %v1028
        %1033 = vrot.lane.b32.xlu0 %v549, 34
        %v1034 = vpop.permute.xlu0 %1033
        %1035 = vrot.lane.b32.xlu0 %v550, 34
        %v1036 = vpop.permute.xlu0 %1035
        %vm1037 = vcmp.lt.s32.totalorder %v558, 34
        %v1038 = vsel %vm1037, %v1034, %v1036
        %v1039 = vsel %vm1037, %v1036, %v1034
        %s1040 = scalar_lea.vmem %s8, 36
        %v1041 = vld [vmem:[%s1040] ss:$8 sm:$0x3]
        %v1043 = vperm.slane %v1041, 0
        %v1044 = vperm.slane %v1041, 1
        %v1047 = vmul.f32 %v1039, %v1043
        %v1048 = vmul.f32 %v1038, %v1044
        %v1051 = vrot.slane %v1048, 7
        %v1052 = vsel %vm539, %v1047, %v1051
        %s1054 = scalar_lea.vmem [#allocation3], 36
        %1055 = vst.msk [vmem:[%s1054] ss:$8 sm:$0x3] %vm545, %v1052
        %1056 = vst.msk [vmem:[%s1054] ss:$8 sm:$0x0] %vm545, %v1052
        %1057 = vrot.lane.b32.xlu0 %v549, 33
        %v1058 = vpop.permute.xlu0 %1057
        %1059 = vrot.lane.b32.xlu0 %v550, 33
        %v1060 = vpop.permute.xlu0 %1059
        %vm1061 = vcmp.lt.s32.totalorder %v558, 33
        %v1062 = vsel %vm1061, %v1058, %v1060
        %v1063 = vsel %vm1061, %v1060, %v1058
        %s1064 = scalar_lea.vmem %s8, 37
        %v1065 = vld [vmem:[%s1064] ss:$8 sm:$0x3]
        %v1067 = vperm.slane %v1065, 0
        %v1068 = vperm.slane %v1065, 1
        %v1071 = vmul.f32 %v1063, %v1067
        %v1072 = vmul.f32 %v1062, %v1068
        %v1075 = vrot.slane %v1072, 7
        %v1076 = vsel %vm539, %v1071, %v1075
        %s1078 = scalar_lea.vmem [#allocation3], 37
        %1079 = vst.msk [vmem:[%s1078] ss:$8 sm:$0x3] %vm545, %v1076
        %1080 = vst.msk [vmem:[%s1078] ss:$8 sm:$0x0] %vm545, %v1076
        %1081 = vrot.lane.b32.xlu0 %v549, 32
        %v1082 = vpop.permute.xlu0 %1081
        %1083 = vrot.lane.b32.xlu0 %v550, 32
        %v1084 = vpop.permute.xlu0 %1083
        %vm1085 = vcmp.lt.s32.totalorder %v558, 32
        %v1086 = vsel %vm1085, %v1082, %v1084
        %v1087 = vsel %vm1085, %v1084, %v1082
        %s1088 = scalar_lea.vmem %s8, 38
        %v1089 = vld [vmem:[%s1088] ss:$8 sm:$0x3]
        %v1091 = vperm.slane %v1089, 0
        %v1092 = vperm.slane %v1089, 1
        %v1095 = vmul.f32 %v1087, %v1091
        %v1096 = vmul.f32 %v1086, %v1092
        %v1099 = vrot.slane %v1096, 7
        %v1100 = vsel %vm539, %v1095, %v1099
        %s1102 = scalar_lea.vmem [#allocation3], 38
        %1103 = vst.msk [vmem:[%s1102] ss:$8 sm:$0x3] %vm545, %v1100
        %1104 = vst.msk [vmem:[%s1102] ss:$8 sm:$0x0] %vm545, %v1100
        %1105 = vrot.lane.b32.xlu0 %v549, 31
        %v1106 = vpop.permute.xlu0 %1105
        %1107 = vrot.lane.b32.xlu0 %v550, 31
        %v1108 = vpop.permute.xlu0 %1107
        %vm1109 = vcmp.lt.s32.totalorder %v558, 31
        %v1110 = vsel %vm1109, %v1106, %v1108
        %v1111 = vsel %vm1109, %v1108, %v1106
        %s1112 = scalar_lea.vmem %s8, 39
        %v1113 = vld [vmem:[%s1112] ss:$8 sm:$0x3]
        %v1115 = vperm.slane %v1113, 0
        %v1116 = vperm.slane %v1113, 1
        %v1119 = vmul.f32 %v1111, %v1115
        %v1120 = vmul.f32 %v1110, %v1116
        %v1123 = vrot.slane %v1120, 7
        %v1124 = vsel %vm539, %v1119, %v1123
        %s1126 = scalar_lea.vmem [#allocation3], 39
        %1127 = vst.msk [vmem:[%s1126] ss:$8 sm:$0x3] %vm545, %v1124
        %1128 = vst.msk [vmem:[%s1126] ss:$8 sm:$0x0] %vm545, %v1124
        %1129 = vrot.lane.b32.xlu0 %v549, 30
        %v1130 = vpop.permute.xlu0 %1129
        %1131 = vrot.lane.b32.xlu0 %v550, 30
        %v1132 = vpop.permute.xlu0 %1131
        %vm1133 = vcmp.lt.s32.totalorder %v558, 30
        %v1134 = vsel %vm1133, %v1130, %v1132
        %v1135 = vsel %vm1133, %v1132, %v1130
        %s1136 = scalar_lea.vmem %s8, 48
        %v1137 = vld [vmem:[%s1136] ss:$8 sm:$0x3]
        %v1139 = vperm.slane %v1137, 0
        %v1140 = vperm.slane %v1137, 1
        %v1143 = vmul.f32 %v1135, %v1139
        %v1144 = vmul.f32 %v1134, %v1140
        %v1147 = vrot.slane %v1144, 7
        %v1148 = vsel %vm539, %v1143, %v1147
        %s1150 = scalar_lea.vmem [#allocation3], 48
        %1151 = vst.msk [vmem:[%s1150] ss:$8 sm:$0x3] %vm545, %v1148
        %1152 = vst.msk [vmem:[%s1150] ss:$8 sm:$0x0] %vm545, %v1148
        %1153 = vrot.lane.b32.xlu0 %v549, 29
        %v1154 = vpop.permute.xlu0 %1153
        %1155 = vrot.lane.b32.xlu0 %v550, 29
        %v1156 = vpop.permute.xlu0 %1155
        %vm1157 = vcmp.lt.s32.totalorder %v558, 29
        %v1158 = vsel %vm1157, %v1154, %v1156
        %v1159 = vsel %vm1157, %v1156, %v1154
        %s1160 = scalar_lea.vmem %s8, 49
        %v1161 = vld [vmem:[%s1160] ss:$8 sm:$0x3]
        %v1163 = vperm.slane %v1161, 0
        %v1164 = vperm.slane %v1161, 1
        %v1167 = vmul.f32 %v1159, %v1163
        %v1168 = vmul.f32 %v1158, %v1164
        %v1171 = vrot.slane %v1168, 7
        %v1172 = vsel %vm539, %v1167, %v1171
        %s1174 = scalar_lea.vmem [#allocation3], 49
        %1175 = vst.msk [vmem:[%s1174] ss:$8 sm:$0x3] %vm545, %v1172
        %1176 = vst.msk [vmem:[%s1174] ss:$8 sm:$0x0] %vm545, %v1172
        %1177 = vrot.lane.b32.xlu0 %v549, 28
        %v1178 = vpop.permute.xlu0 %1177
        %1179 = vrot.lane.b32.xlu0 %v550, 28
        %v1180 = vpop.permute.xlu0 %1179
        %vm1181 = vcmp.lt.s32.totalorder %v558, 28
        %v1182 = vsel %vm1181, %v1178, %v1180
        %v1183 = vsel %vm1181, %v1180, %v1178
        %s1184 = scalar_lea.vmem %s8, 50
        %v1185 = vld [vmem:[%s1184] ss:$8 sm:$0x3]
        %v1187 = vperm.slane %v1185, 0
        %v1188 = vperm.slane %v1185, 1
        %v1191 = vmul.f32 %v1183, %v1187
        %v1192 = vmul.f32 %v1182, %v1188
        %v1195 = vrot.slane %v1192, 7
        %v1196 = vsel %vm539, %v1191, %v1195
        %s1198 = scalar_lea.vmem [#allocation3], 50
        %1199 = vst.msk [vmem:[%s1198] ss:$8 sm:$0x3] %vm545, %v1196
        %1200 = vst.msk [vmem:[%s1198] ss:$8 sm:$0x0] %vm545, %v1196
        %1201 = vrot.lane.b32.xlu0 %v549, 20
        %v1202 = vpop.permute.xlu0 %1201
        %1203 = vrot.lane.b32.xlu0 %v550, 20
        %v1204 = vpop.permute.xlu0 %1203
        %vm1205 = vcmp.lt.s32.totalorder %v558, 20
        %v1206 = vsel %vm1205, %v1202, %v1204
        %v1207 = vsel %vm1205, %v1204, %v1202
        %s1208 = scalar_lea.vmem %s8, 51
        %v1209 = vld [vmem:[%s1208] ss:$8 sm:$0x3]
        %v1211 = vperm.slane %v1209, 0
        %v1212 = vperm.slane %v1209, 1
        %v1215 = vmul.f32 %v1207, %v1211
        %v1216 = vmul.f32 %v1206, %v1212
        %v1219 = vrot.slane %v1216, 7
        %v1220 = vsel %vm539, %v1215, %v1219
        %s1222 = scalar_lea.vmem [#allocation3], 51
        %1223 = vst.msk [vmem:[%s1222] ss:$8 sm:$0x3] %vm545, %v1220
        %1224 = vst.msk [vmem:[%s1222] ss:$8 sm:$0x0] %vm545, %v1220
        %1225 = vrot.lane.b32.xlu0 %v549, 19
        %v1226 = vpop.permute.xlu0 %1225
        %1227 = vrot.lane.b32.xlu0 %v550, 19
        %v1228 = vpop.permute.xlu0 %1227
        %vm1229 = vcmp.lt.s32.totalorder %v558, 19
        %v1230 = vsel %vm1229, %v1226, %v1228
        %v1231 = vsel %vm1229, %v1228, %v1226
        %s1232 = scalar_lea.vmem %s8, 52
        %v1233 = vld [vmem:[%s1232] ss:$8 sm:$0x3]
        %v1235 = vperm.slane %v1233, 0
        %v1236 = vperm.slane %v1233, 1
        %v1239 = vmul.f32 %v1231, %v1235
        %v1240 = vmul.f32 %v1230, %v1236
        %v1243 = vrot.slane %v1240, 7
        %v1244 = vsel %vm539, %v1239, %v1243
        %s1246 = scalar_lea.vmem [#allocation3], 52
        %1247 = vst.msk [vmem:[%s1246] ss:$8 sm:$0x3] %vm545, %v1244
        %1248 = vst.msk [vmem:[%s1246] ss:$8 sm:$0x0] %vm545, %v1244
        %1249 = vrot.lane.b32.xlu0 %v549, 18
        %v1250 = vpop.permute.xlu0 %1249
        %1251 = vrot.lane.b32.xlu0 %v550, 18
        %v1252 = vpop.permute.xlu0 %1251
        %vm1253 = vcmp.lt.s32.totalorder %v558, 18
        %v1254 = vsel %vm1253, %v1250, %v1252
        %v1255 = vsel %vm1253, %v1252, %v1250
        %s1256 = scalar_lea.vmem %s8, 53
        %v1257 = vld [vmem:[%s1256] ss:$8 sm:$0x3]
        %v1259 = vperm.slane %v1257, 0
        %v1260 = vperm.slane %v1257, 1
        %v1263 = vmul.f32 %v1255, %v1259
        %v1264 = vmul.f32 %v1254, %v1260
        %v1267 = vrot.slane %v1264, 7
        %v1268 = vsel %vm539, %v1263, %v1267
        %s1270 = scalar_lea.vmem [#allocation3], 53
        %1271 = vst.msk [vmem:[%s1270] ss:$8 sm:$0x3] %vm545, %v1268
        %1272 = vst.msk [vmem:[%s1270] ss:$8 sm:$0x0] %vm545, %v1268
        %1273 = vrot.lane.b32.xlu0 %v549, 17
        %v1274 = vpop.permute.xlu0 %1273
        %1275 = vrot.lane.b32.xlu0 %v550, 17
        %v1276 = vpop.permute.xlu0 %1275
        %vm1277 = vcmp.lt.s32.totalorder %v558, 17
        %v1278 = vsel %vm1277, %v1274, %v1276
        %v1279 = vsel %vm1277, %v1276, %v1274
        %s1280 = scalar_lea.vmem %s8, 54
        %v1281 = vld [vmem:[%s1280] ss:$8 sm:$0x3]
        %v1283 = vperm.slane %v1281, 0
        %v1284 = vperm.slane %v1281, 1
        %v1287 = vmul.f32 %v1279, %v1283
        %v1288 = vmul.f32 %v1278, %v1284
        %v1291 = vrot.slane %v1288, 7
        %v1292 = vsel %vm539, %v1287, %v1291
        %s1294 = scalar_lea.vmem [#allocation3], 54
        %1295 = vst.msk [vmem:[%s1294] ss:$8 sm:$0x3] %vm545, %v1292
        %1296 = vst.msk [vmem:[%s1294] ss:$8 sm:$0x0] %vm545, %v1292
        %1297 = vrot.lane.b32.xlu0 %v549, 16
        %v1298 = vpop.permute.xlu0 %1297
        %1299 = vrot.lane.b32.xlu0 %v550, 16
        %v1300 = vpop.permute.xlu0 %1299
        %vm1301 = vcmp.lt.s32.totalorder %v558, 16
        %v1302 = vsel %vm1301, %v1298, %v1300
        %v1303 = vsel %vm1301, %v1300, %v1298
        %s1304 = scalar_lea.vmem %s8, 55
        %v1305 = vld [vmem:[%s1304] ss:$8 sm:$0x3]
        %v1307 = vperm.slane %v1305, 0
        %v1308 = vperm.slane %v1305, 1
        %v1311 = vmul.f32 %v1303, %v1307
        %v1312 = vmul.f32 %v1302, %v1308
        %v1315 = vrot.slane %v1312, 7
        %v1316 = vsel %vm539, %v1311, %v1315
        %s1318 = scalar_lea.vmem [#allocation3], 55
        %1319 = vst.msk [vmem:[%s1318] ss:$8 sm:$0x3] %vm545, %v1316
        %1320 = vst.msk [vmem:[%s1318] ss:$8 sm:$0x0] %vm545, %v1316
        %1321 = vrot.lane.b32.xlu0 %v549, 15
        %v1322 = vpop.permute.xlu0 %1321
        %1323 = vrot.lane.b32.xlu0 %v550, 15
        %v1324 = vpop.permute.xlu0 %1323
        %vm1325 = vcmp.lt.s32.totalorder %v558, 15
        %v1326 = vsel %vm1325, %v1322, %v1324
        %v1327 = vsel %vm1325, %v1324, %v1322
        %s1328 = scalar_lea.vmem %s8, 64
        %v1329 = vld [vmem:[%s1328] ss:$8 sm:$0x3]
        %v1331 = vperm.slane %v1329, 0
        %v1332 = vperm.slane %v1329, 1
        %v1335 = vmul.f32 %v1327, %v1331
        %v1336 = vmul.f32 %v1326, %v1332
        %v1339 = vrot.slane %v1336, 7
        %v1340 = vsel %vm539, %v1335, %v1339
        %s1342 = scalar_lea.vmem [#allocation3], 64
        %1343 = vst.msk [vmem:[%s1342] ss:$8 sm:$0x3] %vm545, %v1340
        %1344 = vst.msk [vmem:[%s1342] ss:$8 sm:$0x0] %vm545, %v1340
        %1345 = vrot.lane.b32.xlu0 %v549, 14
        %v1346 = vpop.permute.xlu0 %1345
        %1347 = vrot.lane.b32.xlu0 %v550, 14
        %v1348 = vpop.permute.xlu0 %1347
        %vm1349 = vcmp.lt.s32.totalorder %v558, 14
        %v1350 = vsel %vm1349, %v1346, %v1348
        %v1351 = vsel %vm1349, %v1348, %v1346
        %s1352 = scalar_lea.vmem %s8, 65
        %v1353 = vld [vmem:[%s1352] ss:$8 sm:$0x3]
        %v1355 = vperm.slane %v1353, 0
        %v1356 = vperm.slane %v1353, 1
        %v1359 = vmul.f32 %v1351, %v1355
        %v1360 = vmul.f32 %v1350, %v1356
        %v1363 = vrot.slane %v1360, 7
        %v1364 = vsel %vm539, %v1359, %v1363
        %s1366 = scalar_lea.vmem [#allocation3], 65
        %1367 = vst.msk [vmem:[%s1366] ss:$8 sm:$0x3] %vm545, %v1364
        %1368 = vst.msk [vmem:[%s1366] ss:$8 sm:$0x0] %vm545, %v1364
        %1369 = vrot.lane.b32.xlu0 %v549, 13
        %v1370 = vpop.permute.xlu0 %1369
        %1371 = vrot.lane.b32.xlu0 %v550, 13
        %v1372 = vpop.permute.xlu0 %1371
        %vm1373 = vcmp.lt.s32.totalorder %v558, 13
        %v1374 = vsel %vm1373, %v1370, %v1372
        %v1375 = vsel %vm1373, %v1372, %v1370
        %s1376 = scalar_lea.vmem %s8, 66
        %v1377 = vld [vmem:[%s1376] ss:$8 sm:$0x3]
        %v1379 = vperm.slane %v1377, 0
        %v1380 = vperm.slane %v1377, 1
        %v1383 = vmul.f32 %v1375, %v1379
        %v1384 = vmul.f32 %v1374, %v1380
        %v1387 = vrot.slane %v1384, 7
        %v1388 = vsel %vm539, %v1383, %v1387
        %s1390 = scalar_lea.vmem [#allocation3], 66
        %1391 = vst.msk [vmem:[%s1390] ss:$8 sm:$0x3] %vm545, %v1388
        %1392 = vst.msk [vmem:[%s1390] ss:$8 sm:$0x0] %vm545, %v1388
        %1393 = vrot.lane.b32.xlu0 %v549, 12
        %v1394 = vpop.permute.xlu0 %1393
        %1395 = vrot.lane.b32.xlu0 %v550, 12
        %v1396 = vpop.permute.xlu0 %1395
        %vm1397 = vcmp.lt.s32.totalorder %v558, 12
        %v1398 = vsel %vm1397, %v1394, %v1396
        %v1399 = vsel %vm1397, %v1396, %v1394
        %s1400 = scalar_lea.vmem %s8, 67
        %v1401 = vld [vmem:[%s1400] ss:$8 sm:$0x3]
        %v1403 = vperm.slane %v1401, 0
        %v1404 = vperm.slane %v1401, 1
        %v1407 = vmul.f32 %v1399, %v1403
        %v1408 = vmul.f32 %v1398, %v1404
        %v1411 = vrot.slane %v1408, 7
        %v1412 = vsel %vm539, %v1407, %v1411
        %s1414 = scalar_lea.vmem [#allocation3], 67
        %1415 = vst.msk [vmem:[%s1414] ss:$8 sm:$0x3] %vm545, %v1412
        %1416 = vst.msk [vmem:[%s1414] ss:$8 sm:$0x0] %vm545, %v1412
        %1417 = vrot.lane.b32.xlu0 %v549, 4
        %v1418 = vpop.permute.xlu0 %1417
        %1419 = vrot.lane.b32.xlu0 %v550, 4
        %v1420 = vpop.permute.xlu0 %1419
        %vm1421 = vcmp.lt.s32.totalorder %v558, 4
        %v1422 = vsel %vm1421, %v1418, %v1420
        %v1423 = vsel %vm1421, %v1420, %v1418
        %s1424 = scalar_lea.vmem %s8, 68
        %v1425 = vld [vmem:[%s1424] ss:$8 sm:$0x3]
        %v1427 = vperm.slane %v1425, 0
        %v1428 = vperm.slane %v1425, 1
        %v1431 = vmul.f32 %v1423, %v1427
        %v1432 = vmul.f32 %v1422, %v1428
        %v1435 = vrot.slane %v1432, 7
        %v1436 = vsel %vm539, %v1431, %v1435
        %s1438 = scalar_lea.vmem [#allocation3], 68
        %1439 = vst.msk [vmem:[%s1438] ss:$8 sm:$0x3] %vm545, %v1436
        %1440 = vst.msk [vmem:[%s1438] ss:$8 sm:$0x0] %vm545, %v1436
        %1441 = vrot.lane.b32.xlu0 %v549, 3
        %v1442 = vpop.permute.xlu0 %1441
        %1443 = vrot.lane.b32.xlu0 %v550, 3
        %v1444 = vpop.permute.xlu0 %1443
        %vm1445 = vcmp.lt.s32.totalorder %v558, 3
        %v1446 = vsel %vm1445, %v1442, %v1444
        %v1447 = vsel %vm1445, %v1444, %v1442
        %s1448 = scalar_lea.vmem %s8, 69
        %v1449 = vld [vmem:[%s1448] ss:$8 sm:$0x3]
        %v1451 = vperm.slane %v1449, 0
        %v1452 = vperm.slane %v1449, 1
        %v1455 = vmul.f32 %v1447, %v1451
        %v1456 = vmul.f32 %v1446, %v1452
        %v1459 = vrot.slane %v1456, 7
        %v1460 = vsel %vm539, %v1455, %v1459
        %s1462 = scalar_lea.vmem [#allocation3], 69
        %1463 = vst.msk [vmem:[%s1462] ss:$8 sm:$0x3] %vm545, %v1460
        %1464 = vst.msk [vmem:[%s1462] ss:$8 sm:$0x0] %vm545, %v1460
        %1465 = vrot.lane.b32.xlu0 %v549, 2
        %v1466 = vpop.permute.xlu0 %1465
        %1467 = vrot.lane.b32.xlu0 %v550, 2
        %v1468 = vpop.permute.xlu0 %1467
        %vm1469 = vcmp.lt.s32.totalorder %v558, 2
        %v1470 = vsel %vm1469, %v1466, %v1468
        %v1471 = vsel %vm1469, %v1468, %v1466
        %s1472 = scalar_lea.vmem %s8, 70
        %v1473 = vld [vmem:[%s1472] ss:$8 sm:$0x3]
        %v1475 = vperm.slane %v1473, 0
        %v1476 = vperm.slane %v1473, 1
        %v1479 = vmul.f32 %v1471, %v1475
        %v1480 = vmul.f32 %v1470, %v1476
        %v1483 = vrot.slane %v1480, 7
        %v1484 = vsel %vm539, %v1479, %v1483
        %s1486 = scalar_lea.vmem [#allocation3], 70
        %1487 = vst.msk [vmem:[%s1486] ss:$8 sm:$0x3] %vm545, %v1484
        %1488 = vst.msk [vmem:[%s1486] ss:$8 sm:$0x0] %vm545, %v1484
        %1489 = vrot.lane.b32.xlu0 %v549, 1
        %v1490 = vpop.permute.xlu0 %1489
        %1491 = vrot.lane.b32.xlu0 %v550, 1
        %v1492 = vpop.permute.xlu0 %1491
        %vm1493 = vcmp.lt.s32.totalorder %v558, 1
        %v1494 = vsel %vm1493, %v1490, %v1492
        %v1495 = vsel %vm1493, %v1492, %v1490
        %s1496 = scalar_lea.vmem %s8, 71
        %v1497 = vld [vmem:[%s1496] ss:$8 sm:$0x3]
        %v1499 = vperm.slane %v1497, 0
        %v1500 = vperm.slane %v1497, 1
        %v1503 = vmul.f32 %v1495, %v1499
        %v1504 = vmul.f32 %v1494, %v1500
        %v1507 = vrot.slane %v1504, 7
        %v1508 = vsel %vm539, %v1503, %v1507
        %s1510 = scalar_lea.vmem [#allocation3], 71
        %1511 = vst.msk [vmem:[%s1510] ss:$8 sm:$0x3] %vm545, %v1508
        %1512 = vst.msk [vmem:[%s1510] ss:$8 sm:$0x0] %vm545, %v1508
        %s1513 = scalar_lea.vmem %s8, 80
        %v1514 = vld [vmem:[%s1513] ss:$8 sm:$0x3]
        %v1515 = vmul.f32 %v547, %v1514
        %s1516 = scalar_lea.vmem [#allocation3], 80
        %1517 = vst.msk [vmem:[%s1516] ss:$8 sm:$0x3] %vm545, %v1515
        %1518 = vst.msk [vmem:[%s1516] ss:$8 sm:$0x0] %vm545, %v1515
        %1519 = vrot.lane.b32.xlu0 %v549, 127
        %v1520 = vpop.permute.xlu0 %1519
        %1521 = vrot.lane.b32.xlu0 %v550, 127
        %v1522 = vpop.permute.xlu0 %1521
        %vm1523 = vcmp.lt.s32.totalorder %v558, 127
        %v1524 = vsel %vm1523, %v1520, %v1522
        %v1525 = vsel %vm1523, %v1522, %v1520
        %s1526 = scalar_lea.vmem %s8, 81
        %v1527 = vld [vmem:[%s1526] ss:$8 sm:$0x3]
        %v1529 = vperm.slane %v1527, 0
        %v1530 = vperm.slane %v1527, 1
        %v1533 = vmul.f32 %v1524, %v1529
        %v1534 = vmul.f32 %v1525, %v1530
        %v1537 = vrot.slane %v1534, 7
        %v1538 = vsel %vm539, %v1533, %v1537
        %s1540 = scalar_lea.vmem [#allocation3], 81
        %1541 = vst.msk [vmem:[%s1540] ss:$8 sm:$0x3] %vm545, %v1538
        %1542 = vst.msk [vmem:[%s1540] ss:$8 sm:$0x0] %vm545, %v1538
        %1543 = vrot.lane.b32.xlu0 %v549, 126
        %v1544 = vpop.permute.xlu0 %1543
        %1545 = vrot.lane.b32.xlu0 %v550, 126
        %v1546 = vpop.permute.xlu0 %1545
        %vm1547 = vcmp.lt.s32.totalorder %v558, 126
        %v1548 = vsel %vm1547, %v1544, %v1546
        %v1549 = vsel %vm1547, %v1546, %v1544
        %s1550 = scalar_lea.vmem %s8, 82
        %v1551 = vld [vmem:[%s1550] ss:$8 sm:$0x3]
        %v1553 = vperm.slane %v1551, 0
        %v1554 = vperm.slane %v1551, 1
        %v1557 = vmul.f32 %v1548, %v1553
        %v1558 = vmul.f32 %v1549, %v1554
        %v1561 = vrot.slane %v1558, 7
        %v1562 = vsel %vm539, %v1557, %v1561
        %s1564 = scalar_lea.vmem [#allocation3], 82
        %1565 = vst.msk [vmem:[%s1564] ss:$8 sm:$0x3] %vm545, %v1562
        %1566 = vst.msk [vmem:[%s1564] ss:$8 sm:$0x0] %vm545, %v1562
        %1567 = vrot.lane.b32.xlu0 %v549, 125
        %v1568 = vpop.permute.xlu0 %1567
        %1569 = vrot.lane.b32.xlu0 %v550, 125
        %v1570 = vpop.permute.xlu0 %1569
        %vm1571 = vcmp.lt.s32.totalorder %v558, 125
        %v1572 = vsel %vm1571, %v1568, %v1570
        %v1573 = vsel %vm1571, %v1570, %v1568
        %s1574 = scalar_lea.vmem %s8, 83
        %v1575 = vld [vmem:[%s1574] ss:$8 sm:$0x3]
        %v1577 = vperm.slane %v1575, 0
        %v1578 = vperm.slane %v1575, 1
        %v1581 = vmul.f32 %v1572, %v1577
        %v1582 = vmul.f32 %v1573, %v1578
        %v1585 = vrot.slane %v1582, 7
        %v1586 = vsel %vm539, %v1581, %v1585
        %s1588 = scalar_lea.vmem [#allocation3], 83
        %1589 = vst.msk [vmem:[%s1588] ss:$8 sm:$0x3] %vm545, %v1586
        %1590 = vst.msk [vmem:[%s1588] ss:$8 sm:$0x0] %vm545, %v1586
        %1591 = vrot.lane.b32.xlu0 %v549, 124
        %v1592 = vpop.permute.xlu0 %1591
        %1593 = vrot.lane.b32.xlu0 %v550, 124
        %v1594 = vpop.permute.xlu0 %1593
        %vm1595 = vcmp.lt.s32.totalorder %v558, 124
        %v1596 = vsel %vm1595, %v1592, %v1594
        %v1597 = vsel %vm1595, %v1594, %v1592
        %s1598 = scalar_lea.vmem %s8, 84
        %v1599 = vld [vmem:[%s1598] ss:$8 sm:$0x3]
        %v1601 = vperm.slane %v1599, 0
        %v1602 = vperm.slane %v1599, 1
        %v1605 = vmul.f32 %v1596, %v1601
        %v1606 = vmul.f32 %v1597, %v1602
        %v1609 = vrot.slane %v1606, 7
        %v1610 = vsel %vm539, %v1605, %v1609
        %s1612 = scalar_lea.vmem [#allocation3], 84
        %1613 = vst.msk [vmem:[%s1612] ss:$8 sm:$0x3] %vm545, %v1610
        %1614 = vst.msk [vmem:[%s1612] ss:$8 sm:$0x0] %vm545, %v1610
        %1615 = vrot.lane.b32.xlu0 %v549, 116
        %v1616 = vpop.permute.xlu0 %1615
        %1617 = vrot.lane.b32.xlu0 %v550, 116
        %v1618 = vpop.permute.xlu0 %1617
        %vm1619 = vcmp.lt.s32.totalorder %v558, 116
        %v1620 = vsel %vm1619, %v1616, %v1618
        %v1621 = vsel %vm1619, %v1618, %v1616
        %s1622 = scalar_lea.vmem %s8, 85
        %v1623 = vld [vmem:[%s1622] ss:$8 sm:$0x3]
        %v1625 = vperm.slane %v1623, 0
        %v1626 = vperm.slane %v1623, 1
        %v1629 = vmul.f32 %v1620, %v1625
        %v1630 = vmul.f32 %v1621, %v1626
        %v1633 = vrot.slane %v1630, 7
        %v1634 = vsel %vm539, %v1629, %v1633
        %s1636 = scalar_lea.vmem [#allocation3], 85
        %1637 = vst.msk [vmem:[%s1636] ss:$8 sm:$0x3] %vm545, %v1634
        %1638 = vst.msk [vmem:[%s1636] ss:$8 sm:$0x0] %vm545, %v1634
        %1639 = vrot.lane.b32.xlu0 %v549, 115
        %v1640 = vpop.permute.xlu0 %1639
        %1641 = vrot.lane.b32.xlu0 %v550, 115
        %v1642 = vpop.permute.xlu0 %1641
        %vm1643 = vcmp.lt.s32.totalorder %v558, 115
        %v1644 = vsel %vm1643, %v1640, %v1642
        %v1645 = vsel %vm1643, %v1642, %v1640
        %s1646 = scalar_lea.vmem %s8, 86
        %v1647 = vld [vmem:[%s1646] ss:$8 sm:$0x3]
        %v1649 = vperm.slane %v1647, 0
        %v1650 = vperm.slane %v1647, 1
        %v1653 = vmul.f32 %v1644, %v1649
        %v1654 = vmul.f32 %v1645, %v1650
        %v1657 = vrot.slane %v1654, 7
        %v1658 = vsel %vm539, %v1653, %v1657
        %s1660 = scalar_lea.vmem [#allocation3], 86
        %1661 = vst.msk [vmem:[%s1660] ss:$8 sm:$0x3] %vm545, %v1658
        %1662 = vst.msk [vmem:[%s1660] ss:$8 sm:$0x0] %vm545, %v1658
        %1663 = vrot.lane.b32.xlu0 %v549, 114
        %v1664 = vpop.permute.xlu0 %1663
        %1665 = vrot.lane.b32.xlu0 %v550, 114
        %v1666 = vpop.permute.xlu0 %1665
        %vm1667 = vcmp.lt.s32.totalorder %v558, 114
        %v1668 = vsel %vm1667, %v1664, %v1666
        %v1669 = vsel %vm1667, %v1666, %v1664
        %s1670 = scalar_lea.vmem %s8, 87
        %v1671 = vld [vmem:[%s1670] ss:$8 sm:$0x3]
        %v1673 = vperm.slane %v1671, 0
        %v1674 = vperm.slane %v1671, 1
        %v1677 = vmul.f32 %v1668, %v1673
        %v1678 = vmul.f32 %v1669, %v1674
        %v1681 = vrot.slane %v1678, 7
        %v1682 = vsel %vm539, %v1677, %v1681
        %s1684 = scalar_lea.vmem [#allocation3], 87
        %1685 = vst.msk [vmem:[%s1684] ss:$8 sm:$0x3] %vm545, %v1682
        %1686 = vst.msk [vmem:[%s1684] ss:$8 sm:$0x0] %vm545, %v1682
        %1687 = vrot.lane.b32.xlu0 %v549, 113
        %v1688 = vpop.permute.xlu0 %1687
        %1689 = vrot.lane.b32.xlu0 %v550, 113
        %v1690 = vpop.permute.xlu0 %1689
        %vm1691 = vcmp.lt.s32.totalorder %v558, 113
        %v1692 = vsel %vm1691, %v1688, %v1690
        %v1693 = vsel %vm1691, %v1690, %v1688
        %s1694 = scalar_lea.vmem %s8, 96
        %v1695 = vld [vmem:[%s1694] ss:$8 sm:$0x3]
        %v1697 = vperm.slane %v1695, 0
        %v1698 = vperm.slane %v1695, 1
        %v1701 = vmul.f32 %v1692, %v1697
        %v1702 = vmul.f32 %v1693, %v1698
        %v1705 = vrot.slane %v1702, 7
        %v1706 = vsel %vm539, %v1701, %v1705
        %s1708 = scalar_lea.vmem [#allocation3], 96
        %1709 = vst.msk [vmem:[%s1708] ss:$8 sm:$0x3] %vm545, %v1706
        %1710 = vst.msk [vmem:[%s1708] ss:$8 sm:$0x0] %vm545, %v1706
        %1711 = vrot.lane.b32.xlu0 %v549, 112
        %v1712 = vpop.permute.xlu0 %1711
        %1713 = vrot.lane.b32.xlu0 %v550, 112
        %v1714 = vpop.permute.xlu0 %1713
        %vm1715 = vcmp.lt.s32.totalorder %v558, 112
        %v1716 = vsel %vm1715, %v1712, %v1714
        %v1717 = vsel %vm1715, %v1714, %v1712
        %s1718 = scalar_lea.vmem %s8, 97
        %v1719 = vld [vmem:[%s1718] ss:$8 sm:$0x3]
        %v1721 = vperm.slane %v1719, 0
        %v1722 = vperm.slane %v1719, 1
        %v1725 = vmul.f32 %v1716, %v1721
        %v1726 = vmul.f32 %v1717, %v1722
        %v1729 = vrot.slane %v1726, 7
        %v1730 = vsel %vm539, %v1725, %v1729
        %s1732 = scalar_lea.vmem [#allocation3], 97
        %1733 = vst.msk [vmem:[%s1732] ss:$8 sm:$0x3] %vm545, %v1730
        %1734 = vst.msk [vmem:[%s1732] ss:$8 sm:$0x0] %vm545, %v1730
        %1735 = vrot.lane.b32.xlu0 %v549, 111
        %v1736 = vpop.permute.xlu0 %1735
        %1737 = vrot.lane.b32.xlu0 %v550, 111
        %v1738 = vpop.permute.xlu0 %1737
        %vm1739 = vcmp.lt.s32.totalorder %v558, 111
        %v1740 = vsel %vm1739, %v1736, %v1738
        %v1741 = vsel %vm1739, %v1738, %v1736
        %s1742 = scalar_lea.vmem %s8, 98
        %v1743 = vld [vmem:[%s1742] ss:$8 sm:$0x3]
        %v1745 = vperm.slane %v1743, 0
        %v1746 = vperm.slane %v1743, 1
        %v1749 = vmul.f32 %v1740, %v1745
        %v1750 = vmul.f32 %v1741, %v1746
        %v1753 = vrot.slane %v1750, 7
        %v1754 = vsel %vm539, %v1749, %v1753
        %s1756 = scalar_lea.vmem [#allocation3], 98
        %1757 = vst.msk [vmem:[%s1756] ss:$8 sm:$0x3] %vm545, %v1754
        %1758 = vst.msk [vmem:[%s1756] ss:$8 sm:$0x0] %vm545, %v1754
        %1759 = vrot.lane.b32.xlu0 %v549, 110
        %v1760 = vpop.permute.xlu0 %1759
        %1761 = vrot.lane.b32.xlu0 %v550, 110
        %v1762 = vpop.permute.xlu0 %1761
        %vm1763 = vcmp.lt.s32.totalorder %v558, 110
        %v1764 = vsel %vm1763, %v1760, %v1762
        %v1765 = vsel %vm1763, %v1762, %v1760
        %s1766 = scalar_lea.vmem %s8, 99
        %v1767 = vld [vmem:[%s1766] ss:$8 sm:$0x3]
        %v1769 = vperm.slane %v1767, 0
        %v1770 = vperm.slane %v1767, 1
        %v1773 = vmul.f32 %v1764, %v1769
        %v1774 = vmul.f32 %v1765, %v1770
        %v1777 = vrot.slane %v1774, 7
        %v1778 = vsel %vm539, %v1773, %v1777
        %s1780 = scalar_lea.vmem [#allocation3], 99
        %1781 = vst.msk [vmem:[%s1780] ss:$8 sm:$0x3] %vm545, %v1778
        %1782 = vst.msk [vmem:[%s1780] ss:$8 sm:$0x0] %vm545, %v1778
        %1783 = vrot.lane.b32.xlu0 %v549, 109
        %v1784 = vpop.permute.xlu0 %1783
        %1785 = vrot.lane.b32.xlu0 %v550, 109
        %v1786 = vpop.permute.xlu0 %1785
        %vm1787 = vcmp.lt.s32.totalorder %v558, 109
        %v1788 = vsel %vm1787, %v1784, %v1786
        %v1789 = vsel %vm1787, %v1786, %v1784
        %s1790 = scalar_lea.vmem %s8, 100
        %v1791 = vld [vmem:[%s1790] ss:$8 sm:$0x3]
        %v1793 = vperm.slane %v1791, 0
        %v1794 = vperm.slane %v1791, 1
        %v1797 = vmul.f32 %v1788, %v1793
        %v1798 = vmul.f32 %v1789, %v1794
        %v1801 = vrot.slane %v1798, 7
        %v1802 = vsel %vm539, %v1797, %v1801
        %s1804 = scalar_lea.vmem [#allocation3], 100
        %1805 = vst.msk [vmem:[%s1804] ss:$8 sm:$0x3] %vm545, %v1802
        %1806 = vst.msk [vmem:[%s1804] ss:$8 sm:$0x0] %vm545, %v1802
        %1807 = vrot.lane.b32.xlu0 %v549, 108
        %v1808 = vpop.permute.xlu0 %1807
        %1809 = vrot.lane.b32.xlu0 %v550, 108
        %v1810 = vpop.permute.xlu0 %1809
        %vm1811 = vcmp.lt.s32.totalorder %v558, 108
        %v1812 = vsel %vm1811, %v1808, %v1810
        %v1813 = vsel %vm1811, %v1810, %v1808
        %s1814 = scalar_lea.vmem %s8, 101
        %v1815 = vld [vmem:[%s1814] ss:$8 sm:$0x3]
        %v1817 = vperm.slane %v1815, 0
        %v1818 = vperm.slane %v1815, 1
        %v1821 = vmul.f32 %v1812, %v1817
        %v1822 = vmul.f32 %v1813, %v1818
        %v1825 = vrot.slane %v1822, 7
        %v1826 = vsel %vm539, %v1821, %v1825
        %s1828 = scalar_lea.vmem [#allocation3], 101
        %1829 = vst.msk [vmem:[%s1828] ss:$8 sm:$0x3] %vm545, %v1826
        %1830 = vst.msk [vmem:[%s1828] ss:$8 sm:$0x0] %vm545, %v1826
        %1831 = vrot.lane.b32.xlu0 %v549, 100
        %v1832 = vpop.permute.xlu0 %1831
        %1833 = vrot.lane.b32.xlu0 %v550, 100
        %v1834 = vpop.permute.xlu0 %1833
        %vm1835 = vcmp.lt.s32.totalorder %v558, 100
        %v1836 = vsel %vm1835, %v1832, %v1834
        %v1837 = vsel %vm1835, %v1834, %v1832
        %s1838 = scalar_lea.vmem %s8, 102
        %v1839 = vld [vmem:[%s1838] ss:$8 sm:$0x3]
        %v1841 = vperm.slane %v1839, 0
        %v1842 = vperm.slane %v1839, 1
        %v1845 = vmul.f32 %v1836, %v1841
        %v1846 = vmul.f32 %v1837, %v1842
        %v1849 = vrot.slane %v1846, 7
        %v1850 = vsel %vm539, %v1845, %v1849
        %s1852 = scalar_lea.vmem [#allocation3], 102
        %1853 = vst.msk [vmem:[%s1852] ss:$8 sm:$0x3] %vm545, %v1850
        %1854 = vst.msk [vmem:[%s1852] ss:$8 sm:$0x0] %vm545, %v1850
        %1855 = vrot.lane.b32.xlu0 %v549, 99
        %v1856 = vpop.permute.xlu0 %1855
        %1857 = vrot.lane.b32.xlu0 %v550, 99
        %v1858 = vpop.permute.xlu0 %1857
        %vm1859 = vcmp.lt.s32.totalorder %v558, 99
        %v1860 = vsel %vm1859, %v1856, %v1858
        %v1861 = vsel %vm1859, %v1858, %v1856
        %s1862 = scalar_lea.vmem %s8, 103
        %v1863 = vld [vmem:[%s1862] ss:$8 sm:$0x3]
        %v1865 = vperm.slane %v1863, 0
        %v1866 = vperm.slane %v1863, 1
        %v1869 = vmul.f32 %v1860, %v1865
        %v1870 = vmul.f32 %v1861, %v1866
        %v1873 = vrot.slane %v1870, 7
        %v1874 = vsel %vm539, %v1869, %v1873
        %s1876 = scalar_lea.vmem [#allocation3], 103
        %1877 = vst.msk [vmem:[%s1876] ss:$8 sm:$0x3] %vm545, %v1874
        %1878 = vst.msk [vmem:[%s1876] ss:$8 sm:$0x0] %vm545, %v1874
        %1879 = vrot.lane.b32.xlu0 %v549, 98
        %v1880 = vpop.permute.xlu0 %1879
        %1881 = vrot.lane.b32.xlu0 %v550, 98
        %v1882 = vpop.permute.xlu0 %1881
        %vm1883 = vcmp.lt.s32.totalorder %v558, 98
        %v1884 = vsel %vm1883, %v1880, %v1882
        %v1885 = vsel %vm1883, %v1882, %v1880
        %s1886 = scalar_lea.vmem %s8, 112
        %v1887 = vld [vmem:[%s1886] ss:$8 sm:$0x3]
        %v1889 = vperm.slane %v1887, 0
        %v1890 = vperm.slane %v1887, 1
        %v1893 = vmul.f32 %v1884, %v1889
        %v1894 = vmul.f32 %v1885, %v1890
        %v1897 = vrot.slane %v1894, 7
        %v1898 = vsel %vm539, %v1893, %v1897
        %s1900 = scalar_lea.vmem [#allocation3], 112
        %1901 = vst.msk [vmem:[%s1900] ss:$8 sm:$0x3] %vm545, %v1898
        %1902 = vst.msk [vmem:[%s1900] ss:$8 sm:$0x0] %vm545, %v1898
        %1903 = vrot.lane.b32.xlu0 %v549, 97
        %v1904 = vpop.permute.xlu0 %1903
        %1905 = vrot.lane.b32.xlu0 %v550, 97
        %v1906 = vpop.permute.xlu0 %1905
        %vm1907 = vcmp.lt.s32.totalorder %v558, 97
        %v1908 = vsel %vm1907, %v1904, %v1906
        %v1909 = vsel %vm1907, %v1906, %v1904
        %s1910 = scalar_lea.vmem %s8, 113
        %v1911 = vld [vmem:[%s1910] ss:$8 sm:$0x3]
        %v1913 = vperm.slane %v1911, 0
        %v1914 = vperm.slane %v1911, 1
        %v1917 = vmul.f32 %v1908, %v1913
        %v1918 = vmul.f32 %v1909, %v1914
        %v1921 = vrot.slane %v1918, 7
        %v1922 = vsel %vm539, %v1917, %v1921
        %s1924 = scalar_lea.vmem [#allocation3], 113
        %1925 = vst.msk [vmem:[%s1924] ss:$8 sm:$0x3] %vm545, %v1922
        %1926 = vst.msk [vmem:[%s1924] ss:$8 sm:$0x0] %vm545, %v1922
        %1927 = vrot.lane.b32.xlu0 %v549, 96
        %v1928 = vpop.permute.xlu0 %1927
        %1929 = vrot.lane.b32.xlu0 %v550, 96
        %v1930 = vpop.permute.xlu0 %1929
        %vm1931 = vcmp.lt.s32.totalorder %v558, 96
        %v1932 = vsel %vm1931, %v1928, %v1930
        %v1933 = vsel %vm1931, %v1930, %v1928
        %s1934 = scalar_lea.vmem %s8, 114
        %v1935 = vld [vmem:[%s1934] ss:$8 sm:$0x3]
        %v1937 = vperm.slane %v1935, 0
        %v1938 = vperm.slane %v1935, 1
        %v1941 = vmul.f32 %v1932, %v1937
        %v1942 = vmul.f32 %v1933, %v1938
        %v1945 = vrot.slane %v1942, 7
        %v1946 = vsel %vm539, %v1941, %v1945
        %s1948 = scalar_lea.vmem [#allocation3], 114
        %1949 = vst.msk [vmem:[%s1948] ss:$8 sm:$0x3] %vm545, %v1946
        %1950 = vst.msk [vmem:[%s1948] ss:$8 sm:$0x0] %vm545, %v1946
        %1951 = vrot.lane.b32.xlu0 %v549, 95
        %v1952 = vpop.permute.xlu0 %1951
        %1953 = vrot.lane.b32.xlu0 %v550, 95
        %v1954 = vpop.permute.xlu0 %1953
        %vm1955 = vcmp.lt.s32.totalorder %v558, 95
        %v1956 = vsel %vm1955, %v1952, %v1954
        %v1957 = vsel %vm1955, %v1954, %v1952
        %s1958 = scalar_lea.vmem %s8, 115
        %v1959 = vld [vmem:[%s1958] ss:$8 sm:$0x3]
        %v1961 = vperm.slane %v1959, 0
        %v1962 = vperm.slane %v1959, 1
        %v1965 = vmul.f32 %v1956, %v1961
        %v1966 = vmul.f32 %v1957, %v1962
        %v1969 = vrot.slane %v1966, 7
        %v1970 = vsel %vm539, %v1965, %v1969
        %s1972 = scalar_lea.vmem [#allocation3], 115
        %1973 = vst.msk [vmem:[%s1972] ss:$8 sm:$0x3] %vm545, %v1970
        %1974 = vst.msk [vmem:[%s1972] ss:$8 sm:$0x0] %vm545, %v1970
        %1975 = vrot.lane.b32.xlu0 %v549, 94
        %v1976 = vpop.permute.xlu0 %1975
        %1977 = vrot.lane.b32.xlu0 %v550, 94
        %v1978 = vpop.permute.xlu0 %1977
        %vm1979 = vcmp.lt.s32.totalorder %v558, 94
        %v1980 = vsel %vm1979, %v1976, %v1978
        %v1981 = vsel %vm1979, %v1978, %v1976
        %s1982 = scalar_lea.vmem %s8, 116
        %v1983 = vld [vmem:[%s1982] ss:$8 sm:$0x3]
        %v1985 = vperm.slane %v1983, 0
        %v1986 = vperm.slane %v1983, 1
        %v1989 = vmul.f32 %v1980, %v1985
        %v1990 = vmul.f32 %v1981, %v1986
        %v1993 = vrot.slane %v1990, 7
        %v1994 = vsel %vm539, %v1989, %v1993
        %s1996 = scalar_lea.vmem [#allocation3], 116
        %1997 = vst.msk [vmem:[%s1996] ss:$8 sm:$0x3] %vm545, %v1994
        %1998 = vst.msk [vmem:[%s1996] ss:$8 sm:$0x0] %vm545, %v1994
        %1999 = vrot.lane.b32.xlu0 %v549, 93
        %v2000 = vpop.permute.xlu0 %1999
        %2001 = vrot.lane.b32.xlu0 %v550, 93
        %v2002 = vpop.permute.xlu0 %2001
        %vm2003 = vcmp.lt.s32.totalorder %v558, 93
        %v2004 = vsel %vm2003, %v2000, %v2002
        %v2005 = vsel %vm2003, %v2002, %v2000
        %s2006 = scalar_lea.vmem %s8, 117
        %v2007 = vld [vmem:[%s2006] ss:$8 sm:$0x3]
        %v2009 = vperm.slane %v2007, 0
        %v2010 = vperm.slane %v2007, 1
        %v2013 = vmul.f32 %v2004, %v2009
        %v2014 = vmul.f32 %v2005, %v2010
        %v2017 = vrot.slane %v2014, 7
        %v2018 = vsel %vm539, %v2013, %v2017
        %s2020 = scalar_lea.vmem [#allocation3], 117
        %2021 = vst.msk [vmem:[%s2020] ss:$8 sm:$0x3] %vm545, %v2018
        %2022 = vst.msk [vmem:[%s2020] ss:$8 sm:$0x0] %vm545, %v2018
        %2023 = vrot.lane.b32.xlu0 %v549, 92
        %v2024 = vpop.permute.xlu0 %2023
        %2025 = vrot.lane.b32.xlu0 %v550, 92
        %v2026 = vpop.permute.xlu0 %2025
        %vm2027 = vcmp.lt.s32.totalorder %v558, 92
        %v2028 = vsel %vm2027, %v2024, %v2026
        %v2029 = vsel %vm2027, %v2026, %v2024
        %s2030 = scalar_lea.vmem %s8, 118
        %v2031 = vld [vmem:[%s2030] ss:$8 sm:$0x3]
        %v2033 = vperm.slane %v2031, 0
        %v2034 = vperm.slane %v2031, 1
        %v2037 = vmul.f32 %v2028, %v2033
        %v2038 = vmul.f32 %v2029, %v2034
        %v2041 = vrot.slane %v2038, 7
        %v2042 = vsel %vm539, %v2037, %v2041
        %s2044 = scalar_lea.vmem [#allocation3], 118
        %2045 = vst.msk [vmem:[%s2044] ss:$8 sm:$0x3] %vm545, %v2042
        %2046 = vst.msk [vmem:[%s2044] ss:$8 sm:$0x0] %vm545, %v2042
        %2047 = vrot.lane.b32.xlu0 %v549, 84
        %v2048 = vpop.permute.xlu0 %2047
        %2049 = vrot.lane.b32.xlu0 %v550, 84
        %v2050 = vpop.permute.xlu0 %2049
        %vm2051 = vcmp.lt.s32.totalorder %v558, 84
        %v2052 = vsel %vm2051, %v2048, %v2050
        %v2053 = vsel %vm2051, %v2050, %v2048
        %s2054 = scalar_lea.vmem %s8, 119
        %v2055 = vld [vmem:[%s2054] ss:$8 sm:$0x3]
        %v2057 = vperm.slane %v2055, 0
        %v2058 = vperm.slane %v2055, 1
        %v2061 = vmul.f32 %v2052, %v2057
        %v2062 = vmul.f32 %v2053, %v2058
        %v2065 = vrot.slane %v2062, 7
        %v2066 = vsel %vm539, %v2061, %v2065
        %s2068 = scalar_lea.vmem [#allocation3], 119
        %2069 = vst.msk [vmem:[%s2068] ss:$8 sm:$0x3] %vm545, %v2066
        %2070 = vst.msk [vmem:[%s2068] ss:$8 sm:$0x0] %vm545, %v2066
        %2071 = vrot.lane.b32.xlu0 %v549, 83
        %v2072 = vpop.permute.xlu0 %2071
        %2073 = vrot.lane.b32.xlu0 %v550, 83
        %v2074 = vpop.permute.xlu0 %2073
        %vm2075 = vcmp.lt.s32.totalorder %v558, 83
        %v2076 = vsel %vm2075, %v2072, %v2074
        %v2077 = vsel %vm2075, %v2074, %v2072
        %s2078 = scalar_lea.vmem %s8, 128
        %v2079 = vld [vmem:[%s2078] ss:$8 sm:$0x3]
        %v2081 = vperm.slane %v2079, 0
        %v2082 = vperm.slane %v2079, 1
        %v2085 = vmul.f32 %v2076, %v2081
        %v2086 = vmul.f32 %v2077, %v2082
        %v2089 = vrot.slane %v2086, 7
        %v2090 = vsel %vm539, %v2085, %v2089
        %s2092 = scalar_lea.vmem [#allocation3], 128
        %2093 = vst.msk [vmem:[%s2092] ss:$8 sm:$0x3] %vm545, %v2090
        %2094 = vst.msk [vmem:[%s2092] ss:$8 sm:$0x0] %vm545, %v2090
        %2095 = vrot.lane.b32.xlu0 %v549, 82
        %v2096 = vpop.permute.xlu0 %2095
        %2097 = vrot.lane.b32.xlu0 %v550, 82
        %v2098 = vpop.permute.xlu0 %2097
        %vm2099 = vcmp.lt.s32.totalorder %v558, 82
        %v2100 = vsel %vm2099, %v2096, %v2098
        %v2101 = vsel %vm2099, %v2098, %v2096
        %s2102 = scalar_lea.vmem %s8, 129
        %v2103 = vld [vmem:[%s2102] ss:$8 sm:$0x3]
        %v2105 = vperm.slane %v2103, 0
        %v2106 = vperm.slane %v2103, 1
        %v2109 = vmul.f32 %v2100, %v2105
        %v2110 = vmul.f32 %v2101, %v2106
        %v2113 = vrot.slane %v2110, 7
        %v2114 = vsel %vm539, %v2109, %v2113
        %s2116 = scalar_lea.vmem [#allocation3], 129
        %2117 = vst.msk [vmem:[%s2116] ss:$8 sm:$0x3] %vm545, %v2114
        %2118 = vst.msk [vmem:[%s2116] ss:$8 sm:$0x0] %vm545, %v2114
        %2119 = vrot.lane.b32.xlu0 %v549, 81
        %v2120 = vpop.permute.xlu0 %2119
        %2121 = vrot.lane.b32.xlu0 %v550, 81
        %v2122 = vpop.permute.xlu0 %2121
        %vm2123 = vcmp.lt.s32.totalorder %v558, 81
        %v2124 = vsel %vm2123, %v2120, %v2122
        %v2125 = vsel %vm2123, %v2122, %v2120
        %s2126 = scalar_lea.vmem %s8, 130
        %v2127 = vld [vmem:[%s2126] ss:$8 sm:$0x3]
        %v2129 = vperm.slane %v2127, 0
        %v2130 = vperm.slane %v2127, 1
        %v2133 = vmul.f32 %v2124, %v2129
        %v2134 = vmul.f32 %v2125, %v2130
        %v2137 = vrot.slane %v2134, 7
        %v2138 = vsel %vm539, %v2133, %v2137
        %s2140 = scalar_lea.vmem [#allocation3], 130
        %2141 = vst.msk [vmem:[%s2140] ss:$8 sm:$0x3] %vm545, %v2138
        %2142 = vst.msk [vmem:[%s2140] ss:$8 sm:$0x0] %vm545, %v2138
        %2143 = vrot.lane.b32.xlu0 %v549, 80
        %v2144 = vpop.permute.xlu0 %2143
        %2145 = vrot.lane.b32.xlu0 %v550, 80
        %v2146 = vpop.permute.xlu0 %2145
        %vm2147 = vcmp.lt.s32.totalorder %v558, 80
        %v2148 = vsel %vm2147, %v2144, %v2146
        %v2149 = vsel %vm2147, %v2146, %v2144
        %s2150 = scalar_lea.vmem %s8, 131
        %v2151 = vld [vmem:[%s2150] ss:$8 sm:$0x3]
        %v2153 = vperm.slane %v2151, 0
        %v2154 = vperm.slane %v2151, 1
        %v2157 = vmul.f32 %v2148, %v2153
        %v2158 = vmul.f32 %v2149, %v2154
        %v2161 = vrot.slane %v2158, 7
        %v2162 = vsel %vm539, %v2157, %v2161
        %s2164 = scalar_lea.vmem [#allocation3], 131
        %2165 = vst.msk [vmem:[%s2164] ss:$8 sm:$0x3] %vm545, %v2162
        %2166 = vst.msk [vmem:[%s2164] ss:$8 sm:$0x0] %vm545, %v2162
        %2167 = vrot.lane.b32.xlu0 %v549, 79
        %v2168 = vpop.permute.xlu0 %2167
        %2169 = vrot.lane.b32.xlu0 %v550, 79
        %v2170 = vpop.permute.xlu0 %2169
        %vm2171 = vcmp.lt.s32.totalorder %v558, 79
        %v2172 = vsel %vm2171, %v2168, %v2170
        %v2173 = vsel %vm2171, %v2170, %v2168
        %s2174 = scalar_lea.vmem %s8, 132
        %v2175 = vld [vmem:[%s2174] ss:$8 sm:$0x3]
        %v2177 = vperm.slane %v2175, 0
        %v2178 = vperm.slane %v2175, 1
        %v2181 = vmul.f32 %v2172, %v2177
        %v2182 = vmul.f32 %v2173, %v2178
        %v2185 = vrot.slane %v2182, 7
        %v2186 = vsel %vm539, %v2181, %v2185
        %s2188 = scalar_lea.vmem [#allocation3], 132
        %2189 = vst.msk [vmem:[%s2188] ss:$8 sm:$0x3] %vm545, %v2186
        %2190 = vst.msk [vmem:[%s2188] ss:$8 sm:$0x0] %vm545, %v2186
        %2191 = vrot.lane.b32.xlu0 %v549, 78
        %v2192 = vpop.permute.xlu0 %2191
        %2193 = vrot.lane.b32.xlu0 %v550, 78
        %v2194 = vpop.permute.xlu0 %2193
        %vm2195 = vcmp.lt.s32.totalorder %v558, 78
        %v2196 = vsel %vm2195, %v2192, %v2194
        %v2197 = vsel %vm2195, %v2194, %v2192
        %s2198 = scalar_lea.vmem %s8, 133
        %v2199 = vld [vmem:[%s2198] ss:$8 sm:$0x3]
        %v2201 = vperm.slane %v2199, 0
        %v2202 = vperm.slane %v2199, 1
        %v2205 = vmul.f32 %v2196, %v2201
        %v2206 = vmul.f32 %v2197, %v2202
        %v2209 = vrot.slane %v2206, 7
        %v2210 = vsel %vm539, %v2205, %v2209
        %s2212 = scalar_lea.vmem [#allocation3], 133
        %2213 = vst.msk [vmem:[%s2212] ss:$8 sm:$0x3] %vm545, %v2210
        %2214 = vst.msk [vmem:[%s2212] ss:$8 sm:$0x0] %vm545, %v2210
        %2215 = vrot.lane.b32.xlu0 %v549, 77
        %v2216 = vpop.permute.xlu0 %2215
        %2217 = vrot.lane.b32.xlu0 %v550, 77
        %v2218 = vpop.permute.xlu0 %2217
        %vm2219 = vcmp.lt.s32.totalorder %v558, 77
        %v2220 = vsel %vm2219, %v2216, %v2218
        %v2221 = vsel %vm2219, %v2218, %v2216
        %s2222 = scalar_lea.vmem %s8, 134
        %v2223 = vld [vmem:[%s2222] ss:$8 sm:$0x3]
        %v2225 = vperm.slane %v2223, 0
        %v2226 = vperm.slane %v2223, 1
        %v2229 = vmul.f32 %v2220, %v2225
        %v2230 = vmul.f32 %v2221, %v2226
        %v2233 = vrot.slane %v2230, 7
        %v2234 = vsel %vm539, %v2229, %v2233
        %s2236 = scalar_lea.vmem [#allocation3], 134
        %2237 = vst.msk [vmem:[%s2236] ss:$8 sm:$0x3] %vm545, %v2234
        %2238 = vst.msk [vmem:[%s2236] ss:$8 sm:$0x0] %vm545, %v2234
        %2239 = vrot.lane.b32.xlu0 %v549, 76
        %v2240 = vpop.permute.xlu0 %2239
        %2241 = vrot.lane.b32.xlu0 %v550, 76
        %v2242 = vpop.permute.xlu0 %2241
        %vm2243 = vcmp.lt.s32.totalorder %v558, 76
        %v2244 = vsel %vm2243, %v2240, %v2242
        %v2245 = vsel %vm2243, %v2242, %v2240
        %s2246 = scalar_lea.vmem %s8, 135
        %v2247 = vld [vmem:[%s2246] ss:$8 sm:$0x3]
        %v2249 = vperm.slane %v2247, 0
        %v2250 = vperm.slane %v2247, 1
        %v2253 = vmul.f32 %v2244, %v2249
        %v2254 = vmul.f32 %v2245, %v2250
        %v2257 = vrot.slane %v2254, 7
        %v2258 = vsel %vm539, %v2253, %v2257
        %s2260 = scalar_lea.vmem [#allocation3], 135
        %2261 = vst.msk [vmem:[%s2260] ss:$8 sm:$0x3] %vm545, %v2258
        %2262 = vst.msk [vmem:[%s2260] ss:$8 sm:$0x0] %vm545, %v2258
        %s2263 = scalar_lea.vmem %s8, 144
        %v2264 = vld [vmem:[%s2263] ss:$8 sm:$0x3]
        %v2266 = vperm.slane %v2264, 0
        %v2267 = vperm.slane %v2264, 1
        %v2270 = vmul.f32 %v560, %v2266
        %v2271 = vmul.f32 %v561, %v2267
        %v2274 = vrot.slane %v2271, 7
        %v2275 = vsel %vm539, %v2270, %v2274
        %s2277 = scalar_lea.vmem [#allocation3], 144
        %2278 = vst.msk [vmem:[%s2277] ss:$8 sm:$0x3] %vm545, %v2275
        %2279 = vst.msk [vmem:[%s2277] ss:$8 sm:$0x0] %vm545, %v2275
        %s2280 = scalar_lea.vmem %s8, 145
        %v2281 = vld [vmem:[%s2280] ss:$8 sm:$0x3]
        %v2283 = vperm.slane %v2281, 0
        %v2284 = vperm.slane %v2281, 1
        %v2287 = vmul.f32 %v582, %v2283
        %v2288 = vmul.f32 %v583, %v2284
        %v2291 = vrot.slane %v2288, 7
        %v2292 = vsel %vm539, %v2287, %v2291
        %s2294 = scalar_lea.vmem [#allocation3], 145
        %2295 = vst.msk [vmem:[%s2294] ss:$8 sm:$0x3] %vm545, %v2292
        %2296 = vst.msk [vmem:[%s2294] ss:$8 sm:$0x0] %vm545, %v2292
        %s2297 = scalar_lea.vmem %s8, 146
        %v2298 = vld [vmem:[%s2297] ss:$8 sm:$0x3]
        %v2300 = vperm.slane %v2298, 0
        %v2301 = vperm.slane %v2298, 1
        %v2304 = vmul.f32 %v606, %v2300
        %v2305 = vmul.f32 %v607, %v2301
        %v2308 = vrot.slane %v2305, 7
        %v2309 = vsel %vm539, %v2304, %v2308
        %s2311 = scalar_lea.vmem [#allocation3], 146
        %2312 = vst.msk [vmem:[%s2311] ss:$8 sm:$0x3] %vm545, %v2309
        %2313 = vst.msk [vmem:[%s2311] ss:$8 sm:$0x0] %vm545, %v2309
        %s2314 = scalar_lea.vmem %s8, 147
        %v2315 = vld [vmem:[%s2314] ss:$8 sm:$0x3]
        %v2317 = vperm.slane %v2315, 0
        %v2318 = vperm.slane %v2315, 1
        %v2321 = vmul.f32 %v630, %v2317
        %v2322 = vmul.f32 %v631, %v2318
        %v2325 = vrot.slane %v2322, 7
        %v2326 = vsel %vm539, %v2321, %v2325
        %s2328 = scalar_lea.vmem [#allocation3], 147
        %2329 = vst.msk [vmem:[%s2328] ss:$8 sm:$0x3] %vm545, %v2326
        %2330 = vst.msk [vmem:[%s2328] ss:$8 sm:$0x0] %vm545, %v2326
        %s2331 = scalar_lea.vmem %s8, 148
        %v2332 = vld [vmem:[%s2331] ss:$8 sm:$0x3]
        %v2334 = vperm.slane %v2332, 0
        %v2335 = vperm.slane %v2332, 1
        %v2338 = vmul.f32 %v654, %v2334
        %v2339 = vmul.f32 %v655, %v2335
        %v2342 = vrot.slane %v2339, 7
        %v2343 = vsel %vm539, %v2338, %v2342
        %s2345 = scalar_lea.vmem [#allocation3], 148
        %2346 = vst.msk [vmem:[%s2345] ss:$8 sm:$0x3] %vm545, %v2343
        %2347 = vst.msk [vmem:[%s2345] ss:$8 sm:$0x0] %vm545, %v2343
        %s2348 = scalar_lea.vmem %s8, 149
        %v2349 = vld [vmem:[%s2348] ss:$8 sm:$0x3]
        %v2351 = vperm.slane %v2349, 0
        %v2352 = vperm.slane %v2349, 1
        %v2355 = vmul.f32 %v678, %v2351
        %v2356 = vmul.f32 %v679, %v2352
        %v2359 = vrot.slane %v2356, 7
        %v2360 = vsel %vm539, %v2355, %v2359
        %s2362 = scalar_lea.vmem [#allocation3], 149
        %2363 = vst.msk [vmem:[%s2362] ss:$8 sm:$0x3] %vm545, %v2360
        %2364 = vst.msk [vmem:[%s2362] ss:$8 sm:$0x0] %vm545, %v2360
        %s2365 = scalar_lea.vmem %s8, 150
        %v2366 = vld [vmem:[%s2365] ss:$8 sm:$0x3]
        %v2368 = vperm.slane %v2366, 0
        %v2369 = vperm.slane %v2366, 1
        %v2372 = vmul.f32 %v702, %v2368
        %v2373 = vmul.f32 %v703, %v2369
        %v2376 = vrot.slane %v2373, 7
        %v2377 = vsel %vm539, %v2372, %v2376
        %s2379 = scalar_lea.vmem [#allocation3], 150
        %2380 = vst.msk [vmem:[%s2379] ss:$8 sm:$0x3] %vm545, %v2377
        %2381 = vst.msk [vmem:[%s2379] ss:$8 sm:$0x0] %vm545, %v2377
        %s2382 = scalar_lea.vmem %s8, 151
        %v2383 = vld [vmem:[%s2382] ss:$8 sm:$0x3]
        %v2385 = vperm.slane %v2383, 0
        %v2386 = vperm.slane %v2383, 1
        %v2389 = vmul.f32 %v726, %v2385
        %v2390 = vmul.f32 %v727, %v2386
        %v2393 = vrot.slane %v2390, 7
        %v2394 = vsel %vm539, %v2389, %v2393
        %s2396 = scalar_lea.vmem [#allocation3], 151
        %2397 = vst.msk [vmem:[%s2396] ss:$8 sm:$0x3] %vm545, %v2394
        %2398 = vst.msk [vmem:[%s2396] ss:$8 sm:$0x0] %vm545, %v2394
        %s2399 = scalar_lea.vmem %s8, 160
        %v2400 = vld [vmem:[%s2399] ss:$8 sm:$0x3]
        %v2402 = vperm.slane %v2400, 0
        %v2403 = vperm.slane %v2400, 1
        %v2406 = vmul.f32 %v750, %v2402
        %v2407 = vmul.f32 %v751, %v2403
        %v2410 = vrot.slane %v2407, 7
        %v2411 = vsel %vm539, %v2406, %v2410
        %s2413 = scalar_lea.vmem [#allocation3], 160
        %2414 = vst.msk [vmem:[%s2413] ss:$8 sm:$0x3] %vm545, %v2411
        %2415 = vst.msk [vmem:[%s2413] ss:$8 sm:$0x0] %vm545, %v2411
        %s2416 = scalar_lea.vmem [#allocation3], 161
        %2417 = vst.msk [vmem:[%s2416] ss:$8 sm:$0x3] %vm545, 1.0
        %2418 = vst.msk [vmem:[%s2416] ss:$8 sm:$0x0] %vm545, 1.0
        %v2419 = vld [vmem:[%s3] sm:$0xff]
        %v2420 = vld [vmem:[%s3 + $0x8] sm:$0xff]
        %v2421 = vld [vmem:[%s3 + $0x10] sm:$0xff]
        %v2422 = vld [vmem:[%s3 + $0x18] sm:$0xff]
        %v2423 = vld [vmem:[%s3 + $0x20] sm:$0xff]
        %v2424 = vld [vmem:[%s3 + $0x28] sm:$0xff]
        %v2425 = vld [vmem:[%s3 + $0x30] sm:$0xff]
        %v2426 = vld [vmem:[%s3 + $0x38] sm:$0xff]
        %v2427 = vld [vmem:[#allocation3] sm:$0xff]
        %v2428 = vld [vmem:[#allocation3 + $0x8] sm:$0xff]
        %v2429 = vld [vmem:[#allocation3 + $0x10] sm:$0xff]
        %v2430 = vld [vmem:[#allocation3 + $0x18] sm:$0xff]
        %v2431 = vld [vmem:[#allocation3 + $0x20] sm:$0xff]
        %v2432 = vld [vmem:[#allocation3 + $0x28] sm:$0xff]
        %v2433 = vld [vmem:[#allocation3 + $0x30] sm:$0xff]
        %v2434 = vld [vmem:[#allocation3 + $0x38] sm:$0xff]
        %v2435 = vld [vmem:[#allocation3 + $0x40] sm:$0xff]
        %v2436 = vld [vmem:[#allocation3 + $0x48] sm:$0xff]
        %v2437 = vld [vmem:[#allocation3 + $0x50] sm:$0xff]
        %v2438 = vld [vmem:[#allocation3 + $0x58] sm:$0xff]
        %v2439 = vld [vmem:[#allocation3 + $0x60] sm:$0xff]
        %v2440 = vld [vmem:[#allocation3 + $0x68] sm:$0xff]
        %v2441 = vld [vmem:[#allocation3 + $0x70] sm:$0xff]
        %v2442 = vld [vmem:[#allocation3 + $0x78] sm:$0xff]
        %v2443 = vld [vmem:[#allocation3 + $0x80] sm:$0xff]
        %v2444 = vld [vmem:[#allocation3 + $0x88] sm:$0xff]
        %v2445 = vld [vmem:[#allocation3 + $0x90] sm:$0xff]
        %v2446 = vld [vmem:[#allocation3 + $0x98] sm:$0xff]
        %v2447 = vld [vmem:[#allocation3 + $0xa0] sm:$0x3]
        %v2448 = vld [vmem:[#allocation3 + $0xa8] sm:$0x3]
        %vm2449 = vcmask 670720
        %v2451 = vsel %vm2449, %v2419, 0
        %v2454 = vsel %vm2449, %v2420, 0
        %v2457 = vsel %vm2449, %v2421, 0
        %v2460 = vsel %vm2449, %v2422, 0
        %v2463 = vsel %vm2449, %v2423, 0
        %v2466 = vsel %vm2449, %v2424, 0
        %v2469 = vsel %vm2449, %v2425, 0
        %v2472 = vsel %vm2449, %v2426, 0
        %vm2474 = vcmask 1041408
        %v2476 = vsel %vm2474, %v2447, 0
        %v2479 = vsel %vm2474, %v2448, 0
        %2481 = vmatpush.msra.mxu0 0.0
        %2482 = vmatpush.msra.mxu0 0.0
        %2483 = vmatpush.msra.mxu0 0.0
        %2484 = vmatpush.msra.mxu0 0.0
        %2485 = vmatpush.msra.mxu0 0.0
        %2486 = vmatpush.msra.mxu0 %v2476
        %2487 = vmatpush.msra.mxu0 %v2445
        %2488 = vmatpush.msra.mxu0 %v2443
        %2489 = vmatpush.msra.mxu0 %v2441
        %2490 = vmatpush.msra.mxu0 %v2439
        %2491 = vmatpush.msra.mxu0 %v2437
        %2492 = vmatpush.msra.mxu0 %v2435
        %2493 = vmatpush.msra.mxu0 %v2433
        %2494 = vmatpush.msra.mxu0 %v2431
        %2495 = vmatpush.msra.mxu0 %v2429
        %2496 = vmatpush.msra.mxu0 %v2427
        %2497 = vmatmul.f32.gmra.mxu0 %v2451
        %v2498 = vpop.f32.mrf.mxu0
        %v2499 = vadd.f32 0.0, %v2498
        %2500 = vmatmul.f32.gmra.mxu0 %v2454
        %v2501 = vpop.f32.mrf.mxu0
        %v2502 = vadd.f32 0.0, %v2501
        %2503 = vmatmul.f32.gmra.mxu0 %v2457
        %v2504 = vpop.f32.mrf.mxu0
        %v2505 = vadd.f32 0.0, %v2504
        %2506 = vmatmul.f32.gmra.mxu0 %v2460
        %v2507 = vpop.f32.mrf.mxu0
        %v2508 = vadd.f32 0.0, %v2507
        %2509 = vmatmul.f32.gmra.mxu0 %v2463
        %v2510 = vpop.f32.mrf.mxu0
        %v2511 = vadd.f32 0.0, %v2510
        %2512 = vmatmul.f32.gmra.mxu0 %v2466
        %v2513 = vpop.f32.mrf.mxu0
        %v2514 = vadd.f32 0.0, %v2513
        %2515 = vmatmul.f32.gmra.mxu0 %v2469
        %v2516 = vpop.f32.mrf.mxu0
        %v2517 = vadd.f32 0.0, %v2516
        %2518 = vmatmul.f32.gmra.mxu0 %v2472
        %v2519 = vpop.f32.mrf.mxu0
        %v2520 = vadd.f32 0.0, %v2519
        %2521 = vdwg.mxu0
        %2522 = vmatpush.msra.mxu0 0.0
        %2523 = vmatpush.msra.mxu0 0.0
        %2524 = vmatpush.msra.mxu0 0.0
        %2525 = vmatpush.msra.mxu0 0.0
        %2526 = vmatpush.msra.mxu0 0.0
        %2527 = vmatpush.msra.mxu0 %v2479
        %2528 = vmatpush.msra.mxu0 %v2446
        %2529 = vmatpush.msra.mxu0 %v2444
        %2530 = vmatpush.msra.mxu0 %v2442
        %2531 = vmatpush.msra.mxu0 %v2440
        %2532 = vmatpush.msra.mxu0 %v2438
        %2533 = vmatpush.msra.mxu0 %v2436
        %2534 = vmatpush.msra.mxu0 %v2434
        %2535 = vmatpush.msra.mxu0 %v2432
        %2536 = vmatpush.msra.mxu0 %v2430
        %2537 = vmatpush.msra.mxu0 %v2428
        %2538 = vmatmul.f32.gmra.mxu0 %v2451
        %v2539 = vpop.f32.mrf.mxu0
        %v2540 = vadd.f32 0.0, %v2539
        %2541 = vmatmul.f32.gmra.mxu0 %v2454
        %v2542 = vpop.f32.mrf.mxu0
        %v2543 = vadd.f32 0.0, %v2542
        %2544 = vmatmul.f32.gmra.mxu0 %v2457
        %v2545 = vpop.f32.mrf.mxu0
        %v2546 = vadd.f32 0.0, %v2545
        %2547 = vmatmul.f32.gmra.mxu0 %v2460
        %v2548 = vpop.f32.mrf.mxu0
        %v2549 = vadd.f32 0.0, %v2548
        %2550 = vmatmul.f32.gmra.mxu0 %v2463
        %v2551 = vpop.f32.mrf.mxu0
        %v2552 = vadd.f32 0.0, %v2551
        %2553 = vmatmul.f32.gmra.mxu0 %v2466
        %v2554 = vpop.f32.mrf.mxu0
        %v2555 = vadd.f32 0.0, %v2554
        %2556 = vmatmul.f32.gmra.mxu0 %v2469
        %v2557 = vpop.f32.mrf.mxu0
        %v2558 = vadd.f32 0.0, %v2557
        %2559 = vmatmul.f32.gmra.mxu0 %v2472
        %v2560 = vpop.f32.mrf.mxu0
        %v2561 = vadd.f32 0.0, %v2560
        %2562 = vdwg.mxu0
        %v2563 = vmax.f32 %v2499, 0.0
        %v2564 = vmax.f32 %v2540, 0.0
        %v2565 = vmax.f32 %v2502, 0.0
        %v2566 = vmax.f32 %v2543, 0.0
        %v2567 = vmax.f32 %v2505, 0.0
        %v2568 = vmax.f32 %v2546, 0.0
        %v2569 = vmax.f32 %v2508, 0.0
        %v2570 = vmax.f32 %v2549, 0.0
        %v2571 = vmax.f32 %v2511, 0.0
        %v2572 = vmax.f32 %v2552, 0.0
        %v2573 = vmax.f32 %v2514, 0.0
        %v2574 = vmax.f32 %v2555, 0.0
        %v2575 = vmax.f32 %v2517, 0.0
        %v2576 = vmax.f32 %v2558, 0.0
        %v2577 = vmax.f32 %v2520, 0.0
        %v2578 = vmax.f32 %v2561, 0.0
        %v2579 = vld [vmem:[%s4] sm:$0xff]
        %v2580 = vld [vmem:[%s4 + $0x8] sm:$0xff]
        %v2581 = vld [vmem:[%s4 + $0x10] sm:$0xff]
        %v2582 = vld [vmem:[%s4 + $0x18] sm:$0xff]
        %v2583 = vld [vmem:[%s5] sm:$0xff]
        %v2584 = vld [vmem:[%s5 + $0x8] sm:$0xff]
        %v2585 = vld [vmem:[%s5 + $0x10] sm:$0xff]
        %v2586 = vld [vmem:[%s5 + $0x18] sm:$0xff]
        %2588 = vset.pattern.permute.xlu0 0
        %2589 = vperm.xlu0 %2588, %v2583
        %v2590 = vpop.permute.xlu0 %2589
        %2593 = vset.pattern.permute.xlu0 0
        %2594 = vperm.xlu0 %2593, %v2584
        %v2595 = vpop.permute.xlu0 %2594
        %2598 = vset.pattern.permute.xlu0 0
        %2599 = vperm.xlu0 %2598, %v2585
        %v2600 = vpop.permute.xlu0 %2599
        %2603 = vset.pattern.permute.xlu0 0
        %2604 = vperm.xlu0 %2603, %v2586
        %v2605 = vpop.permute.xlu0 %2604
        %vm2607 = vcmask 523264
        %v2609 = vsel %vm2607, %v2579, 0
        %v2612 = vsel %vm2607, %v2580, 0
        %v2615 = vsel %vm2607, %v2581, 0
        %v2618 = vsel %vm2607, %v2582, 0
        %2620 = vmatpush.msra.mxu0 0.0
        %2621 = vmatpush.msra.mxu0 0.0
        %2622 = vmatpush.msra.mxu0 0.0
        %2623 = vmatpush.msra.mxu0 0.0
        %2624 = vmatpush.msra.mxu0 0.0
        %2625 = vmatpush.msra.mxu0 0.0
        %2626 = vmatpush.msra.mxu0 0.0
        %2627 = vmatpush.msra.mxu0 0.0
        %2628 = vmatpush.msra.mxu0 %v2577
        %2629 = vmatpush.msra.mxu0 %v2575
        %2630 = vmatpush.msra.mxu0 %v2573
        %2631 = vmatpush.msra.mxu0 %v2571
        %2632 = vmatpush.msra.mxu0 %v2569
        %2633 = vmatpush.msra.mxu0 %v2567
        %2634 = vmatpush.msra.mxu0 %v2565
        %2635 = vmatpush.msra.mxu0 %v2563
        %2636 = vmatmul.f32.gmra.mxu0 %v2609
        %v2637 = vpop.f32.mrf.mxu0
        %v2638 = vadd.f32 %v2590, %v2637
        %2639 = vmatmul.f32.gmra.mxu0 %v2612
        %v2640 = vpop.f32.mrf.mxu0
        %v2641 = vadd.f32 %v2595, %v2640
        %2642 = vmatmul.f32.gmra.mxu0 %v2615
        %v2643 = vpop.f32.mrf.mxu0
        %v2644 = vadd.f32 %v2600, %v2643
        %2645 = vmatmul.f32.gmra.mxu0 %v2618
        %v2646 = vpop.f32.mrf.mxu0
        %v2647 = vadd.f32 %v2605, %v2646
        %2648 = vdwg.mxu0
        %2649 = vmatpush.msra.mxu0 0.0
        %2650 = vmatpush.msra.mxu0 0.0
        %2651 = vmatpush.msra.mxu0 0.0
        %2652 = vmatpush.msra.mxu0 0.0
        %2653 = vmatpush.msra.mxu0 0.0
        %2654 = vmatpush.msra.mxu0 0.0
        %2655 = vmatpush.msra.mxu0 0.0
        %2656 = vmatpush.msra.mxu0 0.0
        %2657 = vmatpush.msra.mxu0 %v2578
        %2658 = vmatpush.msra.mxu0 %v2576
        %2659 = vmatpush.msra.mxu0 %v2574
        %2660 = vmatpush.msra.mxu0 %v2572
        %2661 = vmatpush.msra.mxu0 %v2570
        %2662 = vmatpush.msra.mxu0 %v2568
        %2663 = vmatpush.msra.mxu0 %v2566
        %2664 = vmatpush.msra.mxu0 %v2564
        %2665 = vmatmul.f32.gmra.mxu0 %v2609
        %v2666 = vpop.f32.mrf.mxu0
        %v2667 = vadd.f32 %v2590, %v2666
        %2668 = vmatmul.f32.gmra.mxu0 %v2612
        %v2669 = vpop.f32.mrf.mxu0
        %v2670 = vadd.f32 %v2595, %v2669
        %2671 = vmatmul.f32.gmra.mxu0 %v2615
        %v2672 = vpop.f32.mrf.mxu0
        %v2673 = vadd.f32 %v2600, %v2672
        %2674 = vmatmul.f32.gmra.mxu0 %v2618
        %v2675 = vpop.f32.mrf.mxu0
        %v2676 = vadd.f32 %v2605, %v2675
        %2677 = vdwg.mxu0
        %v2678 = vmax.f32 %v2638, 0.0
        %v2679 = vmax.f32 %v2667, 0.0
        %v2680 = vmax.f32 %v2641, 0.0
        %v2681 = vmax.f32 %v2670, 0.0
        %v2682 = vmax.f32 %v2644, 0.0
        %v2683 = vmax.f32 %v2673, 0.0
        %v2684 = vmax.f32 %v2647, 0.0
        %v2685 = vmax.f32 %v2676, 0.0
        %v2686 = vld [vmem:[#allocation8] sm:$0xff]
        %v2687 = vld [vmem:[#allocation8 + $0x8] sm:$0xff]
        %v2688 = vld [vmem:[#allocation8 + $0x10] sm:$0xff]
        %v2689 = vld [vmem:[#allocation8 + $0x18] sm:$0x1]
        %vm2690 = vcmask 261120
        %v2692 = vsel %vm2690, %v2686, 0
        %v2695 = vsel %vm2690, %v2687, 0
        %v2698 = vsel %vm2690, %v2688, 0
        %v2701 = vsel %vm2690, %v2689, 0
        %2703 = vmatpush.msra.mxu0 0.0
        %2704 = vmatpush.msra.mxu0 0.0
        %2705 = vmatpush.msra.mxu0 0.0
        %2706 = vmatpush.msra.mxu0 0.0
        %2707 = vmatpush.msra.mxu0 0.0
        %2708 = vmatpush.msra.mxu0 0.0
        %2709 = vmatpush.msra.mxu0 0.0
        %2710 = vmatpush.msra.mxu0 0.0
        %2711 = vmatpush.msra.mxu0 0.0
        %2712 = vmatpush.msra.mxu0 0.0
        %2713 = vmatpush.msra.mxu0 0.0
        %2714 = vmatpush.msra.mxu0 0.0
        %2715 = vmatpush.msra.mxu0 %v2684
        %2716 = vmatpush.msra.mxu0 %v2682
        %2717 = vmatpush.msra.mxu0 %v2680
        %2718 = vmatpush.msra.mxu0 %v2678
        %2719 = vmatmul.f32.gmra.mxu0 %v2692
        %v2720 = vpop.f32.mrf.mxu0
        %v2721 = vadd.f32 0.0, %v2720
        %2722 = vmatmul.f32.gmra.mxu0 %v2695
        %v2723 = vpop.f32.mrf.mxu0
        %v2724 = vadd.f32 0.0, %v2723
        %2725 = vmatmul.f32.gmra.mxu0 %v2698
        %v2726 = vpop.f32.mrf.mxu0
        %v2727 = vadd.f32 0.0, %v2726
        %2728 = vmatmul.f32.gmra.mxu0 %v2701
        %v2729 = vpop.f32.mrf.mxu0
        %v2730 = vadd.f32 0.0, %v2729
        %2731 = vdwg.mxu0
        %2732 = vmatpush.msra.mxu0 0.0
        %2733 = vmatpush.msra.mxu0 0.0
        %2734 = vmatpush.msra.mxu0 0.0
        %2735 = vmatpush.msra.mxu0 0.0
        %2736 = vmatpush.msra.mxu0 0.0
        %2737 = vmatpush.msra.mxu0 0.0
        %2738 = vmatpush.msra.mxu0 0.0
        %2739 = vmatpush.msra.mxu0 0.0
        %2740 = vmatpush.msra.mxu0 0.0
        %2741 = vmatpush.msra.mxu0 0.0
        %2742 = vmatpush.msra.mxu0 0.0
        %2743 = vmatpush.msra.mxu0 0.0
        %2744 = vmatpush.msra.mxu0 %v2685
        %2745 = vmatpush.msra.mxu0 %v2683
        %2746 = vmatpush.msra.mxu0 %v2681
        %2747 = vmatpush.msra.mxu0 %v2679
        %2748 = vmatmul.f32.gmra.mxu0 %v2692
        %v2749 = vpop.f32.mrf.mxu0
        %v2750 = vadd.f32 0.0, %v2749
        %2751 = vmatmul.f32.gmra.mxu0 %v2695
        %v2752 = vpop.f32.mrf.mxu0
        %v2753 = vadd.f32 0.0, %v2752
        %2754 = vmatmul.f32.gmra.mxu0 %v2698
        %v2755 = vpop.f32.mrf.mxu0
        %v2756 = vadd.f32 0.0, %v2755
        %2757 = vmatmul.f32.gmra.mxu0 %v2701
        %v2758 = vpop.f32.mrf.mxu0
        %v2759 = vadd.f32 0.0, %v2758
        %2760 = vdwg.mxu0
        %2761 = vrot.lane.b32.xlu0 %v2721, 34
        %v2762 = vpop.permute.xlu0 %2761
        %2763 = vrot.lane.b32.xlu0 %v2750, 34
        %v2764 = vpop.permute.xlu0 %2763
        %v2765 = vsel %vm1037, %v2762, %v2764
        %v2766 = vsel %vm1037, %v2764, %v2762
        %v2767 = vld [vmem:[#allocation10] ss:$8 sm:$0x3]
        %v2769 = vperm.slane %v2767, 0
        %v2770 = vperm.slane %v2767, 1
        %v2773 = vmul.f32 %v2766, %v2769
        %v2774 = vmul.f32 %v2765, %v2770
        %v2777 = vrot.slane %v2721, 1
        %v2778 = vrot.slane %v2750, 1
        %2781 = vrot.lane.b32.xlu0 %v2777, 33
        %v2782 = vpop.permute.xlu0 %2781
        %2783 = vrot.lane.b32.xlu0 %v2778, 33
        %v2784 = vpop.permute.xlu0 %2783
        %v2785 = vsel %vm1061, %v2782, %v2784
        %v2786 = vsel %vm1061, %v2784, %v2782
        %s2787 = scalar_lea.vmem [#allocation10], 1
        %v2788 = vld [vmem:[%s2787] ss:$8 sm:$0x3]
        %v2790 = vperm.slane %v2788, 0
        %v2791 = vperm.slane %v2788, 1
        %v2794 = vmul.f32 %v2786, %v2790
        %v2795 = vmul.f32 %v2785, %v2791
        %v2796 = vrot.slane %v2721, 2
        %v2797 = vrot.slane %v2750, 2
        %2800 = vrot.lane.b32.xlu0 %v2796, 32
        %v2801 = vpop.permute.xlu0 %2800
        %2802 = vrot.lane.b32.xlu0 %v2797, 32
        %v2803 = vpop.permute.xlu0 %2802
        %v2804 = vsel %vm1085, %v2801, %v2803
        %v2805 = vsel %vm1085, %v2803, %v2801
        %s2806 = scalar_lea.vmem [#allocation10], 2
        %v2807 = vld [vmem:[%s2806] ss:$8 sm:$0x3]
        %v2809 = vperm.slane %v2807, 0
        %v2810 = vperm.slane %v2807, 1
        %v2813 = vmul.f32 %v2805, %v2809
        %v2814 = vmul.f32 %v2804, %v2810
        %v2815 = vrot.slane %v2721, 3
        %v2816 = vrot.slane %v2750, 3
        %2819 = vrot.lane.b32.xlu0 %v2815, 31
        %v2820 = vpop.permute.xlu0 %2819
        %2821 = vrot.lane.b32.xlu0 %v2816, 31
        %v2822 = vpop.permute.xlu0 %2821
        %v2823 = vsel %vm1109, %v2820, %v2822
        %v2824 = vsel %vm1109, %v2822, %v2820
        %s2825 = scalar_lea.vmem [#allocation10], 3
        %v2826 = vld [vmem:[%s2825] ss:$8 sm:$0x3]
        %v2828 = vperm.slane %v2826, 0
        %v2829 = vperm.slane %v2826, 1
        %v2832 = vmul.f32 %v2824, %v2828
        %v2833 = vmul.f32 %v2823, %v2829
        %v2834 = vrot.slane %v2721, 4
        %v2835 = vrot.slane %v2750, 4
        %2838 = vrot.lane.b32.xlu0 %v2834, 30
        %v2839 = vpop.permute.xlu0 %2838
        %2840 = vrot.lane.b32.xlu0 %v2835, 30
        %v2841 = vpop.permute.xlu0 %2840
        %v2842 = vsel %vm1133, %v2839, %v2841
        %v2843 = vsel %vm1133, %v2841, %v2839
        %s2844 = scalar_lea.vmem [#allocation10], 4
        %v2845 = vld [vmem:[%s2844] ss:$8 sm:$0x3]
        %v2847 = vperm.slane %v2845, 0
        %v2848 = vperm.slane %v2845, 1
        %v2851 = vmul.f32 %v2843, %v2847
        %v2852 = vmul.f32 %v2842, %v2848
        %v2853 = vrot.slane %v2721, 5
        %v2854 = vrot.slane %v2750, 5
        %2857 = vrot.lane.b32.xlu0 %v2853, 18
        %v2858 = vpop.permute.xlu0 %2857
        %2859 = vrot.lane.b32.xlu0 %v2854, 18
        %v2860 = vpop.permute.xlu0 %2859
        %v2861 = vsel %vm1253, %v2858, %v2860
        %v2862 = vsel %vm1253, %v2860, %v2858
        %s2863 = scalar_lea.vmem [#allocation10], 5
        %v2864 = vld [vmem:[%s2863] ss:$8 sm:$0x3]
        %v2866 = vperm.slane %v2864, 0
        %v2867 = vperm.slane %v2864, 1
        %v2870 = vmul.f32 %v2862, %v2866
        %v2871 = vmul.f32 %v2861, %v2867
        %v2872 = vrot.slane %v2721, 6
        %v2873 = vrot.slane %v2750, 6
        %2876 = vrot.lane.b32.xlu0 %v2872, 17
        %v2877 = vpop.permute.xlu0 %2876
        %2878 = vrot.lane.b32.xlu0 %v2873, 17
        %v2879 = vpop.permute.xlu0 %2878
        %v2880 = vsel %vm1277, %v2877, %v2879
        %v2881 = vsel %vm1277, %v2879, %v2877
        %s2882 = scalar_lea.vmem [#allocation10], 6
        %v2883 = vld [vmem:[%s2882] ss:$8 sm:$0x3]
        %v2885 = vperm.slane %v2883, 0
        %v2886 = vperm.slane %v2883, 1
        %v2889 = vmul.f32 %v2881, %v2885
        %v2890 = vmul.f32 %v2880, %v2886
        %v2891 = vrot.slane %v2721, 7
        %v2892 = vrot.slane %v2750, 7
        %2895 = vrot.lane.b32.xlu0 %v2891, 16
        %v2896 = vpop.permute.xlu0 %2895
        %2897 = vrot.lane.b32.xlu0 %v2892, 16
        %v2898 = vpop.permute.xlu0 %2897
        %v2899 = vsel %vm1301, %v2896, %v2898
        %v2900 = vsel %vm1301, %v2898, %v2896
        %s2901 = scalar_lea.vmem [#allocation10], 7
        %v2902 = vld [vmem:[%s2901] ss:$8 sm:$0x3]
        %v2904 = vperm.slane %v2902, 0
        %v2905 = vperm.slane %v2902, 1
        %v2908 = vmul.f32 %v2900, %v2904
        %v2909 = vmul.f32 %v2899, %v2905
        %2910 = vrot.lane.b32.xlu0 %v2724, 15
        %v2911 = vpop.permute.xlu0 %2910
        %2912 = vrot.lane.b32.xlu0 %v2753, 15
        %v2913 = vpop.permute.xlu0 %2912
        %v2914 = vsel %vm1325, %v2911, %v2913
        %v2915 = vsel %vm1325, %v2913, %v2911
        %s2916 = scalar_lea.vmem [#allocation10], 16
        %v2917 = vld [vmem:[%s2916] ss:$8 sm:$0x3]
        %v2919 = vperm.slane %v2917, 0
        %v2920 = vperm.slane %v2917, 1
        %v2923 = vmul.f32 %v2915, %v2919
        %v2924 = vmul.f32 %v2914, %v2920
        %v2927 = vrot.slane %v2724, 1
        %v2928 = vrot.slane %v2753, 1
        %2931 = vrot.lane.b32.xlu0 %v2927, 14
        %v2932 = vpop.permute.xlu0 %2931
        %2933 = vrot.lane.b32.xlu0 %v2928, 14
        %v2934 = vpop.permute.xlu0 %2933
        %v2935 = vsel %vm1349, %v2932, %v2934
        %v2936 = vsel %vm1349, %v2934, %v2932
        %s2937 = scalar_lea.vmem [#allocation10], 17
        %v2938 = vld [vmem:[%s2937] ss:$8 sm:$0x3]
        %v2940 = vperm.slane %v2938, 0
        %v2941 = vperm.slane %v2938, 1
        %v2944 = vmul.f32 %v2936, %v2940
        %v2945 = vmul.f32 %v2935, %v2941
        %v2946 = vrot.slane %v2724, 2
        %v2947 = vrot.slane %v2753, 2
        %2950 = vrot.lane.b32.xlu0 %v2946, 2
        %v2951 = vpop.permute.xlu0 %2950
        %2952 = vrot.lane.b32.xlu0 %v2947, 2
        %v2953 = vpop.permute.xlu0 %2952
        %v2954 = vsel %vm1469, %v2951, %v2953
        %v2955 = vsel %vm1469, %v2953, %v2951
        %s2956 = scalar_lea.vmem [#allocation10], 18
        %v2957 = vld [vmem:[%s2956] ss:$8 sm:$0x3]
        %v2959 = vperm.slane %v2957, 0
        %v2960 = vperm.slane %v2957, 1
        %v2963 = vmul.f32 %v2955, %v2959
        %v2964 = vmul.f32 %v2954, %v2960
        %v2965 = vrot.slane %v2724, 3
        %v2966 = vrot.slane %v2753, 3
        %2969 = vrot.lane.b32.xlu0 %v2965, 1
        %v2970 = vpop.permute.xlu0 %2969
        %2971 = vrot.lane.b32.xlu0 %v2966, 1
        %v2972 = vpop.permute.xlu0 %2971
        %v2973 = vsel %vm1493, %v2970, %v2972
        %v2974 = vsel %vm1493, %v2972, %v2970
        %s2975 = scalar_lea.vmem [#allocation10], 19
        %v2976 = vld [vmem:[%s2975] ss:$8 sm:$0x3]
        %v2978 = vperm.slane %v2976, 0
        %v2979 = vperm.slane %v2976, 1
        %v2982 = vmul.f32 %v2974, %v2978
        %v2983 = vmul.f32 %v2973, %v2979
        %s2984 = scalar_lea.vmem [#allocation10], 20
        %v2985 = vld [vmem:[%s2984] ss:$8 sm:$0x3]
        %v2987 = vperm.slane %v2985, 0
        %v2988 = vperm.slane %v2985, 1
        %v2991 = vmul.f32 %v2724, %v2987
        %v2992 = vmul.f32 %v2753, %v2988
        %v2993 = vrot.slane %v2724, 5
        %v2994 = vrot.slane %v2753, 5
        %2997 = vrot.lane.b32.xlu0 %v2993, 127
        %v2998 = vpop.permute.xlu0 %2997
        %2999 = vrot.lane.b32.xlu0 %v2994, 127
        %v3000 = vpop.permute.xlu0 %2999
        %v3001 = vsel %vm1523, %v2998, %v3000
        %v3002 = vsel %vm1523, %v3000, %v2998
        %s3003 = scalar_lea.vmem [#allocation10], 21
        %v3004 = vld [vmem:[%s3003] ss:$8 sm:$0x3]
        %v3006 = vperm.slane %v3004, 0
        %v3007 = vperm.slane %v3004, 1
        %v3010 = vmul.f32 %v3001, %v3006
        %v3011 = vmul.f32 %v3002, %v3007
        %v3012 = vrot.slane %v2724, 6
        %v3013 = vrot.slane %v2753, 6
        %3016 = vrot.lane.b32.xlu0 %v3012, 126
        %v3017 = vpop.permute.xlu0 %3016
        %3018 = vrot.lane.b32.xlu0 %v3013, 126
        %v3019 = vpop.permute.xlu0 %3018
        %v3020 = vsel %vm1547, %v3017, %v3019
        %v3021 = vsel %vm1547, %v3019, %v3017
        %s3022 = scalar_lea.vmem [#allocation10], 22
        %v3023 = vld [vmem:[%s3022] ss:$8 sm:$0x3]
        %v3025 = vperm.slane %v3023, 0
        %v3026 = vperm.slane %v3023, 1
        %v3029 = vmul.f32 %v3020, %v3025
        %v3030 = vmul.f32 %v3021, %v3026
        %v3031 = vrot.slane %v2724, 7
        %v3032 = vrot.slane %v2753, 7
        %3035 = vrot.lane.b32.xlu0 %v3031, 114
        %v3036 = vpop.permute.xlu0 %3035
        %3037 = vrot.lane.b32.xlu0 %v3032, 114
        %v3038 = vpop.permute.xlu0 %3037
        %v3039 = vsel %vm1667, %v3036, %v3038
        %v3040 = vsel %vm1667, %v3038, %v3036
        %s3041 = scalar_lea.vmem [#allocation10], 23
        %v3042 = vld [vmem:[%s3041] ss:$8 sm:$0x3]
        %v3044 = vperm.slane %v3042, 0
        %v3045 = vperm.slane %v3042, 1
        %v3048 = vmul.f32 %v3039, %v3044
        %v3049 = vmul.f32 %v3040, %v3045
        %3050 = vrot.lane.b32.xlu0 %v2727, 113
        %v3051 = vpop.permute.xlu0 %3050
        %3052 = vrot.lane.b32.xlu0 %v2756, 113
        %v3053 = vpop.permute.xlu0 %3052
        %v3054 = vsel %vm1691, %v3051, %v3053
        %v3055 = vsel %vm1691, %v3053, %v3051
        %s3056 = scalar_lea.vmem [#allocation10], 32
        %v3057 = vld [vmem:[%s3056] ss:$8 sm:$0x3]
        %v3059 = vperm.slane %v3057, 0
        %v3060 = vperm.slane %v3057, 1
        %v3063 = vmul.f32 %v3054, %v3059
        %v3064 = vmul.f32 %v3055, %v3060
        %v3067 = vrot.slane %v2727, 1
        %v3068 = vrot.slane %v2756, 1
        %3071 = vrot.lane.b32.xlu0 %v3067, 112
        %v3072 = vpop.permute.xlu0 %3071
        %3073 = vrot.lane.b32.xlu0 %v3068, 112
        %v3074 = vpop.permute.xlu0 %3073
        %v3075 = vsel %vm1715, %v3072, %v3074
        %v3076 = vsel %vm1715, %v3074, %v3072
        %s3077 = scalar_lea.vmem [#allocation10], 33
        %v3078 = vld [vmem:[%s3077] ss:$8 sm:$0x3]
        %v3080 = vperm.slane %v3078, 0
        %v3081 = vperm.slane %v3078, 1
        %v3084 = vmul.f32 %v3075, %v3080
        %v3085 = vmul.f32 %v3076, %v3081
        %v3086 = vrot.slane %v2727, 2
        %v3087 = vrot.slane %v2756, 2
        %3090 = vrot.lane.b32.xlu0 %v3086, 111
        %v3091 = vpop.permute.xlu0 %3090
        %3092 = vrot.lane.b32.xlu0 %v3087, 111
        %v3093 = vpop.permute.xlu0 %3092
        %v3094 = vsel %vm1739, %v3091, %v3093
        %v3095 = vsel %vm1739, %v3093, %v3091
        %s3096 = scalar_lea.vmem [#allocation10], 34
        %v3097 = vld [vmem:[%s3096] ss:$8 sm:$0x3]
        %v3099 = vperm.slane %v3097, 0
        %v3100 = vperm.slane %v3097, 1
        %v3103 = vmul.f32 %v3094, %v3099
        %v3104 = vmul.f32 %v3095, %v3100
        %v3105 = vrot.slane %v2727, 3
        %v3106 = vrot.slane %v2756, 3
        %3109 = vrot.lane.b32.xlu0 %v3105, 110
        %v3110 = vpop.permute.xlu0 %3109
        %3111 = vrot.lane.b32.xlu0 %v3106, 110
        %v3112 = vpop.permute.xlu0 %3111
        %v3113 = vsel %vm1763, %v3110, %v3112
        %v3114 = vsel %vm1763, %v3112, %v3110
        %s3115 = scalar_lea.vmem [#allocation10], 35
        %v3116 = vld [vmem:[%s3115] ss:$8 sm:$0x3]
        %v3118 = vperm.slane %v3116, 0
        %v3119 = vperm.slane %v3116, 1
        %v3122 = vmul.f32 %v3113, %v3118
        %v3123 = vmul.f32 %v3114, %v3119
        %v3124 = vrot.slane %v2727, 4
        %v3125 = vrot.slane %v2756, 4
        %3128 = vrot.lane.b32.xlu0 %v3124, 98
        %v3129 = vpop.permute.xlu0 %3128
        %3130 = vrot.lane.b32.xlu0 %v3125, 98
        %v3131 = vpop.permute.xlu0 %3130
        %v3132 = vsel %vm1883, %v3129, %v3131
        %v3133 = vsel %vm1883, %v3131, %v3129
        %s3134 = scalar_lea.vmem [#allocation10], 36
        %v3135 = vld [vmem:[%s3134] ss:$8 sm:$0x3]
        %v3137 = vperm.slane %v3135, 0
        %v3138 = vperm.slane %v3135, 1
        %v3141 = vmul.f32 %v3132, %v3137
        %v3142 = vmul.f32 %v3133, %v3138
        %v3143 = vrot.slane %v2727, 5
        %v3144 = vrot.slane %v2756, 5
        %3147 = vrot.lane.b32.xlu0 %v3143, 97
        %v3148 = vpop.permute.xlu0 %3147
        %3149 = vrot.lane.b32.xlu0 %v3144, 97
        %v3150 = vpop.permute.xlu0 %3149
        %v3151 = vsel %vm1907, %v3148, %v3150
        %v3152 = vsel %vm1907, %v3150, %v3148
        %s3153 = scalar_lea.vmem [#allocation10], 37
        %v3154 = vld [vmem:[%s3153] ss:$8 sm:$0x3]
        %v3156 = vperm.slane %v3154, 0
        %v3157 = vperm.slane %v3154, 1
        %v3160 = vmul.f32 %v3151, %v3156
        %v3161 = vmul.f32 %v3152, %v3157
        %v3162 = vrot.slane %v2727, 6
        %v3163 = vrot.slane %v2756, 6
        %3166 = vrot.lane.b32.xlu0 %v3162, 96
        %v3167 = vpop.permute.xlu0 %3166
        %3168 = vrot.lane.b32.xlu0 %v3163, 96
        %v3169 = vpop.permute.xlu0 %3168
        %v3170 = vsel %vm1931, %v3167, %v3169
        %v3171 = vsel %vm1931, %v3169, %v3167
        %s3172 = scalar_lea.vmem [#allocation10], 38
        %v3173 = vld [vmem:[%s3172] ss:$8 sm:$0x3]
        %v3175 = vperm.slane %v3173, 0
        %v3176 = vperm.slane %v3173, 1
        %v3179 = vmul.f32 %v3170, %v3175
        %v3180 = vmul.f32 %v3171, %v3176
        %v3181 = vrot.slane %v2727, 7
        %v3182 = vrot.slane %v2756, 7
        %3185 = vrot.lane.b32.xlu0 %v3181, 95
        %v3186 = vpop.permute.xlu0 %3185
        %3187 = vrot.lane.b32.xlu0 %v3182, 95
        %v3188 = vpop.permute.xlu0 %3187
        %v3189 = vsel %vm1955, %v3186, %v3188
        %v3190 = vsel %vm1955, %v3188, %v3186
        %s3191 = scalar_lea.vmem [#allocation10], 39
        %v3192 = vld [vmem:[%s3191] ss:$8 sm:$0x3]
        %v3194 = vperm.slane %v3192, 0
        %v3195 = vperm.slane %v3192, 1
        %v3198 = vmul.f32 %v3189, %v3194
        %v3199 = vmul.f32 %v3190, %v3195
        %3200 = vrot.lane.b32.xlu0 %v2730, 94
        %v3201 = vpop.permute.xlu0 %3200
        %3202 = vrot.lane.b32.xlu0 %v2759, 94
        %v3203 = vpop.permute.xlu0 %3202
        %v3204 = vsel %vm1979, %v3201, %v3203
        %v3205 = vsel %vm1979, %v3203, %v3201
        %s3206 = scalar_lea.vmem [#allocation10], 48
        %v3207 = vld [vmem:[%s3206] ss:$8 sm:$0x3]
        %v3209 = vperm.slane %v3207, 0
        %v3210 = vperm.slane %v3207, 1
        %v3213 = vmul.f32 %v3204, %v3209
        %v3214 = vmul.f32 %v3205, %v3210
        %v3215 = vadd.f32 %v2773, %v2794
        %v3216 = vadd.f32 %v2774, %v2795
        %v3217 = vadd.f32 %v2813, %v2832
        %v3218 = vadd.f32 %v2814, %v2833
        %v3219 = vadd.f32 %v2851, %v2870
        %v3220 = vadd.f32 %v2852, %v2871
        %v3221 = vadd.f32 %v2889, %v2908
        %v3222 = vadd.f32 %v2890, %v2909
        %v3223 = vadd.f32 %v2923, %v2944
        %v3224 = vadd.f32 %v2924, %v2945
        %v3225 = vadd.f32 %v2963, %v2982
        %v3226 = vadd.f32 %v2964, %v2983
        %v3229 = vrot.slane %v3010, 4
        %v3230 = vrot.slane %v3011, 4
        %v3233 = vadd.f32 %v2991, %v3229
        %v3234 = vadd.f32 %v2992, %v3230
        %v3235 = vadd.f32 %v3029, %v3048
        %v3236 = vadd.f32 %v3030, %v3049
        %v3237 = vadd.f32 %v3063, %v3084
        %v3238 = vadd.f32 %v3064, %v3085
        %v3239 = vadd.f32 %v3103, %v3122
        %v3240 = vadd.f32 %v3104, %v3123
        %v3241 = vadd.f32 %v3141, %v3160
        %v3242 = vadd.f32 %v3142, %v3161
        %v3243 = vadd.f32 %v3179, %v3198
        %v3244 = vadd.f32 %v3180, %v3199
        %v3245 = vadd.f32 %v3215, %v3217
        %v3246 = vadd.f32 %v3216, %v3218
        %v3247 = vadd.f32 %v3219, %v3221
        %v3248 = vadd.f32 %v3220, %v3222
        %v3249 = vadd.f32 %v3223, %v3225
        %v3250 = vadd.f32 %v3224, %v3226
        %v3253 = vrot.slane %v3235, 4
        %v3254 = vrot.slane %v3236, 4
        %v3257 = vadd.f32 %v3233, %v3253
        %v3258 = vadd.f32 %v3234, %v3254
        %v3259 = vadd.f32 %v3237, %v3239
        %v3260 = vadd.f32 %v3238, %v3240
        %v3261 = vadd.f32 %v3241, %v3243
        %v3262 = vadd.f32 %v3242, %v3244
        %v3263 = vadd.f32 %v3245, %v3247
        %v3264 = vadd.f32 %v3246, %v3248
        %v3267 = vrot.slane %v3257, 4
        %v3268 = vrot.slane %v3258, 4
        %v3271 = vadd.f32 %v3249, %v3267
        %v3272 = vadd.f32 %v3250, %v3268
        %v3273 = vadd.f32 %v3259, %v3261
        %v3274 = vadd.f32 %v3260, %v3262
        %v3275 = vadd.f32 %v3263, %v3271
        %v3276 = vadd.f32 %v3264, %v3272
        %v3277 = vadd.f32 %v3273, %v3213
        %v3278 = vadd.f32 %v3274, %v3214
        %v3279 = vadd.f32 %v3275, %v3277
        %v3280 = vadd.f32 %v3276, %v3278
        %v3281 = vld [vmem:[#allocation4] sm:$0x1]
        %3283 = vset.pattern.permute.xlu0 0
        %3284 = vperm.xlu0 %3283, %v3281
        %v3285 = vpop.permute.xlu0 %3284
        %v3287 = vperm.slane %v3285, 0
        %v3288 = vadd.f32 %v3279, %v3287
        %v3289 = vadd.f32 %v3280, %v3287
        %v3292 = vrot.slane %v3289, 7
        %v3293 = vsel %vm539, %v3288, %v3292
        %3295 = vst.msk [vmem:[%s411] sm:$0x3] %vm545, %v3293
        %s3296 = sand.u32 %s253, 1
        %s3297 = scalar_lea.sflag [#allocation7], %s3296
        %s3298 = sand.u32 %s253, 1
        %s3299 = smul.addr %s3298, 2
        %s3300 = scalar_lea.vmem [#allocation11], %s3299
        // Predicated region
        $region73: #{tpu_custom_call.1} parent=59 // pred_check
          %p3301 = pneg %p263
        $region74: #{tpu_custom_call.1} parent=59 // pred_check_branch
          %3303 = sbr.rel (%p3301) target = $region76
        $region75: #{tpu_custom_call.1} parent=59 // pred_region
          %3305 = vsyncadd %s3297, 0
          %s3306 = smul.addr %s30, 2
          %s3307 = scalar_lea.hbm %s10, %s3306
          %s3309 = sshll.u32 %s3300, 4
          %s3310 = int_to_ptr.vmem [resolvable:$true] %s3309
          %s3311 = sshll.u32 %s3307, 4
          %s3312 = int_to_ptr.hbm [resolvable:$true] %s3311
          %3314 = dma.vmem_to_hbm [thread:$0]  %s3310, 32, %s3312, %s3297
        $region76: #{tpu_custom_call.1} parent=59 // pred_fallthru
          _
      $region60: #{tpu_custom_call.1} parent=5 // pred_fallthru
        _
      %p3315 = scmp.le.s32.totalorder 2, %s25
      // Predicated region
      $region77: #{tpu_custom_call.1} parent=5 // pred_check
        %p3316 = pneg %p3315
      $region78: #{tpu_custom_call.1} parent=5 // pred_check_branch
        %3318 = sbr.rel (%p3316) target = $region80
      $region79: #{tpu_custom_call.1} parent=5 // pred_region
        %s3319 = ssub.s32 %s25, 2
        // Predicated region
        $region81: #{tpu_custom_call.1} parent=79 // pred_check
          %p3320 = pneg %p269
        $region82: #{tpu_custom_call.1} parent=79 // pred_check_branch
          %3322 = sbr.rel (%p3320) target = $region84
        $region83: #{tpu_custom_call.1} parent=79 // pred_region
          %s3323 = sand.u32 %s254, 1
          %s3324 = scalar_lea.sflag [#allocation7], %s3323
          %s3325 = sand.u32 %s254, 1
          %s3326 = smul.addr %s3325, 2
          %s3327 = scalar_lea.vmem [#allocation11], %s3326
          %3329 = dma.done %s3324, 32
        $region84: #{tpu_custom_call.1} parent=79 // pred_fallthru
          _
      $region80: #{tpu_custom_call.1} parent=5 // pred_fallthru
        _
    $region6: #{tpu_custom_call.1} parent=1 // loop_footer
      %s29 = sadd.s32 1, %s25
    $region7: #{tpu_custom_call.1} parent=1 // loop_footer_branch
      %24 = sbr.rel target = $region3
    $region8: #{tpu_custom_call.1} parent=1 // loop_exit
      _
    %3330 = vsyncpa [#allocation6], 1
    %s3331 = scalar_lea.sflag [#allocation6], 1
    %3332 = vsyncpa %s3331, 1
    %3333 = vsyncpa [#allocation9], 1
    %3334 = vsyncpa [#allocation7], 1
    %s3335 = scalar_lea.sflag [#allocation7], 1
    %3336 = vsyncpa %s3335, 1

</llo_original>
